<compile_context>
chip_gen: v6e
topology: v6e:2x2x1
jax: 0.10.0
libtpu: 0.0.40
codegen_flags: <defaults>
</compile_context>

<pallas_src>
import jax
import jax.numpy as jnp
from jax import lax
from jax.experimental import pallas as pl
from jax.experimental.pallas import tpu as pltpu


COUT_PAD = 8   # conv2 out-channels (6) padded to one full sublane group


def _round_up(v, m):
    return ((v + m - 1) // m) * m


# ------------------------------------------------------------------- kernel -

def _make_kernel(B, W, KH, KW, ACC_W, POOL_W):
    KK = KH * KW

    def kernel(x_ref, w1_ref, b1_ref, w2p_ref, b2_ref, w3s_ref, b3_ref,
               o_ref, z_scr):
        w1c = w1_ref[...]                       # (Cmid, 1)  f32
        b1c = b1_ref[...]                       # (Cmid, 1)  f32
        w2p = w2p_ref[...]                      # (KK*COUT_PAD, Cmid) bf16
        b2c = b2_ref[...]                       # (COUT_PAD, 1) f32
        w3s = w3s_ref[...]                      # (COUT_PAD, POOL_W) f32
        xb = x_ref[0]                           # (B, X_W) f32

        outs = []
        for b in range(B):                      # static, B is small
            x_row = xb[b:b + 1, :]              # (1, X_W)

            # ---- layer1: 1x1 conv + ReLU (channels on sublanes) ------------
            y1 = jnp.maximum(w1c * x_row + b1c, 0.0)          # (Cmid, X_W) f32

            # ---- layer2: 7x7 valid conv ------------------------------------
            # One packed bf16 MXU matmul: Z[8k+co, r] is the un-shifted
            # contribution of tap k (= kh*KW + kw) to out-channel co at pixel r.
            z_scr[...] = jnp.dot(w2p, y1.astype(jnp.bfloat16),
                                 preferred_element_type=jnp.float32)

            # Sum the 49 shifted tap contributions with full-lane-width adds.
            # acc[co, h*W + w] = conv2 pre-bias output at (co, h, w) for valid
            # (h, w); other lanes hold finite garbage masked out by w3s later.
            acc = jnp.zeros((COUT_PAD, ACC_W), jnp.float32)
            for k in range(KK):
                off = (k // KW) * W + (k % KW)
                acc = acc + z_scr[pl.ds(k * COUT_PAD, COUT_PAD),
                                  pl.ds(off, ACC_W)]
            acc = jnp.maximum(acc + b2c, 0.0)                 # bias + ReLU

            # ---- 2x2 max-pool: max of 4 shifted lane views ------------------
            t00 = acc[:, 0:POOL_W]
            t01 = acc[:, 1:1 + POOL_W]
            t10 = acc[:, W:W + POOL_W]
            t11 = acc[:, W + 1:W + 1 + POOL_W]
            m = jnp.maximum(jnp.maximum(t00, t01), jnp.maximum(t10, t11))

            # ---- flatten + Linear(612, 1) -----------------------------------
            # w3 was pre-scattered host-side onto lanes 2*ph*W + 2*pw; all
            # non-window / garbage lanes carry zero weight (no in-kernel gather)
            red = jnp.sum(m * w3s, axis=1, keepdims=True)     # (COUT_PAD, 1)
            outs.append(jnp.sum(red, axis=0, keepdims=True) + b3_ref[...])

        o_ref[...] = jnp.concatenate(outs, axis=0).reshape(1, B, 1)

    return kernel


# ------------------------------------------------------------------ forward -

def net_fc7_forward(x, params, images_per_step=None):
    w1, b1, w2, b2, w3, b3 = params
    N, Cin, H, W = x.shape
    Cout, Cmid, KH, KW = w2.shape
    assert Cin == 1 and Cout <= COUT_PAD
    Ho, Wo = H - KH + 1, W - KW + 1
    Hp, Wp = Ho // 2, Wo // 2
    assert w3.shape == (1, Cout * Hp * Wp), "readout size mismatch"
    assert Wo >= 2 * Wp and Ho >= 2 * Hp        # pool windows stay in-bounds

    HW = H * W
    KK = KH * KW
    max_off = (KH - 1) * W + (KW - 1)           # largest tap shift (lanes)
    pool_base = 2 * (Hp - 1) * W + 2 * (Wp - 1) # largest pool base lane
    POOL_W = _round_up(pool_base + 1, 128)
    ACC_W = _round_up(POOL_W + W + 1, 128)
    X_W = _round_up(max(HW, max_off + ACC_W), 128)
    assert pool_base + W + 1 < ACC_W <= X_W - max_off and HW <= X_W

    # images per grid step: amortize per-step overhead, but keep >= 2 grid
    # steps so both v7x TensorCores get work under "parallel".
    if images_per_step is None:
        images_per_step = max(1, min(8, N // 2))
    B = images_per_step
    NB = -(-N // B)
    N_pad = NB * B

    # --- tiny one-off re-layouts (host/XLA side) ----------------------------
    x_pad = jnp.zeros((N_pad, X_W), jnp.float32).at[:N, :HW].set(
        x.reshape(N, HW).astype(jnp.float32))
    x_blk = x_pad.reshape(NB, B, X_W)

    w1c = w1.reshape(Cmid, 1).astype(jnp.float32)
    b1c = b1.reshape(Cmid, 1).astype(jnp.float32)
    # packed conv2 weights: row 8*k + co holds w2[co, :, kh, kw], k = kh*KW+kw
    w2r = jnp.transpose(w2, (2, 3, 0, 1)).reshape(KK, Cout, Cmid)
    w2p = (jnp.zeros((KK, COUT_PAD, Cmid), jnp.float32)
           .at[:, :Cout, :].set(w2r)
           .reshape(KK * COUT_PAD, Cmid).astype(jnp.bfloat16))
    b2c = jnp.zeros((COUT_PAD, 1), jnp.float32).at[:Cout, 0].set(b2)
    # scatter readout weights onto the pool-window base lanes 2*ph*W + 2*pw
    pool_pos = ((2 * W) * jnp.arange(Hp)[:, None]
                + 2 * jnp.arange(Wp)[None, :]).reshape(-1)
    w3s = (jnp.zeros((COUT_PAD, POOL_W), jnp.float32)
           .at[:Cout, pool_pos].set(w3.reshape(Cout, Hp * Wp)))
    b3r = b3.reshape(1, 1).astype(jnp.float32)

    kernel = _make_kernel(B, W, KH, KW, ACC_W, POOL_W)
    flops = 2 * KK * COUT_PAD * Cmid * X_W * N_pad
    bytes_accessed = int(x_blk.size * 4 + w2p.size * 2 + w3s.size * 4
                         + (2 * Cmid + COUT_PAD + 1) * 4 + N_pad * 4)

    out = pl.pallas_call(
        kernel,
        out_shape=jax.ShapeDtypeStruct((NB, B, 1), jnp.float32),
        grid=(NB,),
        in_specs=[
            pl.BlockSpec((1, B, X_W), lambda n: (n, 0, 0)),          # x
            pl.BlockSpec((Cmid, 1), lambda n: (0, 0)),               # w1
            pl.BlockSpec((Cmid, 1), lambda n: (0, 0)),               # b1
            pl.BlockSpec((KK * COUT_PAD, Cmid), lambda n: (0, 0)),   # w2 packed
            pl.BlockSpec((COUT_PAD, 1), lambda n: (0, 0)),           # b2
            pl.BlockSpec((COUT_PAD, POOL_W), lambda n: (0, 0)),      # w3 scattered
            pl.BlockSpec((1, 1), lambda n: (0, 0)),                  # b3
        ],
        out_specs=pl.BlockSpec((1, B, 1), lambda n: (n, 0, 0)),
        scratch_shapes=[
            pltpu.VMEM((KK * COUT_PAD, X_W), jnp.float32),           # Z (~1.4MB)
        ],
        compiler_params=pltpu.CompilerParams(
            dimension_semantics=("parallel",)),
        cost_estimate=pl.CostEstimate(
            flops=flops, transcendentals=0, bytes_accessed=bytes_accessed),
    )(x_blk, w1c, b1c, w2p, b2c, w3s, b3r)

    return out.reshape(N_pad, 1)[:N]


# ------------------------------------------------------- pure-JAX reference -

def net_fc7_reference(x, params):
    w1, b1, w2, b2, w3, b3 = params
    N, _, H, W = x.shape
    Cout, Cmid, KH, KW = w2.shape
    y1 = jnp.maximum(x[:, 0, :, :, None] * w1.reshape(1, 1, 1, Cmid) + b1, 0.0)
    y2 = lax.conv_general_dilated(
        y1, jnp.transpose(w2, (2, 3, 1, 0)), (1, 1), "VALID",
        dimension_numbers=("NHWC", "HWIO", "NHWC")) + b2
    y2 = jnp.maximum(y2, 0.0)
    Ho, Wo = H - KH + 1, W - KW + 1
    Hp, Wp = Ho // 2, Wo // 2
    p = y2[:, :2 * Hp, :2 * Wp, :].reshape(N, Hp, 2, Wp, 2, Cout).max(axis=(2, 4))
    flat = jnp.transpose(p, (0, 3, 1, 2)).reshape(N, -1)
    return flat @ w3.T + b3


# ------------------------------------------------------------------- params -

def init_params(key):
    k1, k2, k3, k4, k5, k6 = jax.random.split(key, 6)
    w1 = 0.5 * jax.random.normal(k1, (64, 1, 1, 1), jnp.float32)   # Conv2d(1,64,1)
    b1 = 0.1 * jax.random.normal(k2, (64,), jnp.float32)
    w2 = 0.05 * jax.random.normal(k3, (6, 64, 7, 7), jnp.float32)  # Conv2d(64,6,7)
    b2 = 0.1 * jax.random.normal(k4, (6,), jnp.float32)
    w3 = 0.05 * jax.random.normal(k5, (1, 612), jnp.float32)       # Linear(612,1)
    b3 = 0.1 * jax.random.normal(k6, (1,), jnp.float32)
    return w1, b1, w2, b2, w3, b3


# --------------------------------------------------------------------- main -

if __name__ == "__main__":
    key = jax.random.PRNGKey(0)
    kx, kp = jax.random.split(key)

    # (N,1,18,40): conv7x7 -> (12,34), pool -> (6,17), flatten -> 6*6*17 = 612
    N, H, W = 2, 18, 40
    x = jax.random.normal(kx, (N, 1, H, W), jnp.float32)
    params = init_params(kp)

    fwd = jax.jit(net_fc7_forward)
    out = jax.block_until_ready(fwd(x, params))

    ref = net_fc7_reference(x, params)
    assert out.shape == (N, 1)
    # bf16 MXU operands (f32 accumulation) vs f32 reference -> relaxed tolerance
    assert jnp.allclose(out, ref, rtol=2e-2, atol=2e-2), (out, ref)
    print("KERNEL_OK")
</pallas_src>

<mosaic_0001>
module attributes {stable_mosaic.version = 11 : i64} {
  func.func @kernel(%arg0: i32, %arg1: memref<1x1x896xf32, #tpu.memory_space<vmem>>, %arg2: memref<64x1xf32, #tpu.memory_space<vmem>>, %arg3: memref<64x1xf32, #tpu.memory_space<vmem>>, %arg4: memref<392x64xbf16, #tpu.memory_space<vmem>>, %arg5: memref<8x1xf32, #tpu.memory_space<vmem>>, %arg6: memref<8x512xf32, #tpu.memory_space<vmem>>, %arg7: memref<1x1xf32, #tpu.memory_space<vmem>>, %arg8: memref<1x1x1xf32, #tpu.memory_space<vmem>>, %arg9: memref<392x896xf32, #tpu.memory_space<vmem>>) attributes {dimension_semantics = [#tpu.dimension_semantics<parallel>], iteration_bounds = array<i64: 2>, scalar_prefetch = 0 : i64, scratch_operands = 1 : i64, tpu.core_type = #tpu.core_type<tc>, window_params = [{transform_indices = @transform_0, window_bounds = array<i64: 1, 1, 896>}, {pipeline_mode = #tpu.pipeline_mode<synchronous>, transform_indices = @transform_1, window_bounds = array<i64: 64, 1>}, {pipeline_mode = #tpu.pipeline_mode<synchronous>, transform_indices = @transform_2, window_bounds = array<i64: 64, 1>}, {pipeline_mode = #tpu.pipeline_mode<synchronous>, transform_indices = @transform_3, window_bounds = array<i64: 392, 64>}, {pipeline_mode = #tpu.pipeline_mode<synchronous>, transform_indices = @transform_4, window_bounds = array<i64: 8, 1>}, {pipeline_mode = #tpu.pipeline_mode<synchronous>, transform_indices = @transform_5, window_bounds = array<i64: 8, 512>}, {pipeline_mode = #tpu.pipeline_mode<synchronous>, transform_indices = @transform_6, window_bounds = array<i64: 1, 1>}, {transform_indices = @transform_7, window_bounds = array<i64: 1, 1, 1>}]} {
    %c0 = arith.constant 0 : index
    %c0_0 = arith.constant 0 : index
    %0 = vector.load %arg2[%c0, %c0_0] : memref<64x1xf32, #tpu.memory_space<vmem>>, vector<64x1xf32>
    %c0_1 = arith.constant 0 : index
    %c0_2 = arith.constant 0 : index
    %1 = vector.load %arg3[%c0_1, %c0_2] : memref<64x1xf32, #tpu.memory_space<vmem>>, vector<64x1xf32>
    %c0_3 = arith.constant 0 : index
    %c0_4 = arith.constant 0 : index
    %2 = vector.load %arg4[%c0_3, %c0_4] : memref<392x64xbf16, #tpu.memory_space<vmem>>, vector<392x64xbf16>
    %c0_5 = arith.constant 0 : index
    %c0_6 = arith.constant 0 : index
    %3 = vector.load %arg5[%c0_5, %c0_6] : memref<8x1xf32, #tpu.memory_space<vmem>>, vector<8x1xf32>
    %c0_7 = arith.constant 0 : index
    %c0_8 = arith.constant 0 : index
    %4 = vector.load %arg6[%c0_7, %c0_8] : memref<8x512xf32, #tpu.memory_space<vmem>>, vector<8x512xf32>
    %c0_9 = arith.constant 0 : index
    %c0_10 = arith.constant 0 : index
    %c0_11 = arith.constant 0 : index
    %5 = vector.load %arg1[%c0_9, %c0_10, %c0_11] : memref<1x1x896xf32, #tpu.memory_space<vmem>>, vector<1x1x896xf32>
    %6 = vector.shape_cast %5 : vector<1x1x896xf32> to vector<1x896xf32>
    %7 = vector.broadcast %0 : vector<64x1xf32> to vector<64x896xf32>
    %8 = vector.broadcast %6 : vector<1x896xf32> to vector<64x896xf32>
    %9 = arith.mulf %7, %8 : vector<64x896xf32>
    %10 = vector.broadcast %1 : vector<64x1xf32> to vector<64x896xf32>
    %11 = arith.addf %9, %10 : vector<64x896xf32>
    %cst = arith.constant 0.000000e+00 : f32
    %12 = vector.broadcast %cst : f32 to vector<64x896xf32>
    %13 = arith.maximumf %11, %12 : vector<64x896xf32>
    %14 = arith.truncf %13 : vector<64x896xf32> to vector<64x896xbf16>
    %cst_12 = arith.constant dense<0.000000e+00> : vector<392x896xf32>
    %15 = tpu.matmul %2, %14, %cst_12 {dimension_numbers = #tpu.dot_dimension_numbers<[1], [0], [0], [1], [0, 0, 1, 1], [], []>} : vector<392x64xbf16>, vector<64x896xbf16>, vector<392x896xf32> -> vector<392x896xf32>
    %c0_13 = arith.constant 0 : index
    %c0_14 = arith.constant 0 : index
    %16 = vector.load %arg9[%c0_13, %c0_14] : memref<392x896xf32, #tpu.memory_space<vmem>>, vector<392x896xf32>
    tpu.vector_store %arg9[%c0_13, %c0_14], %15 {strides = array<i32>} : memref<392x896xf32, #tpu.memory_space<vmem>>, vector<392x896xf32>,
    %cst_15 = arith.constant 0.000000e+00 : f32
    %17 = vector.broadcast %cst_15 : f32 to vector<8x640xf32>
    %c0_16 = arith.constant 0 : index
    %c0_17 = arith.constant 0 : index
    %18 = vector.load %arg9[%c0_16, %c0_17] : memref<392x896xf32, #tpu.memory_space<vmem>>, vector<8x640xf32>
    %19 = arith.addf %17, %18 : vector<8x640xf32>
    %c8 = arith.constant 8 : index
    %c1 = arith.constant 1 : index
    %20 = vector.load %arg9[%c8, %c1] : memref<392x896xf32, #tpu.memory_space<vmem>>, vector<8x640xf32>
    %21 = arith.addf %19, %20 : vector<8x640xf32>
    %c16 = arith.constant 16 : index
    %c2 = arith.constant 2 : index
    %22 = vector.load %arg9[%c16, %c2] : memref<392x896xf32, #tpu.memory_space<vmem>>, vector<8x640xf32>
    %23 = arith.addf %21, %22 : vector<8x640xf32>
    %c24 = arith.constant 24 : index
    %c3 = arith.constant 3 : index
    %24 = vector.load %arg9[%c24, %c3] : memref<392x896xf32, #tpu.memory_space<vmem>>, vector<8x640xf32>
    %25 = arith.addf %23, %24 : vector<8x640xf32>
    %c32 = arith.constant 32 : index
    %c4 = arith.constant 4 : index
    %26 = vector.load %arg9[%c32, %c4] : memref<392x896xf32, #tpu.memory_space<vmem>>, vector<8x640xf32>
    %27 = arith.addf %25, %26 : vector<8x640xf32>
    %c40 = arith.constant 40 : index
    %c5 = arith.constant 5 : index
    %28 = vector.load %arg9[%c40, %c5] : memref<392x896xf32, #tpu.memory_space<vmem>>, vector<8x640xf32>
    %29 = arith.addf %27, %28 : vector<8x640xf32>
    %c48 = arith.constant 48 : index
    %c6 = arith.constant 6 : index
    %30 = vector.load %arg9[%c48, %c6] : memref<392x896xf32, #tpu.memory_space<vmem>>, vector<8x640xf32>
    %31 = arith.addf %29, %30 : vector<8x640xf32>
    %c56 = arith.constant 56 : index
    %c40_18 = arith.constant 40 : index
    %32 = vector.load %arg9[%c56, %c40_18] : memref<392x896xf32, #tpu.memory_space<vmem>>, vector<8x640xf32>
    %33 = arith.addf %31, %32 : vector<8x640xf32>
    %c64 = arith.constant 64 : index
    %c41 = arith.constant 41 : index
    %34 = vector.load %arg9[%c64, %c41] : memref<392x896xf32, #tpu.memory_space<vmem>>, vector<8x640xf32>
    %35 = arith.addf %33, %34 : vector<8x640xf32>
    %c72 = arith.constant 72 : index
    %c42 = arith.constant 42 : index
    %36 = vector.load %arg9[%c72, %c42] : memref<392x896xf32, #tpu.memory_space<vmem>>, vector<8x640xf32>
    %37 = arith.addf %35, %36 : vector<8x640xf32>
    %c80 = arith.constant 80 : index
    %c43 = arith.constant 43 : index
    %38 = vector.load %arg9[%c80, %c43] : memref<392x896xf32, #tpu.memory_space<vmem>>, vector<8x640xf32>
    %39 = arith.addf %37, %38 : vector<8x640xf32>
    %c88 = arith.constant 88 : index
    %c44 = arith.constant 44 : index
    %40 = vector.load %arg9[%c88, %c44] : memref<392x896xf32, #tpu.memory_space<vmem>>, vector<8x640xf32>
    %41 = arith.addf %39, %40 : vector<8x640xf32>
    %c96 = arith.constant 96 : index
    %c45 = arith.constant 45 : index
    %42 = vector.load %arg9[%c96, %c45] : memref<392x896xf32, #tpu.memory_space<vmem>>, vector<8x640xf32>
    %43 = arith.addf %41, %42 : vector<8x640xf32>
    %c104 = arith.constant 104 : index
    %c46 = arith.constant 46 : index
    %44 = vector.load %arg9[%c104, %c46] : memref<392x896xf32, #tpu.memory_space<vmem>>, vector<8x640xf32>
    %45 = arith.addf %43, %44 : vector<8x640xf32>
    %c112 = arith.constant 112 : index
    %c80_19 = arith.constant 80 : index
    %46 = vector.load %arg9[%c112, %c80_19] : memref<392x896xf32, #tpu.memory_space<vmem>>, vector<8x640xf32>
    %47 = arith.addf %45, %46 : vector<8x640xf32>
    %c120 = arith.constant 120 : index
    %c81 = arith.constant 81 : index
    %48 = vector.load %arg9[%c120, %c81] : memref<392x896xf32, #tpu.memory_space<vmem>>, vector<8x640xf32>
    %49 = arith.addf %47, %48 : vector<8x640xf32>
    %c128 = arith.constant 128 : index
    %c82 = arith.constant 82 : index
    %50 = vector.load %arg9[%c128, %c82] : memref<392x896xf32, #tpu.memory_space<vmem>>, vector<8x640xf32>
    %51 = arith.addf %49, %50 : vector<8x640xf32>
    %c136 = arith.constant 136 : index
    %c83 = arith.constant 83 : index
    %52 = vector.load %arg9[%c136, %c83] : memref<392x896xf32, #tpu.memory_space<vmem>>, vector<8x640xf32>
    %53 = arith.addf %51, %52 : vector<8x640xf32>
    %c144 = arith.constant 144 : index
    %c84 = arith.constant 84 : index
    %54 = vector.load %arg9[%c144, %c84] : memref<392x896xf32, #tpu.memory_space<vmem>>, vector<8x640xf32>
    %55 = arith.addf %53, %54 : vector<8x640xf32>
    %c152 = arith.constant 152 : index
    %c85 = arith.constant 85 : index
    %56 = vector.load %arg9[%c152, %c85] : memref<392x896xf32, #tpu.memory_space<vmem>>, vector<8x640xf32>
    %57 = arith.addf %55, %56 : vector<8x640xf32>
    %c160 = arith.constant 160 : index
    %c86 = arith.constant 86 : index
    %58 = vector.load %arg9[%c160, %c86] : memref<392x896xf32, #tpu.memory_space<vmem>>, vector<8x640xf32>
    %59 = arith.addf %57, %58 : vector<8x640xf32>
    %c168 = arith.constant 168 : index
    %c120_20 = arith.constant 120 : index
    %60 = vector.load %arg9[%c168, %c120_20] : memref<392x896xf32, #tpu.memory_space<vmem>>, vector<8x640xf32>
    %61 = arith.addf %59, %60 : vector<8x640xf32>
    %c176 = arith.constant 176 : index
    %c121 = arith.constant 121 : index
    %62 = vector.load %arg9[%c176, %c121] : memref<392x896xf32, #tpu.memory_space<vmem>>, vector<8x640xf32>
    %63 = arith.addf %61, %62 : vector<8x640xf32>
    %c184 = arith.constant 184 : index
    %c122 = arith.constant 122 : index
    %64 = vector.load %arg9[%c184, %c122] : memref<392x896xf32, #tpu.memory_space<vmem>>, vector<8x640xf32>
    %65 = arith.addf %63, %64 : vector<8x640xf32>
    %c192 = arith.constant 192 : index
    %c123 = arith.constant 123 : index
    %66 = vector.load %arg9[%c192, %c123] : memref<392x896xf32, #tpu.memory_space<vmem>>, vector<8x640xf32>
    %67 = arith.addf %65, %66 : vector<8x640xf32>
    %c200 = arith.constant 200 : index
    %c124 = arith.constant 124 : index
    %68 = vector.load %arg9[%c200, %c124] : memref<392x896xf32, #tpu.memory_space<vmem>>, vector<8x640xf32>
    %69 = arith.addf %67, %68 : vector<8x640xf32>
    %c208 = arith.constant 208 : index
    %c125 = arith.constant 125 : index
    %70 = vector.load %arg9[%c208, %c125] : memref<392x896xf32, #tpu.memory_space<vmem>>, vector<8x640xf32>
    %71 = arith.addf %69, %70 : vector<8x640xf32>
    %c216 = arith.constant 216 : index
    %c126 = arith.constant 126 : index
    %72 = vector.load %arg9[%c216, %c126] : memref<392x896xf32, #tpu.memory_space<vmem>>, vector<8x640xf32>
    %73 = arith.addf %71, %72 : vector<8x640xf32>
    %c224 = arith.constant 224 : index
    %c160_21 = arith.constant 160 : index
    %74 = vector.load %arg9[%c224, %c160_21] : memref<392x896xf32, #tpu.memory_space<vmem>>, vector<8x640xf32>
    %75 = arith.addf %73, %74 : vector<8x640xf32>
    %c232 = arith.constant 232 : index
    %c161 = arith.constant 161 : index
    %76 = vector.load %arg9[%c232, %c161] : memref<392x896xf32, #tpu.memory_space<vmem>>, vector<8x640xf32>
    %77 = arith.addf %75, %76 : vector<8x640xf32>
    %c240 = arith.constant 240 : index
    %c162 = arith.constant 162 : index
    %78 = vector.load %arg9[%c240, %c162] : memref<392x896xf32, #tpu.memory_space<vmem>>, vector<8x640xf32>
    %79 = arith.addf %77, %78 : vector<8x640xf32>
    %c248 = arith.constant 248 : index
    %c163 = arith.constant 163 : index
    %80 = vector.load %arg9[%c248, %c163] : memref<392x896xf32, #tpu.memory_space<vmem>>, vector<8x640xf32>
    %81 = arith.addf %79, %80 : vector<8x640xf32>
    %c256 = arith.constant 256 : index
    %c164 = arith.constant 164 : index
    %82 = vector.load %arg9[%c256, %c164] : memref<392x896xf32, #tpu.memory_space<vmem>>, vector<8x640xf32>
    %83 = arith.addf %81, %82 : vector<8x640xf32>
    %c264 = arith.constant 264 : index
    %c165 = arith.constant 165 : index
    %84 = vector.load %arg9[%c264, %c165] : memref<392x896xf32, #tpu.memory_space<vmem>>, vector<8x640xf32>
    %85 = arith.addf %83, %84 : vector<8x640xf32>
    %c272 = arith.constant 272 : index
    %c166 = arith.constant 166 : index
    %86 = vector.load %arg9[%c272, %c166] : memref<392x896xf32, #tpu.memory_space<vmem>>, vector<8x640xf32>
    %87 = arith.addf %85, %86 : vector<8x640xf32>
    %c280 = arith.constant 280 : index
    %c200_22 = arith.constant 200 : index
    %88 = vector.load %arg9[%c280, %c200_22] : memref<392x896xf32, #tpu.memory_space<vmem>>, vector<8x640xf32>
    %89 = arith.addf %87, %88 : vector<8x640xf32>
    %c288 = arith.constant 288 : index
    %c201 = arith.constant 201 : index
    %90 = vector.load %arg9[%c288, %c201] : memref<392x896xf32, #tpu.memory_space<vmem>>, vector<8x640xf32>
    %91 = arith.addf %89, %90 : vector<8x640xf32>
    %c296 = arith.constant 296 : index
    %c202 = arith.constant 202 : index
    %92 = vector.load %arg9[%c296, %c202] : memref<392x896xf32, #tpu.memory_space<vmem>>, vector<8x640xf32>
    %93 = arith.addf %91, %92 : vector<8x640xf32>
    %c304 = arith.constant 304 : index
    %c203 = arith.constant 203 : index
    %94 = vector.load %arg9[%c304, %c203] : memref<392x896xf32, #tpu.memory_space<vmem>>, vector<8x640xf32>
    %95 = arith.addf %93, %94 : vector<8x640xf32>
    %c312 = arith.constant 312 : index
    %c204 = arith.constant 204 : index
    %96 = vector.load %arg9[%c312, %c204] : memref<392x896xf32, #tpu.memory_space<vmem>>, vector<8x640xf32>
    %97 = arith.addf %95, %96 : vector<8x640xf32>
    %c320 = arith.constant 320 : index
    %c205 = arith.constant 205 : index
    %98 = vector.load %arg9[%c320, %c205] : memref<392x896xf32, #tpu.memory_space<vmem>>, vector<8x640xf32>
    %99 = arith.addf %97, %98 : vector<8x640xf32>
    %c328 = arith.constant 328 : index
    %c206 = arith.constant 206 : index
    %100 = vector.load %arg9[%c328, %c206] : memref<392x896xf32, #tpu.memory_space<vmem>>, vector<8x640xf32>
    %101 = arith.addf %99, %100 : vector<8x640xf32>
    %c336 = arith.constant 336 : index
    %c240_23 = arith.constant 240 : index
    %102 = vector.load %arg9[%c336, %c240_23] : memref<392x896xf32, #tpu.memory_space<vmem>>, vector<8x640xf32>
    %103 = arith.addf %101, %102 : vector<8x640xf32>
    %c344 = arith.constant 344 : index
    %c241 = arith.constant 241 : index
    %104 = vector.load %arg9[%c344, %c241] : memref<392x896xf32, #tpu.memory_space<vmem>>, vector<8x640xf32>
    %105 = arith.addf %103, %104 : vector<8x640xf32>
    %c352 = arith.constant 352 : index
    %c242 = arith.constant 242 : index
    %106 = vector.load %arg9[%c352, %c242] : memref<392x896xf32, #tpu.memory_space<vmem>>, vector<8x640xf32>
    %107 = arith.addf %105, %106 : vector<8x640xf32>
    %c360 = arith.constant 360 : index
    %c243 = arith.constant 243 : index
    %108 = vector.load %arg9[%c360, %c243] : memref<392x896xf32, #tpu.memory_space<vmem>>, vector<8x640xf32>
    %109 = arith.addf %107, %108 : vector<8x640xf32>
    %c368 = arith.constant 368 : index
    %c244 = arith.constant 244 : index
    %110 = vector.load %arg9[%c368, %c244] : memref<392x896xf32, #tpu.memory_space<vmem>>, vector<8x640xf32>
    %111 = arith.addf %109, %110 : vector<8x640xf32>
    %c376 = arith.constant 376 : index
    %c245 = arith.constant 245 : index
    %112 = vector.load %arg9[%c376, %c245] : memref<392x896xf32, #tpu.memory_space<vmem>>, vector<8x640xf32>
    %113 = arith.addf %111, %112 : vector<8x640xf32>
    %c384 = arith.constant 384 : index
    %c246 = arith.constant 246 : index
    %114 = vector.load %arg9[%c384, %c246] : memref<392x896xf32, #tpu.memory_space<vmem>>, vector<8x640xf32>
    %115 = arith.addf %113, %114 : vector<8x640xf32>
    %116 = vector.broadcast %3 : vector<8x1xf32> to vector<8x640xf32>
    %117 = arith.addf %115, %116 : vector<8x640xf32>
    %cst_24 = arith.constant 0.000000e+00 : f32
    %118 = vector.broadcast %cst_24 : f32 to vector<8x640xf32>
    %119 = arith.maximumf %117, %118 : vector<8x640xf32>
    %120 = vector.extract_strided_slice %119 {offsets = [0, 0], sizes = [8, 512], strides = [1, 1]} : vector<8x640xf32> to vector<8x512xf32>
    %121 = vector.extract_strided_slice %119 {offsets = [0, 1], sizes = [8, 512], strides = [1, 1]} : vector<8x640xf32> to vector<8x512xf32>
    %122 = vector.extract_strided_slice %119 {offsets = [0, 40], sizes = [8, 512], strides = [1, 1]} : vector<8x640xf32> to vector<8x512xf32>
    %123 = vector.extract_strided_slice %119 {offsets = [0, 41], sizes = [8, 512], strides = [1, 1]} : vector<8x640xf32> to vector<8x512xf32>
    %124 = arith.maximumf %120, %121 : vector<8x512xf32>
    %125 = arith.maximumf %122, %123 : vector<8x512xf32>
    %126 = arith.maximumf %124, %125 : vector<8x512xf32>
    %127 = arith.mulf %126, %4 : vector<8x512xf32>
    %cst_25 = arith.constant dense<0.000000e+00> : vector<8xf32>
    %128 = vector.multi_reduction <add>, %127, %cst_25 [1] : vector<8x512xf32> to vector<8xf32>
    %129 = vector.shape_cast %128 : vector<8xf32> to vector<8x1xf32>
    %cst_26 = arith.constant dense<0.000000e+00> : vector<1xf32>
    %130 = vector.multi_reduction <add>, %129, %cst_26 [0] : vector<8x1xf32> to vector<1xf32>
    %131 = vector.shape_cast %130 : vector<1xf32> to vector<1x1xf32>
    %c0_27 = arith.constant 0 : index
    %c0_28 = arith.constant 0 : index
    %132 = vector.load %arg7[%c0_27, %c0_28] : memref<1x1xf32, #tpu.memory_space<vmem>>, vector<1x1xf32>
    %133 = arith.addf %131, %132 : vector<1x1xf32>
    %134 = vector.shape_cast %133 : vector<1x1xf32> to vector<1x1x1xf32>
    %c0_29 = arith.constant 0 : index
    %c0_30 = arith.constant 0 : index
    %c0_31 = arith.constant 0 : index
    %135 = vector.load %arg8[%c0_29, %c0_30, %c0_31] : memref<1x1x1xf32, #tpu.memory_space<vmem>>, vector<1x1x1xf32>
    tpu.vector_store %arg8[%c0_29, %c0_30, %c0_31], %134 {strides = array<i32>} : memref<1x1x1xf32, #tpu.memory_space<vmem>>, vector<1x1x1xf32>,
    return
  }
  func.func @transform_0(%arg0: i32) -> (i32, i32, i32) {
    %c0_i32 = arith.constant 0 : i32
    %c0_i32_0 = arith.constant 0 : i32
    %c0_i32_1 = arith.constant 0 : i32
    return %arg0, %c0_i32, %c0_i32_0 : i32, i32, i32
  }
  func.func @transform_1(%arg0: i32) -> (i32, i32) {
    %c0_i32 = arith.constant 0 : i32
    %c0_i32_0 = arith.constant 0 : i32
    %c0_i32_1 = arith.constant 0 : i32
    return %c0_i32, %c0_i32_0 : i32, i32
  }
  func.func @transform_2(%arg0: i32) -> (i32, i32) {
    %c0_i32 = arith.constant 0 : i32
    %c0_i32_0 = arith.constant 0 : i32
    %c0_i32_1 = arith.constant 0 : i32
    return %c0_i32, %c0_i32_0 : i32, i32
  }
  func.func @transform_3(%arg0: i32) -> (i32, i32) {
    %c0_i32 = arith.constant 0 : i32
    %c0_i32_0 = arith.constant 0 : i32
    %c0_i32_1 = arith.constant 0 : i32
    return %c0_i32, %c0_i32_0 : i32, i32
  }
  func.func @transform_4(%arg0: i32) -> (i32, i32) {
    %c0_i32 = arith.constant 0 : i32
    %c0_i32_0 = arith.constant 0 : i32
    %c0_i32_1 = arith.constant 0 : i32
    return %c0_i32, %c0_i32_0 : i32, i32
  }
  func.func @transform_5(%arg0: i32) -> (i32, i32) {
    %c0_i32 = arith.constant 0 : i32
    %c0_i32_0 = arith.constant 0 : i32
    %c0_i32_1 = arith.constant 0 : i32
    return %c0_i32, %c0_i32_0 : i32, i32
  }
  func.func @transform_6(%arg0: i32) -> (i32, i32) {
    %c0_i32 = arith.constant 0 : i32
    %c0_i32_0 = arith.constant 0 : i32
    %c0_i32_1 = arith.constant 0 : i32
    return %c0_i32, %c0_i32_0 : i32, i32
  }
  func.func @transform_7(%arg0: i32) -> (i32, i32, i32) {
    %c0_i32 = arith.constant 0 : i32
    %c0_i32_0 = arith.constant 0 : i32
    %c0_i32_1 = arith.constant 0 : i32
    return %arg0, %c0_i32, %c0_i32_0 : i32, i32, i32
  }
}

</mosaic_0001>

<llo_original>
// kernel: net_fc7_forward.1
$region0: #{net_fc7_forward.1}
  #allocation0 [shape = 'u32[]', space=smem, size = 0x4, offset = 0x4, fixed_abs, tag = 'smem constant byte address 0x4 - core index']
  #allocation1 [shape = 'u32[144,128]{1,0:T(1,128)}', space=vmem, size = 0x12000, scoped, tag = 'internal scratch']
  #allocation2 [shape = 'f32[392,896]{1,0:T(8,128)}', space=vmem, size = 0x157000, scoped, tag = 'scratch operand']
  #allocation3 [shape = 'f32[1,1]{1,0:T(1,128)S(1)}', space=vmem, size = 0x200, scoped, tag = 'scoped memory for net_fc7_forward.1']
  %s0 = inlined_call_operand.vmem [shape: f32[2,1,896], index: 0, kind: input, shape index: {}]
  %s1 = inlined_call_operand.vmem [shape: f32[64,1], index: 1, kind: input, shape index: {}]
  %s2 = inlined_call_operand.vmem [shape: f32[64,1], index: 2, kind: input, shape index: {}]
  %s3 = inlined_call_operand.vmem [shape: bf16[392,64], index: 3, kind: input, shape index: {}]
  %s4 = inlined_call_operand.vmem [shape: f32[8,1], index: 4, kind: input, shape index: {}]
  %s5 = inlined_call_operand.vmem [shape: f32[8,512], index: 5, kind: input, shape index: {}]
  %s6 = inlined_call_operand.<no memory space> [shape: f32[1,1], index: 6, kind: input, shape index: {}]
  %s7 = inlined_call_operand.vmem [shape: f32[2,1,1], index: 7, kind: output, shape index: {}]
  %s8 = sld [smem:[#allocation0]]
  $region61: #{net_fc7_forward.1} parent=0
    _
  %s10 = ssub.s32 1, %s8
  %s11 = scalar_select 0, %s10, %s8
  %v12 = vstv %s6
  %13 = vst [vmem:[#allocation3] sm:$0x1] %v12
  loop: start=0, step=1, limit=4
  $region2: #{net_fc7_forward.1} parent=0 // loop_pre_header
    _
  $region3: #{net_fc7_forward.1} parent=0 // loop_header
    %s15 = sphi 0, %s19
    %p16 = scmp.ge.s32.totalorder %s15, 4
    %s25 = sphi 0, %s27
    %s28 = sphi 0, %s25
    %s29 = sphi 0, %s28
    %s45 = sphi 0, %s29
    %s49 = sphi 0, %s49
    %s51 = sphi 0, %s49
    %s52 = sphi 0, %s51
    %s66 = sphi 0, %s52
    %s70 = sphi 0, %s70
    %s72 = sphi 0, %s70
    %s73 = sphi 0, %s72
    %s87 = sphi 0, %s73
    %s91 = sphi 0, %s91
    %s93 = sphi 0, %s91
    %s94 = sphi 0, %s93
    %s108 = sphi 0, %s94
    %s112 = sphi 0, %s112
    %s114 = sphi 0, %s112
    %s115 = sphi 0, %s114
    %s129 = sphi 0, %s115
    %s133 = sphi 0, %s133
    %s135 = sphi 0, %s133
    %s136 = sphi 0, %s135
    %s150 = sphi 0, %s136
    %s154 = sphi 0, %s154
    %s156 = sphi 0, %s154
    %s157 = sphi 0, %s156
    %s171 = sphi 0, %s157
    %s177 = sphi 0, %s179
    %s180 = sphi 0, %s177
    %s181 = sphi 0, %s180
    %s197 = sphi 0, %s181
  $region4: #{net_fc7_forward.1} parent=0 // loop_header_branch
    %18 = sbr.rel (%p16) target = $region8
  $region5: #{net_fc7_forward.1} parent=0 // loop_body
    %s20 = ssub.s32 %s15, 1
    %s21 = ssub.s32 %s15, 2
    %s22 = sadd.s32 %s15, 1
    %s23 = ssub.s32 %s15, %s22
    %p24 = scmp.eq.s32.totalorder %s23, 0
    %s26 = sadd.s32 %s25, 1
    %s27 = scalar_select %p24, %s25, %s26
    %p30 = pneg %p24
    %p31 = scmp.eq.s32.totalorder %s15, 1
    %p32 = por %p30, %p31
    %p33 = scmp.ne.s32.totalorder %s25, %s28
    %p34 = scmp.eq.s32.totalorder %s15, 0
    %p35 = por %p33, %p34
    %p36 = scmp.ne.s32.totalorder %s25, %s28
    %p37 = scmp.eq.s32.totalorder %s20, 1
    %p38 = por %p36, %p37
    %p39 = scmp.ne.s32.totalorder %s28, %s29
    %p40 = scmp.eq.s32.totalorder %s20, 0
    %p41 = por %p39, %p40
    %p42 = scmp.ne.s32.totalorder %s28, %s29
    %p43 = scmp.eq.s32.totalorder %s21, 1
    %p44 = por %p42, %p43
    %p46 = scmp.ne.s32.totalorder %s29, %s45
    %p47 = scmp.eq.s32.totalorder %s21, 0
    %p48 = por %p46, %p47
    %s50 = sadd.s32 %s49, 1
    %p53 = scmp.eq.s32.totalorder %s15, 1
    %p54 = scmp.ne.s32.totalorder %s49, %s51
    %p55 = scmp.eq.s32.totalorder %s15, 0
    %p56 = por %p54, %p55
    %p57 = scmp.ne.s32.totalorder %s49, %s51
    %p58 = scmp.eq.s32.totalorder %s20, 1
    %p59 = por %p57, %p58
    %p60 = scmp.ne.s32.totalorder %s51, %s52
    %p61 = scmp.eq.s32.totalorder %s20, 0
    %p62 = por %p60, %p61
    %p63 = scmp.ne.s32.totalorder %s51, %s52
    %p64 = scmp.eq.s32.totalorder %s21, 1
    %p65 = por %p63, %p64
    %p67 = scmp.ne.s32.totalorder %s52, %s66
    %p68 = scmp.eq.s32.totalorder %s21, 0
    %p69 = por %p67, %p68
    %s71 = sadd.s32 %s70, 1
    %p74 = scmp.eq.s32.totalorder %s15, 1
    %p75 = scmp.ne.s32.totalorder %s70, %s72
    %p76 = scmp.eq.s32.totalorder %s15, 0
    %p77 = por %p75, %p76
    %p78 = scmp.ne.s32.totalorder %s70, %s72
    %p79 = scmp.eq.s32.totalorder %s20, 1
    %p80 = por %p78, %p79
    %p81 = scmp.ne.s32.totalorder %s72, %s73
    %p82 = scmp.eq.s32.totalorder %s20, 0
    %p83 = por %p81, %p82
    %p84 = scmp.ne.s32.totalorder %s72, %s73
    %p85 = scmp.eq.s32.totalorder %s21, 1
    %p86 = por %p84, %p85
    %p88 = scmp.ne.s32.totalorder %s73, %s87
    %p89 = scmp.eq.s32.totalorder %s21, 0
    %p90 = por %p88, %p89
    %s92 = sadd.s32 %s91, 1
    %p95 = scmp.eq.s32.totalorder %s15, 1
    %p96 = scmp.ne.s32.totalorder %s91, %s93
    %p97 = scmp.eq.s32.totalorder %s15, 0
    %p98 = por %p96, %p97
    %p99 = scmp.ne.s32.totalorder %s91, %s93
    %p100 = scmp.eq.s32.totalorder %s20, 1
    %p101 = por %p99, %p100
    %p102 = scmp.ne.s32.totalorder %s93, %s94
    %p103 = scmp.eq.s32.totalorder %s20, 0
    %p104 = por %p102, %p103
    %p105 = scmp.ne.s32.totalorder %s93, %s94
    %p106 = scmp.eq.s32.totalorder %s21, 1
    %p107 = por %p105, %p106
    %p109 = scmp.ne.s32.totalorder %s94, %s108
    %p110 = scmp.eq.s32.totalorder %s21, 0
    %p111 = por %p109, %p110
    %s113 = sadd.s32 %s112, 1
    %p116 = scmp.eq.s32.totalorder %s15, 1
    %p117 = scmp.ne.s32.totalorder %s112, %s114
    %p118 = scmp.eq.s32.totalorder %s15, 0
    %p119 = por %p117, %p118
    %p120 = scmp.ne.s32.totalorder %s112, %s114
    %p121 = scmp.eq.s32.totalorder %s20, 1
    %p122 = por %p120, %p121
    %p123 = scmp.ne.s32.totalorder %s114, %s115
    %p124 = scmp.eq.s32.totalorder %s20, 0
    %p125 = por %p123, %p124
    %p126 = scmp.ne.s32.totalorder %s114, %s115
    %p127 = scmp.eq.s32.totalorder %s21, 1
    %p128 = por %p126, %p127
    %p130 = scmp.ne.s32.totalorder %s115, %s129
    %p131 = scmp.eq.s32.totalorder %s21, 0
    %p132 = por %p130, %p131
    %s134 = sadd.s32 %s133, 1
    %p137 = scmp.eq.s32.totalorder %s15, 1
    %p138 = scmp.ne.s32.totalorder %s133, %s135
    %p139 = scmp.eq.s32.totalorder %s15, 0
    %p140 = por %p138, %p139
    %p141 = scmp.ne.s32.totalorder %s133, %s135
    %p142 = scmp.eq.s32.totalorder %s20, 1
    %p143 = por %p141, %p142
    %p144 = scmp.ne.s32.totalorder %s135, %s136
    %p145 = scmp.eq.s32.totalorder %s20, 0
    %p146 = por %p144, %p145
    %p147 = scmp.ne.s32.totalorder %s135, %s136
    %p148 = scmp.eq.s32.totalorder %s21, 1
    %p149 = por %p147, %p148
    %p151 = scmp.ne.s32.totalorder %s136, %s150
    %p152 = scmp.eq.s32.totalorder %s21, 0
    %p153 = por %p151, %p152
    %s155 = sadd.s32 %s154, 1
    %p158 = scmp.eq.s32.totalorder %s15, 1
    %p159 = scmp.ne.s32.totalorder %s154, %s156
    %p160 = scmp.eq.s32.totalorder %s15, 0
    %p161 = por %p159, %p160
    %p162 = scmp.ne.s32.totalorder %s154, %s156
    %p163 = scmp.eq.s32.totalorder %s20, 1
    %p164 = por %p162, %p163
    %p165 = scmp.ne.s32.totalorder %s156, %s157
    %p166 = scmp.eq.s32.totalorder %s20, 0
    %p167 = por %p165, %p166
    %p168 = scmp.ne.s32.totalorder %s156, %s157
    %p169 = scmp.eq.s32.totalorder %s21, 1
    %p170 = por %p168, %p169
    %p172 = scmp.ne.s32.totalorder %s157, %s171
    %p173 = scmp.eq.s32.totalorder %s21, 0
    %p174 = por %p172, %p173
    %s175 = ssub.s32 %s15, %s22
    %p176 = scmp.eq.s32.totalorder %s175, 0
    %s178 = sadd.s32 %s177, 1
    %s179 = scalar_select %p176, %s177, %s178
    %p182 = pneg %p176
    %p183 = scmp.eq.s32.totalorder %s15, 1
    %p184 = por %p182, %p183
    %p185 = scmp.ne.s32.totalorder %s177, %s180
    %p186 = scmp.eq.s32.totalorder %s15, 0
    %p187 = por %p185, %p186
    %p188 = scmp.ne.s32.totalorder %s177, %s180
    %p189 = scmp.eq.s32.totalorder %s20, 1
    %p190 = por %p188, %p189
    %p191 = scmp.ne.s32.totalorder %s180, %s181
    %p192 = scmp.eq.s32.totalorder %s20, 0
    %p193 = por %p191, %p192
    %p194 = scmp.ne.s32.totalorder %s180, %s181
    %p195 = scmp.eq.s32.totalorder %s21, 1
    %p196 = por %p194, %p195
    %p198 = scmp.ne.s32.totalorder %s181, %s197
    %p199 = scmp.eq.s32.totalorder %s21, 0
    %p200 = por %p198, %p199
    %p201 = scmp.le.s32.totalorder 1, %s15
    %p202 = scmp.lt.s32.totalorder %s15, 3
    %p203 = pnand %p201, %p202
    %p204 = pneg %p203
    // Predicated region
    $region9: #{net_fc7_forward.1} parent=5 // pred_check
      _
    $region10: #{net_fc7_forward.1} parent=5 // pred_check_branch
      %206 = sbr.rel (%p203) target = $region12
    $region11: #{net_fc7_forward.1} parent=5 // pred_region
      %s207 = ssub.s32 %s15, 1
      // Predicated region
      $region13: #{net_fc7_forward.1} parent=11 // pred_check
        %p208 = pneg %p62
      $region14: #{net_fc7_forward.1} parent=11 // pred_check_branch
        %210 = sbr.rel (%p208) target = $region16
      $region15: #{net_fc7_forward.1} parent=11 // pred_region
        _
      $region16: #{net_fc7_forward.1} parent=11 // pred_fallthru
        _
      // Predicated region
      $region17: #{net_fc7_forward.1} parent=11 // pred_check
        %p211 = pneg %p83
      $region18: #{net_fc7_forward.1} parent=11 // pred_check_branch
        %213 = sbr.rel (%p211) target = $region20
      $region19: #{net_fc7_forward.1} parent=11 // pred_region
        _
      $region20: #{net_fc7_forward.1} parent=11 // pred_fallthru
        _
      // Predicated region
      $region21: #{net_fc7_forward.1} parent=11 // pred_check
        %p214 = pneg %p104
      $region22: #{net_fc7_forward.1} parent=11 // pred_check_branch
        %216 = sbr.rel (%p214) target = $region24
      $region23: #{net_fc7_forward.1} parent=11 // pred_region
        _
      $region24: #{net_fc7_forward.1} parent=11 // pred_fallthru
        _
      // Predicated region
      $region25: #{net_fc7_forward.1} parent=11 // pred_check
        %p217 = pneg %p125
      $region26: #{net_fc7_forward.1} parent=11 // pred_check_branch
        %219 = sbr.rel (%p217) target = $region28
      $region27: #{net_fc7_forward.1} parent=11 // pred_region
        _
      $region28: #{net_fc7_forward.1} parent=11 // pred_fallthru
        _
      // Predicated region
      $region29: #{net_fc7_forward.1} parent=11 // pred_check
        %p220 = pneg %p146
      $region30: #{net_fc7_forward.1} parent=11 // pred_check_branch
        %222 = sbr.rel (%p220) target = $region32
      $region31: #{net_fc7_forward.1} parent=11 // pred_region
        _
      $region32: #{net_fc7_forward.1} parent=11 // pred_fallthru
        _
      // Predicated region
      $region33: #{net_fc7_forward.1} parent=11 // pred_check
        %p223 = pneg %p167
      $region34: #{net_fc7_forward.1} parent=11 // pred_check_branch
        %225 = sbr.rel (%p223) target = $region36
      $region35: #{net_fc7_forward.1} parent=11 // pred_region
        _
      $region36: #{net_fc7_forward.1} parent=11 // pred_fallthru
        _
    $region12: #{net_fc7_forward.1} parent=5 // pred_fallthru
      _
    %p226 = scmp.lt.s32.totalorder %s15, 2
    // Predicated region
    $region37: #{net_fc7_forward.1} parent=5 // pred_check
      %p227 = pneg %p226
    $region38: #{net_fc7_forward.1} parent=5 // pred_check_branch
      %229 = sbr.rel (%p227) target = $region40
    $region39: #{net_fc7_forward.1} parent=5 // pred_region
      // Predicated region
      $region41: #{net_fc7_forward.1} parent=39 // pred_check
        %p230 = pneg %p35
      $region42: #{net_fc7_forward.1} parent=39 // pred_check_branch
        %232 = sbr.rel (%p230) target = $region44
      $region43: #{net_fc7_forward.1} parent=39 // pred_region
        %p233 = scmp.lt.s32.totalorder %s15, 1
        %s234 = scalar_select %p233, %s15, 1
        %s235 = smul.addr %s234, 7
        %s236 = scalar_lea.vmem %s0, %s235
      $region44: #{net_fc7_forward.1} parent=39 // pred_fallthru
        _
    $region40: #{net_fc7_forward.1} parent=5 // pred_fallthru
      _
    %p237 = scmp.le.s32.totalorder 1, %s15
    %p238 = scmp.lt.s32.totalorder %s15, 3
    %p239 = pnand %p237, %p238
    %p240 = pneg %p239
    // Predicated region
    $region45: #{net_fc7_forward.1} parent=5 // pred_check
      _
    $region46: #{net_fc7_forward.1} parent=5 // pred_check_branch
      %242 = sbr.rel (%p239) target = $region48
    $region47: #{net_fc7_forward.1} parent=5 // pred_region
      %s243 = ssub.s32 %s15, 1
      %p244 = scmp.lt.s32.totalorder %s20, 1
      %s245 = scalar_select %p244, %s20, 1
      %s246 = smul.addr %s245, 7
      %s247 = scalar_lea.vmem %s0, %s246
      %p248 = pneg %p41
      %p249 = pneg %p38
      %p250 = pneg %p62
      %p251 = pneg %p59
      %p252 = pneg %p83
      %p253 = pneg %p80
      %p254 = pneg %p104
      %p255 = pneg %p101
      %p256 = pneg %p125
      %p257 = pneg %p122
      %p258 = pneg %p146
      %p259 = pneg %p143
      %p260 = pneg %p167
      %p261 = pneg %p164
      %p262 = pneg %p193
      %p263 = pneg %p190
      %p264 = scmp.lt.s32.totalorder %s20, 1
      %s265 = scalar_select %p264, %s20, 1
      %s266 = scalar_lea.vmem %s7, %s265
      %p267 = scmp.lt.s32.totalorder %s20, 1
      %s268 = scalar_select %p267, %s20, 1
      %s269 = smul.addr %s268, 7
      %s270 = scalar_lea.vmem %s0, %s269
      %p271 = scmp.lt.s32.totalorder %s20, 1
      %s272 = scalar_select %p271, %s20, 1
      %s273 = scalar_lea.vmem %s7, %s272
      %v275 = vld [vmem:[%s1] sm:$0xff]
      %v276 = vld [vmem:[%s1 + $0x8] sm:$0xff]
      %v277 = vld [vmem:[%s1 + $0x10] sm:$0xff]
      %v278 = vld [vmem:[%s1 + $0x18] sm:$0xff]
      %v279 = vld [vmem:[%s1 + $0x20] sm:$0xff]
      %v280 = vld [vmem:[%s1 + $0x28] sm:$0xff]
      %v281 = vld [vmem:[%s1 + $0x30] sm:$0xff]
      %v282 = vld [vmem:[%s1 + $0x38] sm:$0xff]
      %v283 = vld [vmem:[%s2] sm:$0xff]
      %v284 = vld [vmem:[%s2 + $0x8] sm:$0xff]
      %v285 = vld [vmem:[%s2 + $0x10] sm:$0xff]
      %v286 = vld [vmem:[%s2 + $0x18] sm:$0xff]
      %v287 = vld [vmem:[%s2 + $0x20] sm:$0xff]
      %v288 = vld [vmem:[%s2 + $0x28] sm:$0xff]
      %v289 = vld [vmem:[%s2 + $0x30] sm:$0xff]
      %v290 = vld [vmem:[%s2 + $0x38] sm:$0xff]
      %v291 = vld [vmem:[%s3] sm:$0xf]
      %v292 = vld [vmem:[%s3 + $0x4] sm:$0xf]
      %v293 = vld [vmem:[%s3 + $0x8] sm:$0xf]
      %v294 = vld [vmem:[%s3 + $0xc] sm:$0xf]
      %v295 = vld [vmem:[%s3 + $0x10] sm:$0xf]
      %v296 = vld [vmem:[%s3 + $0x14] sm:$0xf]
      %v297 = vld [vmem:[%s3 + $0x18] sm:$0xf]
      %v298 = vld [vmem:[%s3 + $0x1c] sm:$0xf]
      %v299 = vld [vmem:[%s3 + $0x20] sm:$0xf]
      %v300 = vld [vmem:[%s3 + $0x24] sm:$0xf]
      %v301 = vld [vmem:[%s3 + $0x28] sm:$0xf]
      %v302 = vld [vmem:[%s3 + $0x2c] sm:$0xf]
      %v303 = vld [vmem:[%s3 + $0x30] sm:$0xf]
      %v304 = vld [vmem:[%s3 + $0x34] sm:$0xf]
      %v305 = vld [vmem:[%s3 + $0x38] sm:$0xf]
      %v306 = vld [vmem:[%s3 + $0x3c] sm:$0xf]
      %v307 = vld [vmem:[%s3 + $0x40] sm:$0xf]
      %v308 = vld [vmem:[%s3 + $0x44] sm:$0xf]
      %v309 = vld [vmem:[%s3 + $0x48] sm:$0xf]
      %v310 = vld [vmem:[%s3 + $0x4c] sm:$0xf]
      %v311 = vld [vmem:[%s3 + $0x50] sm:$0xf]
      %v312 = vld [vmem:[%s3 + $0x54] sm:$0xf]
      %v313 = vld [vmem:[%s3 + $0x58] sm:$0xf]
      %v314 = vld [vmem:[%s3 + $0x5c] sm:$0xf]
      %v315 = vld [vmem:[%s3 + $0x60] sm:$0xf]
      %v316 = vld [vmem:[%s3 + $0x64] sm:$0xf]
      %v317 = vld [vmem:[%s3 + $0x68] sm:$0xf]
      %v318 = vld [vmem:[%s3 + $0x6c] sm:$0xf]
      %v319 = vld [vmem:[%s3 + $0x70] sm:$0xf]
      %v320 = vld [vmem:[%s3 + $0x74] sm:$0xf]
      %v321 = vld [vmem:[%s3 + $0x78] sm:$0xf]
      %v322 = vld [vmem:[%s3 + $0x7c] sm:$0xf]
      %v323 = vld [vmem:[%s3 + $0x80] sm:$0xf]
      %v324 = vld [vmem:[%s3 + $0x84] sm:$0xf]
      %v325 = vld [vmem:[%s3 + $0x88] sm:$0xf]
      %v326 = vld [vmem:[%s3 + $0x8c] sm:$0xf]
      %v327 = vld [vmem:[%s3 + $0x90] sm:$0xf]
      %v328 = vld [vmem:[%s3 + $0x94] sm:$0xf]
      %v329 = vld [vmem:[%s3 + $0x98] sm:$0xf]
      %v330 = vld [vmem:[%s3 + $0x9c] sm:$0xf]
      %v331 = vld [vmem:[%s3 + $0xa0] sm:$0xf]
      %v332 = vld [vmem:[%s3 + $0xa4] sm:$0xf]
      %v333 = vld [vmem:[%s3 + $0xa8] sm:$0xf]
      %v334 = vld [vmem:[%s3 + $0xac] sm:$0xf]
      %v335 = vld [vmem:[%s3 + $0xb0] sm:$0xf]
      %v336 = vld [vmem:[%s3 + $0xb4] sm:$0xf]
      %v337 = vld [vmem:[%s3 + $0xb8] sm:$0xf]
      %v338 = vld [vmem:[%s3 + $0xbc] sm:$0xf]
      %v339 = vld [vmem:[%s3 + $0xc0] sm:$0xf]
      %v340 = vld [vmem:[%s4] sm:$0xff]
      %v341 = vld [vmem:[%s5] sm:$0xff]
      %v342 = vld [vmem:[%s5 + $0x8] sm:$0xff]
      %v343 = vld [vmem:[%s5 + $0x10] sm:$0xff]
      %v344 = vld [vmem:[%s5 + $0x18] sm:$0xff]
      %v345 = vld [vmem:[%s270] sm:$0xff]
      %347 = vset.pattern.permute.xlu0 0
      %348 = vperm.xlu0 %347, %v275
      %v349 = vpop.permute.xlu0 %348
      %352 = vset.pattern.permute.xlu0 0
      %353 = vperm.xlu0 %352, %v276
      %v354 = vpop.permute.xlu0 %353
      %357 = vset.pattern.permute.xlu0 0
      %358 = vperm.xlu0 %357, %v277
      %v359 = vpop.permute.xlu0 %358
      %362 = vset.pattern.permute.xlu0 0
      %363 = vperm.xlu0 %362, %v278
      %v364 = vpop.permute.xlu0 %363
      %367 = vset.pattern.permute.xlu0 0
      %368 = vperm.xlu0 %367, %v279
      %v369 = vpop.permute.xlu0 %368
      %372 = vset.pattern.permute.xlu0 0
      %373 = vperm.xlu0 %372, %v280
      %v374 = vpop.permute.xlu0 %373
      %377 = vset.pattern.permute.xlu0 0
      %378 = vperm.xlu0 %377, %v281
      %v379 = vpop.permute.xlu0 %378
      %382 = vset.pattern.permute.xlu0 0
      %383 = vperm.xlu0 %382, %v282
      %v384 = vpop.permute.xlu0 %383
      %v387 = vlaneseq
      %v388 = vshrl.u32 %v387, 7
      %v389 = vsub.s32 0, %v388
      %v390 = vrot.slane %v345, %v389
      %v391 = vlaneseq
      %v392 = vshrl.u32 %v391, 7
      %v393 = vsub.s32 1, %v392
      %v394 = vrot.slane %v345, %v393
      %v395 = vlaneseq
      %v396 = vshrl.u32 %v395, 7
      %v397 = vsub.s32 2, %v396
      %v398 = vrot.slane %v345, %v397
      %v399 = vlaneseq
      %v400 = vshrl.u32 %v399, 7
      %v401 = vsub.s32 3, %v400
      %v402 = vrot.slane %v345, %v401
      %v403 = vlaneseq
      %v404 = vshrl.u32 %v403, 7
      %v405 = vsub.s32 4, %v404
      %v406 = vrot.slane %v345, %v405
      %v407 = vlaneseq
      %v408 = vshrl.u32 %v407, 7
      %v409 = vsub.s32 5, %v408
      %v410 = vrot.slane %v345, %v409
      %v411 = vlaneseq
      %v412 = vshrl.u32 %v411, 7
      %v413 = vsub.s32 6, %v412
      %v414 = vrot.slane %v345, %v413
      %v422 = vmul.f32 %v349, %v390
      %v423 = vmul.f32 %v349, %v394
      %v424 = vmul.f32 %v349, %v398
      %v425 = vmul.f32 %v349, %v402
      %v426 = vmul.f32 %v349, %v406
      %v427 = vmul.f32 %v349, %v410
      %v428 = vmul.f32 %v349, %v414
      %v429 = vmul.f32 %v354, %v390
      %v430 = vmul.f32 %v354, %v394
      %v431 = vmul.f32 %v354, %v398
      %v432 = vmul.f32 %v354, %v402
      %v433 = vmul.f32 %v354, %v406
      %v434 = vmul.f32 %v354, %v410
      %v435 = vmul.f32 %v354, %v414
      %v436 = vmul.f32 %v359, %v390
      %v437 = vmul.f32 %v359, %v394
      %v438 = vmul.f32 %v359, %v398
      %v439 = vmul.f32 %v359, %v402
      %v440 = vmul.f32 %v359, %v406
      %v441 = vmul.f32 %v359, %v410
      %v442 = vmul.f32 %v359, %v414
      %v443 = vmul.f32 %v364, %v390
      %v444 = vmul.f32 %v364, %v394
      %v445 = vmul.f32 %v364, %v398
      %v446 = vmul.f32 %v364, %v402
      %v447 = vmul.f32 %v364, %v406
      %v448 = vmul.f32 %v364, %v410
      %v449 = vmul.f32 %v364, %v414
      %v450 = vmul.f32 %v369, %v390
      %v451 = vmul.f32 %v369, %v394
      %v452 = vmul.f32 %v369, %v398
      %v453 = vmul.f32 %v369, %v402
      %v454 = vmul.f32 %v369, %v406
      %v455 = vmul.f32 %v369, %v410
      %v456 = vmul.f32 %v369, %v414
      %v457 = vmul.f32 %v374, %v390
      %v458 = vmul.f32 %v374, %v394
      %v459 = vmul.f32 %v374, %v398
      %v460 = vmul.f32 %v374, %v402
      %v461 = vmul.f32 %v374, %v406
      %v462 = vmul.f32 %v374, %v410
      %v463 = vmul.f32 %v374, %v414
      %v464 = vmul.f32 %v379, %v390
      %v465 = vmul.f32 %v379, %v394
      %v466 = vmul.f32 %v379, %v398
      %v467 = vmul.f32 %v379, %v402
      %v468 = vmul.f32 %v379, %v406
      %v469 = vmul.f32 %v379, %v410
      %v470 = vmul.f32 %v379, %v414
      %v471 = vmul.f32 %v384, %v390
      %v472 = vmul.f32 %v384, %v394
      %v473 = vmul.f32 %v384, %v398
      %v474 = vmul.f32 %v384, %v402
      %v475 = vmul.f32 %v384, %v406
      %v476 = vmul.f32 %v384, %v410
      %v477 = vmul.f32 %v384, %v414
      %479 = vset.pattern.permute.xlu0 0
      %480 = vperm.xlu0 %479, %v283
      %v481 = vpop.permute.xlu0 %480
      %484 = vset.pattern.permute.xlu0 0
      %485 = vperm.xlu0 %484, %v284
      %v486 = vpop.permute.xlu0 %485
      %489 = vset.pattern.permute.xlu0 0
      %490 = vperm.xlu0 %489, %v285
      %v491 = vpop.permute.xlu0 %490
      %494 = vset.pattern.permute.xlu0 0
      %495 = vperm.xlu0 %494, %v286
      %v496 = vpop.permute.xlu0 %495
      %499 = vset.pattern.permute.xlu0 0
      %500 = vperm.xlu0 %499, %v287
      %v501 = vpop.permute.xlu0 %500
      %504 = vset.pattern.permute.xlu0 0
      %505 = vperm.xlu0 %504, %v288
      %v506 = vpop.permute.xlu0 %505
      %509 = vset.pattern.permute.xlu0 0
      %510 = vperm.xlu0 %509, %v289
      %v511 = vpop.permute.xlu0 %510
      %514 = vset.pattern.permute.xlu0 0
      %515 = vperm.xlu0 %514, %v290
      %v516 = vpop.permute.xlu0 %515
      %v518 = vadd.f32 %v422, %v481
      %v519 = vadd.f32 %v423, %v481
      %v520 = vadd.f32 %v424, %v481
      %v521 = vadd.f32 %v425, %v481
      %v522 = vadd.f32 %v426, %v481
      %v523 = vadd.f32 %v427, %v481
      %v524 = vadd.f32 %v428, %v481
      %v525 = vadd.f32 %v429, %v486
      %v526 = vadd.f32 %v430, %v486
      %v527 = vadd.f32 %v431, %v486
      %v528 = vadd.f32 %v432, %v486
      %v529 = vadd.f32 %v433, %v486
      %v530 = vadd.f32 %v434, %v486
      %v531 = vadd.f32 %v435, %v486
      %v532 = vadd.f32 %v436, %v491
      %v533 = vadd.f32 %v437, %v491
      %v534 = vadd.f32 %v438, %v491
      %v535 = vadd.f32 %v439, %v491
      %v536 = vadd.f32 %v440, %v491
      %v537 = vadd.f32 %v441, %v491
      %v538 = vadd.f32 %v442, %v491
      %v539 = vadd.f32 %v443, %v496
      %v540 = vadd.f32 %v444, %v496
      %v541 = vadd.f32 %v445, %v496
      %v542 = vadd.f32 %v446, %v496
      %v543 = vadd.f32 %v447, %v496
      %v544 = vadd.f32 %v448, %v496
      %v545 = vadd.f32 %v449, %v496
      %v546 = vadd.f32 %v450, %v501
      %v547 = vadd.f32 %v451, %v501
      %v548 = vadd.f32 %v452, %v501
      %v549 = vadd.f32 %v453, %v501
      %v550 = vadd.f32 %v454, %v501
      %v551 = vadd.f32 %v455, %v501
      %v552 = vadd.f32 %v456, %v501
      %v553 = vadd.f32 %v457, %v506
      %v554 = vadd.f32 %v458, %v506
      %v555 = vadd.f32 %v459, %v506
      %v556 = vadd.f32 %v460, %v506
      %v557 = vadd.f32 %v461, %v506
      %v558 = vadd.f32 %v462, %v506
      %v559 = vadd.f32 %v463, %v506
      %v560 = vadd.f32 %v464, %v511
      %v561 = vadd.f32 %v465, %v511
      %v562 = vadd.f32 %v466, %v511
      %v563 = vadd.f32 %v467, %v511
      %v564 = vadd.f32 %v468, %v511
      %v565 = vadd.f32 %v469, %v511
      %v566 = vadd.f32 %v470, %v511
      %v567 = vadd.f32 %v471, %v516
      %v568 = vadd.f32 %v472, %v516
      %v569 = vadd.f32 %v473, %v516
      %v570 = vadd.f32 %v474, %v516
      %v571 = vadd.f32 %v475, %v516
      %v572 = vadd.f32 %v476, %v516
      %v573 = vadd.f32 %v477, %v516
      %v574 = vmax.f32 %v518, 0.0
      %v575 = vmax.f32 %v519, 0.0
      %v576 = vmax.f32 %v520, 0.0
      %v577 = vmax.f32 %v521, 0.0
      %v578 = vmax.f32 %v522, 0.0
      %v579 = vmax.f32 %v523, 0.0
      %v580 = vmax.f32 %v524, 0.0
      %v581 = vmax.f32 %v525, 0.0
      %v582 = vmax.f32 %v526, 0.0
      %v583 = vmax.f32 %v527, 0.0
      %v584 = vmax.f32 %v528, 0.0
      %v585 = vmax.f32 %v529, 0.0
      %v586 = vmax.f32 %v530, 0.0
      %v587 = vmax.f32 %v531, 0.0
      %v588 = vmax.f32 %v532, 0.0
      %v589 = vmax.f32 %v533, 0.0
      %v590 = vmax.f32 %v534, 0.0
      %v591 = vmax.f32 %v535, 0.0
      %v592 = vmax.f32 %v536, 0.0
      %v593 = vmax.f32 %v537, 0.0
      %v594 = vmax.f32 %v538, 0.0
      %v595 = vmax.f32 %v539, 0.0
      %v596 = vmax.f32 %v540, 0.0
      %v597 = vmax.f32 %v541, 0.0
      %v598 = vmax.f32 %v542, 0.0
      %v599 = vmax.f32 %v543, 0.0
      %v600 = vmax.f32 %v544, 0.0
      %v601 = vmax.f32 %v545, 0.0
      %v602 = vmax.f32 %v546, 0.0
      %v603 = vmax.f32 %v547, 0.0
      %v604 = vmax.f32 %v548, 0.0
      %v605 = vmax.f32 %v549, 0.0
      %v606 = vmax.f32 %v550, 0.0
      %v607 = vmax.f32 %v551, 0.0
      %v608 = vmax.f32 %v552, 0.0
      %v609 = vmax.f32 %v553, 0.0
      %v610 = vmax.f32 %v554, 0.0
      %v611 = vmax.f32 %v555, 0.0
      %v612 = vmax.f32 %v556, 0.0
      %v613 = vmax.f32 %v557, 0.0
      %v614 = vmax.f32 %v558, 0.0
      %v615 = vmax.f32 %v559, 0.0
      %v616 = vmax.f32 %v560, 0.0
      %v617 = vmax.f32 %v561, 0.0
      %v618 = vmax.f32 %v562, 0.0
      %v619 = vmax.f32 %v563, 0.0
      %v620 = vmax.f32 %v564, 0.0
      %v621 = vmax.f32 %v565, 0.0
      %v622 = vmax.f32 %v566, 0.0
      %v623 = vmax.f32 %v567, 0.0
      %v624 = vmax.f32 %v568, 0.0
      %v625 = vmax.f32 %v569, 0.0
      %v626 = vmax.f32 %v570, 0.0
      %v627 = vmax.f32 %v571, 0.0
      %v628 = vmax.f32 %v572, 0.0
      %v629 = vmax.f32 %v573, 0.0
      %v630 = vpack.c.bf16 %v581, %v574
      %v631 = vpack.c.bf16 %v582, %v575
      %v632 = vpack.c.bf16 %v583, %v576
      %v633 = vpack.c.bf16 %v584, %v577
      %v634 = vpack.c.bf16 %v585, %v578
      %v635 = vpack.c.bf16 %v586, %v579
      %v636 = vpack.c.bf16 %v587, %v580
      %v637 = vpack.c.bf16 %v595, %v588
      %v638 = vpack.c.bf16 %v596, %v589
      %v639 = vpack.c.bf16 %v597, %v590
      %v640 = vpack.c.bf16 %v598, %v591
      %v641 = vpack.c.bf16 %v599, %v592
      %v642 = vpack.c.bf16 %v600, %v593
      %v643 = vpack.c.bf16 %v601, %v594
      %v644 = vpack.c.bf16 %v609, %v602
      %v645 = vpack.c.bf16 %v610, %v603
      %v646 = vpack.c.bf16 %v611, %v604
      %v647 = vpack.c.bf16 %v612, %v605
      %v648 = vpack.c.bf16 %v613, %v606
      %v649 = vpack.c.bf16 %v614, %v607
      %v650 = vpack.c.bf16 %v615, %v608
      %v651 = vpack.c.bf16 %v623, %v616
      %v652 = vpack.c.bf16 %v624, %v617
      %v653 = vpack.c.bf16 %v625, %v618
      %v654 = vpack.c.bf16 %v626, %v619
      %v655 = vpack.c.bf16 %v627, %v620
      %v656 = vpack.c.bf16 %v628, %v621
      %v657 = vpack.c.bf16 %v629, %v622
      %v707 = vunpack.c.l.b16 %v291
      %v708 = vunpack.c.l.b16 %v292
      %v709 = vunpack.c.l.b16 %v293
      %v710 = vunpack.c.l.b16 %v294
      %v711 = vunpack.c.l.b16 %v295
      %v712 = vunpack.c.l.b16 %v296
      %v713 = vunpack.c.l.b16 %v297
      %v714 = vunpack.c.l.b16 %v298
      %v715 = vunpack.c.l.b16 %v299
      %v716 = vunpack.c.l.b16 %v300
      %v717 = vunpack.c.l.b16 %v301
      %v718 = vunpack.c.l.b16 %v302
      %v719 = vunpack.c.l.b16 %v303
      %v720 = vunpack.c.l.b16 %v304
      %v721 = vunpack.c.l.b16 %v305
      %v722 = vunpack.c.l.b16 %v306
      %v723 = vunpack.c.l.b16 %v307
      %v724 = vunpack.c.l.b16 %v308
      %v725 = vunpack.c.l.b16 %v309
      %v726 = vunpack.c.l.b16 %v310
      %v727 = vunpack.c.l.b16 %v311
      %v728 = vunpack.c.l.b16 %v312
      %v729 = vunpack.c.l.b16 %v313
      %v730 = vunpack.c.l.b16 %v314
      %v731 = vunpack.c.l.b16 %v315
      %v732 = vunpack.c.l.b16 %v316
      %v733 = vunpack.c.l.b16 %v317
      %v734 = vunpack.c.l.b16 %v318
      %v735 = vunpack.c.l.b16 %v319
      %v736 = vunpack.c.l.b16 %v320
      %v737 = vunpack.c.l.b16 %v321
      %v738 = vunpack.c.l.b16 %v322
      %v739 = vunpack.c.l.b16 %v323
      %v740 = vunpack.c.l.b16 %v324
      %v741 = vunpack.c.l.b16 %v325
      %v742 = vunpack.c.l.b16 %v326
      %v743 = vunpack.c.l.b16 %v327
      %v744 = vunpack.c.l.b16 %v328
      %v745 = vunpack.c.l.b16 %v329
      %v746 = vunpack.c.l.b16 %v330
      %v747 = vunpack.c.l.b16 %v331
      %v748 = vunpack.c.l.b16 %v332
      %v749 = vunpack.c.l.b16 %v333
      %v750 = vunpack.c.l.b16 %v334
      %v751 = vunpack.c.l.b16 %v335
      %v752 = vunpack.c.l.b16 %v336
      %v753 = vunpack.c.l.b16 %v337
      %v754 = vunpack.c.l.b16 %v338
      %v755 = vunpack.c.l.b16 %v339
      %v756 = vpack.c.b16 %v708, %v707
      %v757 = vpack.c.b16 %v710, %v709
      %v758 = vpack.c.b16 %v712, %v711
      %v759 = vpack.c.b16 %v714, %v713
      %v760 = vpack.c.b16 %v716, %v715
      %v761 = vpack.c.b16 %v718, %v717
      %v762 = vpack.c.b16 %v720, %v719
      %v763 = vpack.c.b16 %v722, %v721
      %v764 = vpack.c.b16 %v724, %v723
      %v765 = vpack.c.b16 %v726, %v725
      %v766 = vpack.c.b16 %v728, %v727
      %v767 = vpack.c.b16 %v730, %v729
      %v768 = vpack.c.b16 %v732, %v731
      %v769 = vpack.c.b16 %v734, %v733
      %v770 = vpack.c.b16 %v736, %v735
      %v771 = vpack.c.b16 %v738, %v737
      %v772 = vpack.c.b16 %v740, %v739
      %v773 = vpack.c.b16 %v742, %v741
      %v774 = vpack.c.b16 %v744, %v743
      %v775 = vpack.c.b16 %v746, %v745
      %v776 = vpack.c.b16 %v748, %v747
      %v777 = vpack.c.b16 %v750, %v749
      %v778 = vpack.c.b16 %v752, %v751
      %v779 = vpack.c.b16 %v754, %v753
      %v780 = vpack.c.b16 %v755, %v755
      %vm781 = vcmask 523264
      %v783 = vsel %vm781, %v756, 0
      %v786 = vsel %vm781, %v757, 0
      %v789 = vsel %vm781, %v758, 0
      %v792 = vsel %vm781, %v759, 0
      %v795 = vsel %vm781, %v760, 0
      %v798 = vsel %vm781, %v761, 0
      %v801 = vsel %vm781, %v762, 0
      %v804 = vsel %vm781, %v763, 0
      %v807 = vsel %vm781, %v764, 0
      %v810 = vsel %vm781, %v765, 0
      %v813 = vsel %vm781, %v766, 0
      %v816 = vsel %vm781, %v767, 0
      %v819 = vsel %vm781, %v768, 0
      %v822 = vsel %vm781, %v769, 0
      %v825 = vsel %vm781, %v770, 0
      %v828 = vsel %vm781, %v771, 0
      %v831 = vsel %vm781, %v772, 0
      %v834 = vsel %vm781, %v773, 0
      %v837 = vsel %vm781, %v774, 0
      %v840 = vsel %vm781, %v775, 0
      %v843 = vsel %vm781, %v776, 0
      %v846 = vsel %vm781, %v777, 0
      %v849 = vsel %vm781, %v778, 0
      %v852 = vsel %vm781, %v779, 0
      %v855 = vsel %vm781, %v780, 0
      %857 = vmatprep.subr.bf16.mxu0 0
      %858 = vmatpush1.bf16.msra.mxu0 0
      %859 = vmatprep.subr.bf16.mxu0 0
      %860 = vmatpush1.bf16.msra.mxu0 0
      %861 = vmatprep.subr.bf16.mxu0 0
      %862 = vmatpush1.bf16.msra.mxu0 0
      %863 = vmatprep.subr.bf16.mxu0 0
      %864 = vmatpush1.bf16.msra.mxu0 0
      %865 = vmatprep.subr.bf16.mxu0 %v652
      %866 = vmatpush1.bf16.msra.mxu0 %v651
      %867 = vmatprep.subr.bf16.mxu0 %v645
      %868 = vmatpush1.bf16.msra.mxu0 %v644
      %869 = vmatprep.subr.bf16.mxu0 %v638
      %870 = vmatpush1.bf16.msra.mxu0 %v637
      %871 = vmatprep.subr.bf16.mxu0 %v631
      %872 = vmatpush1.bf16.msra.mxu0 %v630
      %873 = vmatprep.subr.bf16.mxu0 0
      %874 = vmatpush2.bf16.msra.mxu0 0
      %875 = vmatprep.subr.bf16.mxu0 0
      %876 = vmatpush2.bf16.msra.mxu0 0
      %877 = vmatprep.subr.bf16.mxu0 0
      %878 = vmatpush2.bf16.msra.mxu0 0
      %879 = vmatprep.subr.bf16.mxu0 0
      %880 = vmatpush2.bf16.msra.mxu0 0
      %881 = vmatprep.subr.bf16.mxu0 0
      %882 = vmatpush2.bf16.msra.mxu0 0
      %883 = vmatprep.subr.bf16.mxu0 0
      %884 = vmatpush2.bf16.msra.mxu0 0
      %885 = vmatprep.subr.bf16.mxu0 0
      %886 = vmatpush2.bf16.msra.mxu0 0
      %887 = vmatprep.subr.bf16.mxu0 0
      %888 = vmatpush2.bf16.msra.mxu0 0
      %889 = vmatprep.mubr.bf16.mxu0 0
      %890 = vmatmul.mubr.bf16.gmra.mxu0 %v783
      %v891 = vpop.f32.mrf.mxu0
      %v892 = vadd.f32 0.0, %v891
      %v893 = vpop.f32.mrf.mxu0
      %v894 = vadd.f32 0.0, %v893
      %v895 = vpop.f32.mrf.mxu0
      %v896 = vadd.f32 0.0, %v895
      %v897 = vpop.f32.mrf.mxu0
      %v898 = vadd.f32 0.0, %v897
      %899 = vmatprep.mubr.bf16.mxu0 0
      %900 = vmatmul.mubr.bf16.gmra.mxu0 %v786
      %v901 = vpop.f32.mrf.mxu0
      %v902 = vadd.f32 0.0, %v901
      %v903 = vpop.f32.mrf.mxu0
      %v904 = vadd.f32 0.0, %v903
      %v905 = vpop.f32.mrf.mxu0
      %v906 = vadd.f32 0.0, %v905
      %v907 = vpop.f32.mrf.mxu0
      %v908 = vadd.f32 0.0, %v907
      %909 = vmatprep.mubr.bf16.mxu0 0
      %910 = vmatmul.mubr.bf16.gmra.mxu0 %v789
      %v911 = vpop.f32.mrf.mxu0
      %v912 = vadd.f32 0.0, %v911
      %v913 = vpop.f32.mrf.mxu0
      %v914 = vadd.f32 0.0, %v913
      %v915 = vpop.f32.mrf.mxu0
      %v916 = vadd.f32 0.0, %v915
      %v917 = vpop.f32.mrf.mxu0
      %v918 = vadd.f32 0.0, %v917
      %919 = vmatprep.mubr.bf16.mxu0 0
      %920 = vmatmul.mubr.bf16.gmra.mxu0 %v792
      %v921 = vpop.f32.mrf.mxu0
      %v922 = vadd.f32 0.0, %v921
      %v923 = vpop.f32.mrf.mxu0
      %v924 = vadd.f32 0.0, %v923
      %v925 = vpop.f32.mrf.mxu0
      %v926 = vadd.f32 0.0, %v925
      %v927 = vpop.f32.mrf.mxu0
      %v928 = vadd.f32 0.0, %v927
      %929 = vmatprep.mubr.bf16.mxu0 0
      %930 = vmatmul.mubr.bf16.gmra.mxu0 %v795
      %v931 = vpop.f32.mrf.mxu0
      %v932 = vadd.f32 0.0, %v931
      %v933 = vpop.f32.mrf.mxu0
      %v934 = vadd.f32 0.0, %v933
      %v935 = vpop.f32.mrf.mxu0
      %v936 = vadd.f32 0.0, %v935
      %v937 = vpop.f32.mrf.mxu0
      %v938 = vadd.f32 0.0, %v937
      %939 = vmatprep.mubr.bf16.mxu0 0
      %940 = vmatmul.mubr.bf16.gmra.mxu0 %v798
      %v941 = vpop.f32.mrf.mxu0
      %v942 = vadd.f32 0.0, %v941
      %v943 = vpop.f32.mrf.mxu0
      %v944 = vadd.f32 0.0, %v943
      %v945 = vpop.f32.mrf.mxu0
      %v946 = vadd.f32 0.0, %v945
      %v947 = vpop.f32.mrf.mxu0
      %v948 = vadd.f32 0.0, %v947
      %949 = vmatprep.mubr.bf16.mxu0 0
      %950 = vmatmul.mubr.bf16.gmra.mxu0 %v801
      %v951 = vpop.f32.mrf.mxu0
      %v952 = vadd.f32 0.0, %v951
      %v953 = vpop.f32.mrf.mxu0
      %v954 = vadd.f32 0.0, %v953
      %v955 = vpop.f32.mrf.mxu0
      %v956 = vadd.f32 0.0, %v955
      %v957 = vpop.f32.mrf.mxu0
      %v958 = vadd.f32 0.0, %v957
      %959 = vmatprep.mubr.bf16.mxu0 0
      %960 = vmatmul.mubr.bf16.gmra.mxu0 %v804
      %v961 = vpop.f32.mrf.mxu0
      %v962 = vadd.f32 0.0, %v961
      %v963 = vpop.f32.mrf.mxu0
      %v964 = vadd.f32 0.0, %v963
      %v965 = vpop.f32.mrf.mxu0
      %v966 = vadd.f32 0.0, %v965
      %v967 = vpop.f32.mrf.mxu0
      %v968 = vadd.f32 0.0, %v967
      %969 = vmatprep.mubr.bf16.mxu0 0
      %970 = vmatmul.mubr.bf16.gmra.mxu0 %v807
      %v971 = vpop.f32.mrf.mxu0
      %v972 = vadd.f32 0.0, %v971
      %v973 = vpop.f32.mrf.mxu0
      %v974 = vadd.f32 0.0, %v973
      %v975 = vpop.f32.mrf.mxu0
      %v976 = vadd.f32 0.0, %v975
      %v977 = vpop.f32.mrf.mxu0
      %v978 = vadd.f32 0.0, %v977
      %979 = vmatprep.mubr.bf16.mxu0 0
      %980 = vmatmul.mubr.bf16.gmra.mxu0 %v810
      %v981 = vpop.f32.mrf.mxu0
      %v982 = vadd.f32 0.0, %v981
      %v983 = vpop.f32.mrf.mxu0
      %v984 = vadd.f32 0.0, %v983
      %v985 = vpop.f32.mrf.mxu0
      %v986 = vadd.f32 0.0, %v985
      %v987 = vpop.f32.mrf.mxu0
      %v988 = vadd.f32 0.0, %v987
      %989 = vmatprep.mubr.bf16.mxu0 0
      %990 = vmatmul.mubr.bf16.gmra.mxu0 %v813
      %v991 = vpop.f32.mrf.mxu0
      %v992 = vadd.f32 0.0, %v991
      %v993 = vpop.f32.mrf.mxu0
      %v994 = vadd.f32 0.0, %v993
      %v995 = vpop.f32.mrf.mxu0
      %v996 = vadd.f32 0.0, %v995
      %v997 = vpop.f32.mrf.mxu0
      %v998 = vadd.f32 0.0, %v997
      %999 = vmatprep.mubr.bf16.mxu0 0
      %1000 = vmatmul.mubr.bf16.gmra.mxu0 %v816
      %v1001 = vpop.f32.mrf.mxu0
      %v1002 = vadd.f32 0.0, %v1001
      %v1003 = vpop.f32.mrf.mxu0
      %v1004 = vadd.f32 0.0, %v1003
      %v1005 = vpop.f32.mrf.mxu0
      %v1006 = vadd.f32 0.0, %v1005
      %v1007 = vpop.f32.mrf.mxu0
      %v1008 = vadd.f32 0.0, %v1007
      %1009 = vmatprep.mubr.bf16.mxu0 0
      %1010 = vmatmul.mubr.bf16.gmra.mxu0 %v819
      %v1011 = vpop.f32.mrf.mxu0
      %v1012 = vadd.f32 0.0, %v1011
      %v1013 = vpop.f32.mrf.mxu0
      %v1014 = vadd.f32 0.0, %v1013
      %v1015 = vpop.f32.mrf.mxu0
      %v1016 = vadd.f32 0.0, %v1015
      %v1017 = vpop.f32.mrf.mxu0
      %v1018 = vadd.f32 0.0, %v1017
      %1019 = vmatprep.mubr.bf16.mxu0 0
      %1020 = vmatmul.mubr.bf16.gmra.mxu0 %v822
      %v1021 = vpop.f32.mrf.mxu0
      %v1022 = vadd.f32 0.0, %v1021
      %v1023 = vpop.f32.mrf.mxu0
      %v1024 = vadd.f32 0.0, %v1023
      %v1025 = vpop.f32.mrf.mxu0
      %v1026 = vadd.f32 0.0, %v1025
      %v1027 = vpop.f32.mrf.mxu0
      %v1028 = vadd.f32 0.0, %v1027
      %1029 = vmatprep.mubr.bf16.mxu0 0
      %1030 = vmatmul.mubr.bf16.gmra.mxu0 %v825
      %v1031 = vpop.f32.mrf.mxu0
      %v1032 = vadd.f32 0.0, %v1031
      %v1033 = vpop.f32.mrf.mxu0
      %v1034 = vadd.f32 0.0, %v1033
      %v1035 = vpop.f32.mrf.mxu0
      %v1036 = vadd.f32 0.0, %v1035
      %v1037 = vpop.f32.mrf.mxu0
      %v1038 = vadd.f32 0.0, %v1037
      %1039 = vmatprep.mubr.bf16.mxu0 0
      %1040 = vmatmul.mubr.bf16.gmra.mxu0 %v828
      %v1041 = vpop.f32.mrf.mxu0
      %v1042 = vadd.f32 0.0, %v1041
      %v1043 = vpop.f32.mrf.mxu0
      %v1044 = vadd.f32 0.0, %v1043
      %v1045 = vpop.f32.mrf.mxu0
      %v1046 = vadd.f32 0.0, %v1045
      %v1047 = vpop.f32.mrf.mxu0
      %v1048 = vadd.f32 0.0, %v1047
      %1049 = vmatprep.mubr.bf16.mxu0 0
      %1050 = vmatmul.mubr.bf16.gmra.mxu0 %v831
      %v1051 = vpop.f32.mrf.mxu0
      %v1052 = vadd.f32 0.0, %v1051
      %v1053 = vpop.f32.mrf.mxu0
      %v1054 = vadd.f32 0.0, %v1053
      %v1055 = vpop.f32.mrf.mxu0
      %v1056 = vadd.f32 0.0, %v1055
      %v1057 = vpop.f32.mrf.mxu0
      %v1058 = vadd.f32 0.0, %v1057
      %1059 = vmatprep.mubr.bf16.mxu0 0
      %1060 = vmatmul.mubr.bf16.gmra.mxu0 %v834
      %v1061 = vpop.f32.mrf.mxu0
      %v1062 = vadd.f32 0.0, %v1061
      %v1063 = vpop.f32.mrf.mxu0
      %v1064 = vadd.f32 0.0, %v1063
      %v1065 = vpop.f32.mrf.mxu0
      %v1066 = vadd.f32 0.0, %v1065
      %v1067 = vpop.f32.mrf.mxu0
      %v1068 = vadd.f32 0.0, %v1067
      %1069 = vmatprep.mubr.bf16.mxu0 0
      %1070 = vmatmul.mubr.bf16.gmra.mxu0 %v837
      %v1071 = vpop.f32.mrf.mxu0
      %v1072 = vadd.f32 0.0, %v1071
      %v1073 = vpop.f32.mrf.mxu0
      %v1074 = vadd.f32 0.0, %v1073
      %v1075 = vpop.f32.mrf.mxu0
      %v1076 = vadd.f32 0.0, %v1075
      %v1077 = vpop.f32.mrf.mxu0
      %v1078 = vadd.f32 0.0, %v1077
      %1079 = vmatprep.mubr.bf16.mxu0 0
      %1080 = vmatmul.mubr.bf16.gmra.mxu0 %v840
      %v1081 = vpop.f32.mrf.mxu0
      %v1082 = vadd.f32 0.0, %v1081
      %v1083 = vpop.f32.mrf.mxu0
      %v1084 = vadd.f32 0.0, %v1083
      %v1085 = vpop.f32.mrf.mxu0
      %v1086 = vadd.f32 0.0, %v1085
      %v1087 = vpop.f32.mrf.mxu0
      %v1088 = vadd.f32 0.0, %v1087
      %1089 = vmatprep.mubr.bf16.mxu0 0
      %1090 = vmatmul.mubr.bf16.gmra.mxu0 %v843
      %v1091 = vpop.f32.mrf.mxu0
      %v1092 = vadd.f32 0.0, %v1091
      %v1093 = vpop.f32.mrf.mxu0
      %v1094 = vadd.f32 0.0, %v1093
      %v1095 = vpop.f32.mrf.mxu0
      %v1096 = vadd.f32 0.0, %v1095
      %v1097 = vpop.f32.mrf.mxu0
      %v1098 = vadd.f32 0.0, %v1097
      %1099 = vmatprep.mubr.bf16.mxu0 0
      %1100 = vmatmul.mubr.bf16.gmra.mxu0 %v846
      %v1101 = vpop.f32.mrf.mxu0
      %v1102 = vadd.f32 0.0, %v1101
      %v1103 = vpop.f32.mrf.mxu0
      %v1104 = vadd.f32 0.0, %v1103
      %v1105 = vpop.f32.mrf.mxu0
      %v1106 = vadd.f32 0.0, %v1105
      %v1107 = vpop.f32.mrf.mxu0
      %v1108 = vadd.f32 0.0, %v1107
      %1109 = vmatprep.mubr.bf16.mxu0 0
      %1110 = vmatmul.mubr.bf16.gmra.mxu0 %v849
      %v1111 = vpop.f32.mrf.mxu0
      %v1112 = vadd.f32 0.0, %v1111
      %v1113 = vpop.f32.mrf.mxu0
      %v1114 = vadd.f32 0.0, %v1113
      %v1115 = vpop.f32.mrf.mxu0
      %v1116 = vadd.f32 0.0, %v1115
      %v1117 = vpop.f32.mrf.mxu0
      %v1118 = vadd.f32 0.0, %v1117
      %1119 = vmatprep.mubr.bf16.mxu0 0
      %1120 = vmatmul.mubr.bf16.gmra.mxu0 %v852
      %v1121 = vpop.f32.mrf.mxu0
      %v1122 = vadd.f32 0.0, %v1121
      %v1123 = vpop.f32.mrf.mxu0
      %v1124 = vadd.f32 0.0, %v1123
      %v1125 = vpop.f32.mrf.mxu0
      %v1126 = vadd.f32 0.0, %v1125
      %v1127 = vpop.f32.mrf.mxu0
      %v1128 = vadd.f32 0.0, %v1127
      %1129 = vmatprep.mubr.bf16.mxu0 0
      %1130 = vmatmul.mubr.bf16.gmra.mxu0 %v855
      %v1131 = vpop.f32.mrf.mxu0
      %v1132 = vadd.f32 0.0, %v1131
      %v1133 = vpop.f32.mrf.mxu0
      %v1134 = vadd.f32 0.0, %v1133
      %v1135 = vpop.f32.mrf.mxu0
      %v1136 = vpop.f32.mrf.mxu0
      %1137 = vdwg.mxu0
      %1138 = vmatprep.subr.bf16.mxu0 0
      %1139 = vmatpush1.bf16.msra.mxu0 0
      %1140 = vmatprep.subr.bf16.mxu0 0
      %1141 = vmatpush1.bf16.msra.mxu0 0
      %1142 = vmatprep.subr.bf16.mxu0 0
      %1143 = vmatpush1.bf16.msra.mxu0 0
      %1144 = vmatprep.subr.bf16.mxu0 0
      %1145 = vmatpush1.bf16.msra.mxu0 0
      %1146 = vmatprep.subr.bf16.mxu0 %v654
      %1147 = vmatpush1.bf16.msra.mxu0 %v653
      %1148 = vmatprep.subr.bf16.mxu0 %v647
      %1149 = vmatpush1.bf16.msra.mxu0 %v646
      %1150 = vmatprep.subr.bf16.mxu0 %v640
      %1151 = vmatpush1.bf16.msra.mxu0 %v639
      %1152 = vmatprep.subr.bf16.mxu0 %v633
      %1153 = vmatpush1.bf16.msra.mxu0 %v632
      %1154 = vmatprep.subr.bf16.mxu0 0
      %1155 = vmatpush2.bf16.msra.mxu0 0
      %1156 = vmatprep.subr.bf16.mxu0 0
      %1157 = vmatpush2.bf16.msra.mxu0 0
      %1158 = vmatprep.subr.bf16.mxu0 0
      %1159 = vmatpush2.bf16.msra.mxu0 0
      %1160 = vmatprep.subr.bf16.mxu0 0
      %1161 = vmatpush2.bf16.msra.mxu0 0
      %1162 = vmatprep.subr.bf16.mxu0 0
      %1163 = vmatpush2.bf16.msra.mxu0 0
      %1164 = vmatprep.subr.bf16.mxu0 0
      %1165 = vmatpush2.bf16.msra.mxu0 0
      %1166 = vmatprep.subr.bf16.mxu0 0
      %1167 = vmatpush2.bf16.msra.mxu0 0
      %1168 = vmatprep.subr.bf16.mxu0 0
      %1169 = vmatpush2.bf16.msra.mxu0 0
      %1170 = vmatprep.mubr.bf16.mxu0 0
      %1171 = vmatmul.mubr.bf16.gmra.mxu0 %v783
      %v1172 = vpop.f32.mrf.mxu0
      %v1173 = vadd.f32 0.0, %v1172
      %v1174 = vpop.f32.mrf.mxu0
      %v1175 = vadd.f32 0.0, %v1174
      %v1176 = vpop.f32.mrf.mxu0
      %v1177 = vadd.f32 0.0, %v1176
      %v1178 = vpop.f32.mrf.mxu0
      %v1179 = vadd.f32 0.0, %v1178
      %1180 = vmatprep.mubr.bf16.mxu0 0
      %1181 = vmatmul.mubr.bf16.gmra.mxu0 %v786
      %v1182 = vpop.f32.mrf.mxu0
      %v1183 = vadd.f32 0.0, %v1182
      %v1184 = vpop.f32.mrf.mxu0
      %v1185 = vadd.f32 0.0, %v1184
      %v1186 = vpop.f32.mrf.mxu0
      %v1187 = vadd.f32 0.0, %v1186
      %v1188 = vpop.f32.mrf.mxu0
      %v1189 = vadd.f32 0.0, %v1188
      %1190 = vmatprep.mubr.bf16.mxu0 0
      %1191 = vmatmul.mubr.bf16.gmra.mxu0 %v789
      %v1192 = vpop.f32.mrf.mxu0
      %v1193 = vadd.f32 0.0, %v1192
      %v1194 = vpop.f32.mrf.mxu0
      %v1195 = vadd.f32 0.0, %v1194
      %v1196 = vpop.f32.mrf.mxu0
      %v1197 = vadd.f32 0.0, %v1196
      %v1198 = vpop.f32.mrf.mxu0
      %v1199 = vadd.f32 0.0, %v1198
      %1200 = vmatprep.mubr.bf16.mxu0 0
      %1201 = vmatmul.mubr.bf16.gmra.mxu0 %v792
      %v1202 = vpop.f32.mrf.mxu0
      %v1203 = vadd.f32 0.0, %v1202
      %v1204 = vpop.f32.mrf.mxu0
      %v1205 = vadd.f32 0.0, %v1204
      %v1206 = vpop.f32.mrf.mxu0
      %v1207 = vadd.f32 0.0, %v1206
      %v1208 = vpop.f32.mrf.mxu0
      %v1209 = vadd.f32 0.0, %v1208
      %1210 = vmatprep.mubr.bf16.mxu0 0
      %1211 = vmatmul.mubr.bf16.gmra.mxu0 %v795
      %v1212 = vpop.f32.mrf.mxu0
      %v1213 = vadd.f32 0.0, %v1212
      %v1214 = vpop.f32.mrf.mxu0
      %v1215 = vadd.f32 0.0, %v1214
      %v1216 = vpop.f32.mrf.mxu0
      %v1217 = vadd.f32 0.0, %v1216
      %v1218 = vpop.f32.mrf.mxu0
      %v1219 = vadd.f32 0.0, %v1218
      %1220 = vmatprep.mubr.bf16.mxu0 0
      %1221 = vmatmul.mubr.bf16.gmra.mxu0 %v798
      %v1222 = vpop.f32.mrf.mxu0
      %v1223 = vadd.f32 0.0, %v1222
      %v1224 = vpop.f32.mrf.mxu0
      %v1225 = vadd.f32 0.0, %v1224
      %v1226 = vpop.f32.mrf.mxu0
      %v1227 = vadd.f32 0.0, %v1226
      %v1228 = vpop.f32.mrf.mxu0
      %v1229 = vadd.f32 0.0, %v1228
      %1230 = vmatprep.mubr.bf16.mxu0 0
      %1231 = vmatmul.mubr.bf16.gmra.mxu0 %v801
      %v1232 = vpop.f32.mrf.mxu0
      %v1233 = vadd.f32 0.0, %v1232
      %v1234 = vpop.f32.mrf.mxu0
      %v1235 = vadd.f32 0.0, %v1234
      %v1236 = vpop.f32.mrf.mxu0
      %v1237 = vadd.f32 0.0, %v1236
      %v1238 = vpop.f32.mrf.mxu0
      %v1239 = vadd.f32 0.0, %v1238
      %1240 = vmatprep.mubr.bf16.mxu0 0
      %1241 = vmatmul.mubr.bf16.gmra.mxu0 %v804
      %v1242 = vpop.f32.mrf.mxu0
      %v1243 = vadd.f32 0.0, %v1242
      %v1244 = vpop.f32.mrf.mxu0
      %v1245 = vadd.f32 0.0, %v1244
      %v1246 = vpop.f32.mrf.mxu0
      %v1247 = vadd.f32 0.0, %v1246
      %v1248 = vpop.f32.mrf.mxu0
      %v1249 = vadd.f32 0.0, %v1248
      %1250 = vmatprep.mubr.bf16.mxu0 0
      %1251 = vmatmul.mubr.bf16.gmra.mxu0 %v807
      %v1252 = vpop.f32.mrf.mxu0
      %v1253 = vadd.f32 0.0, %v1252
      %v1254 = vpop.f32.mrf.mxu0
      %v1255 = vadd.f32 0.0, %v1254
      %v1256 = vpop.f32.mrf.mxu0
      %v1257 = vadd.f32 0.0, %v1256
      %v1258 = vpop.f32.mrf.mxu0
      %v1259 = vadd.f32 0.0, %v1258
      %1260 = vmatprep.mubr.bf16.mxu0 0
      %1261 = vmatmul.mubr.bf16.gmra.mxu0 %v810
      %v1262 = vpop.f32.mrf.mxu0
      %v1263 = vadd.f32 0.0, %v1262
      %v1264 = vpop.f32.mrf.mxu0
      %v1265 = vadd.f32 0.0, %v1264
      %v1266 = vpop.f32.mrf.mxu0
      %v1267 = vadd.f32 0.0, %v1266
      %v1268 = vpop.f32.mrf.mxu0
      %v1269 = vadd.f32 0.0, %v1268
      %1270 = vmatprep.mubr.bf16.mxu0 0
      %1271 = vmatmul.mubr.bf16.gmra.mxu0 %v813
      %v1272 = vpop.f32.mrf.mxu0
      %v1273 = vadd.f32 0.0, %v1272
      %v1274 = vpop.f32.mrf.mxu0
      %v1275 = vadd.f32 0.0, %v1274
      %v1276 = vpop.f32.mrf.mxu0
      %v1277 = vadd.f32 0.0, %v1276
      %v1278 = vpop.f32.mrf.mxu0
      %v1279 = vadd.f32 0.0, %v1278
      %1280 = vmatprep.mubr.bf16.mxu0 0
      %1281 = vmatmul.mubr.bf16.gmra.mxu0 %v816
      %v1282 = vpop.f32.mrf.mxu0
      %v1283 = vadd.f32 0.0, %v1282
      %v1284 = vpop.f32.mrf.mxu0
      %v1285 = vadd.f32 0.0, %v1284
      %v1286 = vpop.f32.mrf.mxu0
      %v1287 = vadd.f32 0.0, %v1286
      %v1288 = vpop.f32.mrf.mxu0
      %v1289 = vadd.f32 0.0, %v1288
      %1290 = vmatprep.mubr.bf16.mxu0 0
      %1291 = vmatmul.mubr.bf16.gmra.mxu0 %v819
      %v1292 = vpop.f32.mrf.mxu0
      %v1293 = vadd.f32 0.0, %v1292
      %v1294 = vpop.f32.mrf.mxu0
      %v1295 = vadd.f32 0.0, %v1294
      %v1296 = vpop.f32.mrf.mxu0
      %v1297 = vadd.f32 0.0, %v1296
      %v1298 = vpop.f32.mrf.mxu0
      %v1299 = vadd.f32 0.0, %v1298
      %1300 = vmatprep.mubr.bf16.mxu0 0
      %1301 = vmatmul.mubr.bf16.gmra.mxu0 %v822
      %v1302 = vpop.f32.mrf.mxu0
      %v1303 = vadd.f32 0.0, %v1302
      %v1304 = vpop.f32.mrf.mxu0
      %v1305 = vadd.f32 0.0, %v1304
      %v1306 = vpop.f32.mrf.mxu0
      %v1307 = vadd.f32 0.0, %v1306
      %v1308 = vpop.f32.mrf.mxu0
      %v1309 = vadd.f32 0.0, %v1308
      %1310 = vmatprep.mubr.bf16.mxu0 0
      %1311 = vmatmul.mubr.bf16.gmra.mxu0 %v825
      %v1312 = vpop.f32.mrf.mxu0
      %v1313 = vadd.f32 0.0, %v1312
      %v1314 = vpop.f32.mrf.mxu0
      %v1315 = vadd.f32 0.0, %v1314
      %v1316 = vpop.f32.mrf.mxu0
      %v1317 = vadd.f32 0.0, %v1316
      %v1318 = vpop.f32.mrf.mxu0
      %v1319 = vadd.f32 0.0, %v1318
      %1320 = vmatprep.mubr.bf16.mxu0 0
      %1321 = vmatmul.mubr.bf16.gmra.mxu0 %v828
      %v1322 = vpop.f32.mrf.mxu0
      %v1323 = vadd.f32 0.0, %v1322
      %v1324 = vpop.f32.mrf.mxu0
      %v1325 = vadd.f32 0.0, %v1324
      %v1326 = vpop.f32.mrf.mxu0
      %v1327 = vadd.f32 0.0, %v1326
      %v1328 = vpop.f32.mrf.mxu0
      %v1329 = vadd.f32 0.0, %v1328
      %1330 = vmatprep.mubr.bf16.mxu0 0
      %1331 = vmatmul.mubr.bf16.gmra.mxu0 %v831
      %v1332 = vpop.f32.mrf.mxu0
      %v1333 = vadd.f32 0.0, %v1332
      %v1334 = vpop.f32.mrf.mxu0
      %v1335 = vadd.f32 0.0, %v1334
      %v1336 = vpop.f32.mrf.mxu0
      %v1337 = vadd.f32 0.0, %v1336
      %v1338 = vpop.f32.mrf.mxu0
      %v1339 = vadd.f32 0.0, %v1338
      %1340 = vmatprep.mubr.bf16.mxu0 0
      %1341 = vmatmul.mubr.bf16.gmra.mxu0 %v834
      %v1342 = vpop.f32.mrf.mxu0
      %v1343 = vadd.f32 0.0, %v1342
      %v1344 = vpop.f32.mrf.mxu0
      %v1345 = vadd.f32 0.0, %v1344
      %v1346 = vpop.f32.mrf.mxu0
      %v1347 = vadd.f32 0.0, %v1346
      %v1348 = vpop.f32.mrf.mxu0
      %v1349 = vadd.f32 0.0, %v1348
      %1350 = vmatprep.mubr.bf16.mxu0 0
      %1351 = vmatmul.mubr.bf16.gmra.mxu0 %v837
      %v1352 = vpop.f32.mrf.mxu0
      %v1353 = vadd.f32 0.0, %v1352
      %v1354 = vpop.f32.mrf.mxu0
      %v1355 = vadd.f32 0.0, %v1354
      %v1356 = vpop.f32.mrf.mxu0
      %v1357 = vadd.f32 0.0, %v1356
      %v1358 = vpop.f32.mrf.mxu0
      %v1359 = vadd.f32 0.0, %v1358
      %1360 = vmatprep.mubr.bf16.mxu0 0
      %1361 = vmatmul.mubr.bf16.gmra.mxu0 %v840
      %v1362 = vpop.f32.mrf.mxu0
      %v1363 = vadd.f32 0.0, %v1362
      %v1364 = vpop.f32.mrf.mxu0
      %v1365 = vadd.f32 0.0, %v1364
      %v1366 = vpop.f32.mrf.mxu0
      %v1367 = vadd.f32 0.0, %v1366
      %v1368 = vpop.f32.mrf.mxu0
      %v1369 = vadd.f32 0.0, %v1368
      %1370 = vmatprep.mubr.bf16.mxu0 0
      %1371 = vmatmul.mubr.bf16.gmra.mxu0 %v843
      %v1372 = vpop.f32.mrf.mxu0
      %v1373 = vadd.f32 0.0, %v1372
      %v1374 = vpop.f32.mrf.mxu0
      %v1375 = vadd.f32 0.0, %v1374
      %v1376 = vpop.f32.mrf.mxu0
      %v1377 = vadd.f32 0.0, %v1376
      %v1378 = vpop.f32.mrf.mxu0
      %v1379 = vadd.f32 0.0, %v1378
      %1380 = vmatprep.mubr.bf16.mxu0 0
      %1381 = vmatmul.mubr.bf16.gmra.mxu0 %v846
      %v1382 = vpop.f32.mrf.mxu0
      %v1383 = vadd.f32 0.0, %v1382
      %v1384 = vpop.f32.mrf.mxu0
      %v1385 = vadd.f32 0.0, %v1384
      %v1386 = vpop.f32.mrf.mxu0
      %v1387 = vadd.f32 0.0, %v1386
      %v1388 = vpop.f32.mrf.mxu0
      %v1389 = vadd.f32 0.0, %v1388
      %1390 = vmatprep.mubr.bf16.mxu0 0
      %1391 = vmatmul.mubr.bf16.gmra.mxu0 %v849
      %v1392 = vpop.f32.mrf.mxu0
      %v1393 = vadd.f32 0.0, %v1392
      %v1394 = vpop.f32.mrf.mxu0
      %v1395 = vadd.f32 0.0, %v1394
      %v1396 = vpop.f32.mrf.mxu0
      %v1397 = vadd.f32 0.0, %v1396
      %v1398 = vpop.f32.mrf.mxu0
      %v1399 = vadd.f32 0.0, %v1398
      %1400 = vmatprep.mubr.bf16.mxu0 0
      %1401 = vmatmul.mubr.bf16.gmra.mxu0 %v852
      %v1402 = vpop.f32.mrf.mxu0
      %v1403 = vadd.f32 0.0, %v1402
      %v1404 = vpop.f32.mrf.mxu0
      %v1405 = vadd.f32 0.0, %v1404
      %v1406 = vpop.f32.mrf.mxu0
      %v1407 = vadd.f32 0.0, %v1406
      %v1408 = vpop.f32.mrf.mxu0
      %v1409 = vadd.f32 0.0, %v1408
      %1410 = vmatprep.mubr.bf16.mxu0 0
      %1411 = vmatmul.mubr.bf16.gmra.mxu0 %v855
      %v1412 = vpop.f32.mrf.mxu0
      %v1413 = vadd.f32 0.0, %v1412
      %v1414 = vpop.f32.mrf.mxu0
      %v1415 = vadd.f32 0.0, %v1414
      %v1416 = vpop.f32.mrf.mxu0
      %v1417 = vpop.f32.mrf.mxu0
      %1418 = vdwg.mxu0
      %1419 = vmatprep.subr.bf16.mxu0 0
      %1420 = vmatpush1.bf16.msra.mxu0 0
      %1421 = vmatprep.subr.bf16.mxu0 0
      %1422 = vmatpush1.bf16.msra.mxu0 0
      %1423 = vmatprep.subr.bf16.mxu0 0
      %1424 = vmatpush1.bf16.msra.mxu0 0
      %1425 = vmatprep.subr.bf16.mxu0 0
      %1426 = vmatpush1.bf16.msra.mxu0 0
      %1427 = vmatprep.subr.bf16.mxu0 %v656
      %1428 = vmatpush1.bf16.msra.mxu0 %v655
      %1429 = vmatprep.subr.bf16.mxu0 %v649
      %1430 = vmatpush1.bf16.msra.mxu0 %v648
      %1431 = vmatprep.subr.bf16.mxu0 %v642
      %1432 = vmatpush1.bf16.msra.mxu0 %v641
      %1433 = vmatprep.subr.bf16.mxu0 %v635
      %1434 = vmatpush1.bf16.msra.mxu0 %v634
      %1435 = vmatprep.subr.bf16.mxu0 0
      %1436 = vmatpush2.bf16.msra.mxu0 0
      %1437 = vmatprep.subr.bf16.mxu0 0
      %1438 = vmatpush2.bf16.msra.mxu0 0
      %1439 = vmatprep.subr.bf16.mxu0 0
      %1440 = vmatpush2.bf16.msra.mxu0 0
      %1441 = vmatprep.subr.bf16.mxu0 0
      %1442 = vmatpush2.bf16.msra.mxu0 0
      %1443 = vmatprep.subr.bf16.mxu0 0
      %1444 = vmatpush2.bf16.msra.mxu0 0
      %1445 = vmatprep.subr.bf16.mxu0 0
      %1446 = vmatpush2.bf16.msra.mxu0 0
      %1447 = vmatprep.subr.bf16.mxu0 0
      %1448 = vmatpush2.bf16.msra.mxu0 0
      %1449 = vmatprep.subr.bf16.mxu0 0
      %1450 = vmatpush2.bf16.msra.mxu0 0
      %1451 = vmatprep.mubr.bf16.mxu0 0
      %1452 = vmatmul.mubr.bf16.gmra.mxu0 %v783
      %v1453 = vpop.f32.mrf.mxu0
      %v1454 = vadd.f32 0.0, %v1453
      %v1455 = vpop.f32.mrf.mxu0
      %v1456 = vadd.f32 0.0, %v1455
      %v1457 = vpop.f32.mrf.mxu0
      %v1458 = vadd.f32 0.0, %v1457
      %v1459 = vpop.f32.mrf.mxu0
      %v1460 = vadd.f32 0.0, %v1459
      %1461 = vmatprep.mubr.bf16.mxu0 0
      %1462 = vmatmul.mubr.bf16.gmra.mxu0 %v786
      %v1463 = vpop.f32.mrf.mxu0
      %v1464 = vadd.f32 0.0, %v1463
      %v1465 = vpop.f32.mrf.mxu0
      %v1466 = vadd.f32 0.0, %v1465
      %v1467 = vpop.f32.mrf.mxu0
      %v1468 = vadd.f32 0.0, %v1467
      %v1469 = vpop.f32.mrf.mxu0
      %v1470 = vadd.f32 0.0, %v1469
      %1471 = vmatprep.mubr.bf16.mxu0 0
      %1472 = vmatmul.mubr.bf16.gmra.mxu0 %v789
      %v1473 = vpop.f32.mrf.mxu0
      %v1474 = vadd.f32 0.0, %v1473
      %v1475 = vpop.f32.mrf.mxu0
      %v1476 = vadd.f32 0.0, %v1475
      %v1477 = vpop.f32.mrf.mxu0
      %v1478 = vadd.f32 0.0, %v1477
      %v1479 = vpop.f32.mrf.mxu0
      %v1480 = vadd.f32 0.0, %v1479
      %1481 = vmatprep.mubr.bf16.mxu0 0
      %1482 = vmatmul.mubr.bf16.gmra.mxu0 %v792
      %v1483 = vpop.f32.mrf.mxu0
      %v1484 = vadd.f32 0.0, %v1483
      %v1485 = vpop.f32.mrf.mxu0
      %v1486 = vadd.f32 0.0, %v1485
      %v1487 = vpop.f32.mrf.mxu0
      %v1488 = vadd.f32 0.0, %v1487
      %v1489 = vpop.f32.mrf.mxu0
      %v1490 = vadd.f32 0.0, %v1489
      %1491 = vmatprep.mubr.bf16.mxu0 0
      %1492 = vmatmul.mubr.bf16.gmra.mxu0 %v795
      %v1493 = vpop.f32.mrf.mxu0
      %v1494 = vadd.f32 0.0, %v1493
      %v1495 = vpop.f32.mrf.mxu0
      %v1496 = vadd.f32 0.0, %v1495
      %v1497 = vpop.f32.mrf.mxu0
      %v1498 = vadd.f32 0.0, %v1497
      %v1499 = vpop.f32.mrf.mxu0
      %v1500 = vadd.f32 0.0, %v1499
      %1501 = vmatprep.mubr.bf16.mxu0 0
      %1502 = vmatmul.mubr.bf16.gmra.mxu0 %v798
      %v1503 = vpop.f32.mrf.mxu0
      %v1504 = vadd.f32 0.0, %v1503
      %v1505 = vpop.f32.mrf.mxu0
      %v1506 = vadd.f32 0.0, %v1505
      %v1507 = vpop.f32.mrf.mxu0
      %v1508 = vadd.f32 0.0, %v1507
      %v1509 = vpop.f32.mrf.mxu0
      %v1510 = vadd.f32 0.0, %v1509
      %1511 = vmatprep.mubr.bf16.mxu0 0
      %1512 = vmatmul.mubr.bf16.gmra.mxu0 %v801
      %v1513 = vpop.f32.mrf.mxu0
      %v1514 = vadd.f32 0.0, %v1513
      %v1515 = vpop.f32.mrf.mxu0
      %v1516 = vadd.f32 0.0, %v1515
      %v1517 = vpop.f32.mrf.mxu0
      %v1518 = vadd.f32 0.0, %v1517
      %v1519 = vpop.f32.mrf.mxu0
      %v1520 = vadd.f32 0.0, %v1519
      %1521 = vmatprep.mubr.bf16.mxu0 0
      %1522 = vmatmul.mubr.bf16.gmra.mxu0 %v804
      %v1523 = vpop.f32.mrf.mxu0
      %v1524 = vadd.f32 0.0, %v1523
      %v1525 = vpop.f32.mrf.mxu0
      %v1526 = vadd.f32 0.0, %v1525
      %v1527 = vpop.f32.mrf.mxu0
      %v1528 = vadd.f32 0.0, %v1527
      %v1529 = vpop.f32.mrf.mxu0
      %v1530 = vadd.f32 0.0, %v1529
      %1531 = vmatprep.mubr.bf16.mxu0 0
      %1532 = vmatmul.mubr.bf16.gmra.mxu0 %v807
      %v1533 = vpop.f32.mrf.mxu0
      %v1534 = vadd.f32 0.0, %v1533
      %v1535 = vpop.f32.mrf.mxu0
      %v1536 = vadd.f32 0.0, %v1535
      %v1537 = vpop.f32.mrf.mxu0
      %v1538 = vadd.f32 0.0, %v1537
      %v1539 = vpop.f32.mrf.mxu0
      %v1540 = vadd.f32 0.0, %v1539
      %1541 = vmatprep.mubr.bf16.mxu0 0
      %1542 = vmatmul.mubr.bf16.gmra.mxu0 %v810
      %v1543 = vpop.f32.mrf.mxu0
      %v1544 = vadd.f32 0.0, %v1543
      %v1545 = vpop.f32.mrf.mxu0
      %v1546 = vadd.f32 0.0, %v1545
      %v1547 = vpop.f32.mrf.mxu0
      %v1548 = vadd.f32 0.0, %v1547
      %v1549 = vpop.f32.mrf.mxu0
      %v1550 = vadd.f32 0.0, %v1549
      %1551 = vmatprep.mubr.bf16.mxu0 0
      %1552 = vmatmul.mubr.bf16.gmra.mxu0 %v813
      %v1553 = vpop.f32.mrf.mxu0
      %v1554 = vadd.f32 0.0, %v1553
      %v1555 = vpop.f32.mrf.mxu0
      %v1556 = vadd.f32 0.0, %v1555
      %v1557 = vpop.f32.mrf.mxu0
      %v1558 = vadd.f32 0.0, %v1557
      %v1559 = vpop.f32.mrf.mxu0
      %v1560 = vadd.f32 0.0, %v1559
      %1561 = vmatprep.mubr.bf16.mxu0 0
      %1562 = vmatmul.mubr.bf16.gmra.mxu0 %v816
      %v1563 = vpop.f32.mrf.mxu0
      %v1564 = vadd.f32 0.0, %v1563
      %v1565 = vpop.f32.mrf.mxu0
      %v1566 = vadd.f32 0.0, %v1565
      %v1567 = vpop.f32.mrf.mxu0
      %v1568 = vadd.f32 0.0, %v1567
      %v1569 = vpop.f32.mrf.mxu0
      %v1570 = vadd.f32 0.0, %v1569
      %1571 = vmatprep.mubr.bf16.mxu0 0
      %1572 = vmatmul.mubr.bf16.gmra.mxu0 %v819
      %v1573 = vpop.f32.mrf.mxu0
      %v1574 = vadd.f32 0.0, %v1573
      %v1575 = vpop.f32.mrf.mxu0
      %v1576 = vadd.f32 0.0, %v1575
      %v1577 = vpop.f32.mrf.mxu0
      %v1578 = vadd.f32 0.0, %v1577
      %v1579 = vpop.f32.mrf.mxu0
      %v1580 = vadd.f32 0.0, %v1579
      %1581 = vmatprep.mubr.bf16.mxu0 0
      %1582 = vmatmul.mubr.bf16.gmra.mxu0 %v822
      %v1583 = vpop.f32.mrf.mxu0
      %v1584 = vadd.f32 0.0, %v1583
      %v1585 = vpop.f32.mrf.mxu0
      %v1586 = vadd.f32 0.0, %v1585
      %v1587 = vpop.f32.mrf.mxu0
      %v1588 = vadd.f32 0.0, %v1587
      %v1589 = vpop.f32.mrf.mxu0
      %v1590 = vadd.f32 0.0, %v1589
      %1591 = vmatprep.mubr.bf16.mxu0 0
      %1592 = vmatmul.mubr.bf16.gmra.mxu0 %v825
      %v1593 = vpop.f32.mrf.mxu0
      %v1594 = vadd.f32 0.0, %v1593
      %v1595 = vpop.f32.mrf.mxu0
      %v1596 = vadd.f32 0.0, %v1595
      %v1597 = vpop.f32.mrf.mxu0
      %v1598 = vadd.f32 0.0, %v1597
      %v1599 = vpop.f32.mrf.mxu0
      %v1600 = vadd.f32 0.0, %v1599
      %1601 = vmatprep.mubr.bf16.mxu0 0
      %1602 = vmatmul.mubr.bf16.gmra.mxu0 %v828
      %v1603 = vpop.f32.mrf.mxu0
      %v1604 = vadd.f32 0.0, %v1603
      %v1605 = vpop.f32.mrf.mxu0
      %v1606 = vadd.f32 0.0, %v1605
      %v1607 = vpop.f32.mrf.mxu0
      %v1608 = vadd.f32 0.0, %v1607
      %v1609 = vpop.f32.mrf.mxu0
      %v1610 = vadd.f32 0.0, %v1609
      %1611 = vmatprep.mubr.bf16.mxu0 0
      %1612 = vmatmul.mubr.bf16.gmra.mxu0 %v831
      %v1613 = vpop.f32.mrf.mxu0
      %v1614 = vadd.f32 0.0, %v1613
      %v1615 = vpop.f32.mrf.mxu0
      %v1616 = vadd.f32 0.0, %v1615
      %v1617 = vpop.f32.mrf.mxu0
      %v1618 = vadd.f32 0.0, %v1617
      %v1619 = vpop.f32.mrf.mxu0
      %v1620 = vadd.f32 0.0, %v1619
      %1621 = vmatprep.mubr.bf16.mxu0 0
      %1622 = vmatmul.mubr.bf16.gmra.mxu0 %v834
      %v1623 = vpop.f32.mrf.mxu0
      %v1624 = vadd.f32 0.0, %v1623
      %v1625 = vpop.f32.mrf.mxu0
      %v1626 = vadd.f32 0.0, %v1625
      %v1627 = vpop.f32.mrf.mxu0
      %v1628 = vadd.f32 0.0, %v1627
      %v1629 = vpop.f32.mrf.mxu0
      %v1630 = vadd.f32 0.0, %v1629
      %1631 = vmatprep.mubr.bf16.mxu0 0
      %1632 = vmatmul.mubr.bf16.gmra.mxu0 %v837
      %v1633 = vpop.f32.mrf.mxu0
      %v1634 = vadd.f32 0.0, %v1633
      %v1635 = vpop.f32.mrf.mxu0
      %v1636 = vadd.f32 0.0, %v1635
      %v1637 = vpop.f32.mrf.mxu0
      %v1638 = vadd.f32 0.0, %v1637
      %v1639 = vpop.f32.mrf.mxu0
      %v1640 = vadd.f32 0.0, %v1639
      %1641 = vmatprep.mubr.bf16.mxu0 0
      %1642 = vmatmul.mubr.bf16.gmra.mxu0 %v840
      %v1643 = vpop.f32.mrf.mxu0
      %v1644 = vadd.f32 0.0, %v1643
      %v1645 = vpop.f32.mrf.mxu0
      %v1646 = vadd.f32 0.0, %v1645
      %v1647 = vpop.f32.mrf.mxu0
      %v1648 = vadd.f32 0.0, %v1647
      %v1649 = vpop.f32.mrf.mxu0
      %v1650 = vadd.f32 0.0, %v1649
      %1651 = vmatprep.mubr.bf16.mxu0 0
      %1652 = vmatmul.mubr.bf16.gmra.mxu0 %v843
      %v1653 = vpop.f32.mrf.mxu0
      %v1654 = vadd.f32 0.0, %v1653
      %v1655 = vpop.f32.mrf.mxu0
      %v1656 = vadd.f32 0.0, %v1655
      %v1657 = vpop.f32.mrf.mxu0
      %v1658 = vadd.f32 0.0, %v1657
      %v1659 = vpop.f32.mrf.mxu0
      %v1660 = vadd.f32 0.0, %v1659
      %1661 = vmatprep.mubr.bf16.mxu0 0
      %1662 = vmatmul.mubr.bf16.gmra.mxu0 %v846
      %v1663 = vpop.f32.mrf.mxu0
      %v1664 = vadd.f32 0.0, %v1663
      %v1665 = vpop.f32.mrf.mxu0
      %v1666 = vadd.f32 0.0, %v1665
      %v1667 = vpop.f32.mrf.mxu0
      %v1668 = vadd.f32 0.0, %v1667
      %v1669 = vpop.f32.mrf.mxu0
      %v1670 = vadd.f32 0.0, %v1669
      %1671 = vmatprep.mubr.bf16.mxu0 0
      %1672 = vmatmul.mubr.bf16.gmra.mxu0 %v849
      %v1673 = vpop.f32.mrf.mxu0
      %v1674 = vadd.f32 0.0, %v1673
      %v1675 = vpop.f32.mrf.mxu0
      %v1676 = vadd.f32 0.0, %v1675
      %v1677 = vpop.f32.mrf.mxu0
      %v1678 = vadd.f32 0.0, %v1677
      %v1679 = vpop.f32.mrf.mxu0
      %v1680 = vadd.f32 0.0, %v1679
      %1681 = vmatprep.mubr.bf16.mxu0 0
      %1682 = vmatmul.mubr.bf16.gmra.mxu0 %v852
      %v1683 = vpop.f32.mrf.mxu0
      %v1684 = vadd.f32 0.0, %v1683
      %v1685 = vpop.f32.mrf.mxu0
      %v1686 = vadd.f32 0.0, %v1685
      %v1687 = vpop.f32.mrf.mxu0
      %v1688 = vadd.f32 0.0, %v1687
      %v1689 = vpop.f32.mrf.mxu0
      %v1690 = vadd.f32 0.0, %v1689
      %1691 = vmatprep.mubr.bf16.mxu0 0
      %1692 = vmatmul.mubr.bf16.gmra.mxu0 %v855
      %v1693 = vpop.f32.mrf.mxu0
      %v1694 = vadd.f32 0.0, %v1693
      %v1695 = vpop.f32.mrf.mxu0
      %v1696 = vadd.f32 0.0, %v1695
      %v1697 = vpop.f32.mrf.mxu0
      %v1698 = vpop.f32.mrf.mxu0
      %1699 = vdwg.mxu0
      %1700 = vmatprep.subr.bf16.mxu0 0
      %1701 = vmatpush1.bf16.msra.mxu0 0
      %1702 = vmatprep.subr.bf16.mxu0 0
      %1703 = vmatpush1.bf16.msra.mxu0 0
      %1704 = vmatprep.subr.bf16.mxu0 0
      %1705 = vmatpush1.bf16.msra.mxu0 0
      %1706 = vmatprep.subr.bf16.mxu0 0
      %1707 = vmatpush1.bf16.msra.mxu0 0
      %1708 = vmatprep.subr.bf16.mxu0 0
      %1709 = vmatpush1.bf16.msra.mxu0 %v657
      %1710 = vmatprep.subr.bf16.mxu0 0
      %1711 = vmatpush1.bf16.msra.mxu0 %v650
      %1712 = vmatprep.subr.bf16.mxu0 0
      %1713 = vmatpush1.bf16.msra.mxu0 %v643
      %1714 = vmatprep.subr.bf16.mxu0 0
      %1715 = vmatpush1.bf16.msra.mxu0 %v636
      %1716 = vmatprep.subr.bf16.mxu0 0
      %1717 = vmatpush2.bf16.msra.mxu0 0
      %1718 = vmatprep.subr.bf16.mxu0 0
      %1719 = vmatpush2.bf16.msra.mxu0 0
      %1720 = vmatprep.subr.bf16.mxu0 0
      %1721 = vmatpush2.bf16.msra.mxu0 0
      %1722 = vmatprep.subr.bf16.mxu0 0
      %1723 = vmatpush2.bf16.msra.mxu0 0
      %1724 = vmatprep.subr.bf16.mxu0 0
      %1725 = vmatpush2.bf16.msra.mxu0 0
      %1726 = vmatprep.subr.bf16.mxu0 0
      %1727 = vmatpush2.bf16.msra.mxu0 0
      %1728 = vmatprep.subr.bf16.mxu0 0
      %1729 = vmatpush2.bf16.msra.mxu0 0
      %1730 = vmatprep.subr.bf16.mxu0 0
      %1731 = vmatpush2.bf16.msra.mxu0 0
      %1732 = vmatprep.mubr.bf16.mxu0 0
      %1733 = vmatmul.mubr.bf16.gmra.mxu0 %v783
      %v1734 = vpop.f32.mrf.mxu0
      %v1735 = vadd.f32 0.0, %v1734
      %v1736 = vpop.f32.mrf.mxu0
      %v1737 = vpop.f32.mrf.mxu0
      %v1738 = vadd.f32 0.0, %v1737
      %v1739 = vpop.f32.mrf.mxu0
      %1740 = vmatprep.mubr.bf16.mxu0 0
      %1741 = vmatmul.mubr.bf16.gmra.mxu0 %v786
      %v1742 = vpop.f32.mrf.mxu0
      %v1743 = vadd.f32 0.0, %v1742
      %v1744 = vpop.f32.mrf.mxu0
      %v1745 = vpop.f32.mrf.mxu0
      %v1746 = vadd.f32 0.0, %v1745
      %v1747 = vpop.f32.mrf.mxu0
      %1748 = vmatprep.mubr.bf16.mxu0 0
      %1749 = vmatmul.mubr.bf16.gmra.mxu0 %v789
      %v1750 = vpop.f32.mrf.mxu0
      %v1751 = vadd.f32 0.0, %v1750
      %v1752 = vpop.f32.mrf.mxu0
      %v1753 = vpop.f32.mrf.mxu0
      %v1754 = vadd.f32 0.0, %v1753
      %v1755 = vpop.f32.mrf.mxu0
      %1756 = vmatprep.mubr.bf16.mxu0 0
      %1757 = vmatmul.mubr.bf16.gmra.mxu0 %v792
      %v1758 = vpop.f32.mrf.mxu0
      %v1759 = vadd.f32 0.0, %v1758
      %v1760 = vpop.f32.mrf.mxu0
      %v1761 = vpop.f32.mrf.mxu0
      %v1762 = vadd.f32 0.0, %v1761
      %v1763 = vpop.f32.mrf.mxu0
      %1764 = vmatprep.mubr.bf16.mxu0 0
      %1765 = vmatmul.mubr.bf16.gmra.mxu0 %v795
      %v1766 = vpop.f32.mrf.mxu0
      %v1767 = vadd.f32 0.0, %v1766
      %v1768 = vpop.f32.mrf.mxu0
      %v1769 = vpop.f32.mrf.mxu0
      %v1770 = vadd.f32 0.0, %v1769
      %v1771 = vpop.f32.mrf.mxu0
      %1772 = vmatprep.mubr.bf16.mxu0 0
      %1773 = vmatmul.mubr.bf16.gmra.mxu0 %v798
      %v1774 = vpop.f32.mrf.mxu0
      %v1775 = vadd.f32 0.0, %v1774
      %v1776 = vpop.f32.mrf.mxu0
      %v1777 = vpop.f32.mrf.mxu0
      %v1778 = vadd.f32 0.0, %v1777
      %v1779 = vpop.f32.mrf.mxu0
      %1780 = vmatprep.mubr.bf16.mxu0 0
      %1781 = vmatmul.mubr.bf16.gmra.mxu0 %v801
      %v1782 = vpop.f32.mrf.mxu0
      %v1783 = vadd.f32 0.0, %v1782
      %v1784 = vpop.f32.mrf.mxu0
      %v1785 = vpop.f32.mrf.mxu0
      %v1786 = vadd.f32 0.0, %v1785
      %v1787 = vpop.f32.mrf.mxu0
      %1788 = vmatprep.mubr.bf16.mxu0 0
      %1789 = vmatmul.mubr.bf16.gmra.mxu0 %v804
      %v1790 = vpop.f32.mrf.mxu0
      %v1791 = vadd.f32 0.0, %v1790
      %v1792 = vpop.f32.mrf.mxu0
      %v1793 = vpop.f32.mrf.mxu0
      %v1794 = vadd.f32 0.0, %v1793
      %v1795 = vpop.f32.mrf.mxu0
      %1796 = vmatprep.mubr.bf16.mxu0 0
      %1797 = vmatmul.mubr.bf16.gmra.mxu0 %v807
      %v1798 = vpop.f32.mrf.mxu0
      %v1799 = vadd.f32 0.0, %v1798
      %v1800 = vpop.f32.mrf.mxu0
      %v1801 = vpop.f32.mrf.mxu0
      %v1802 = vadd.f32 0.0, %v1801
      %v1803 = vpop.f32.mrf.mxu0
      %1804 = vmatprep.mubr.bf16.mxu0 0
      %1805 = vmatmul.mubr.bf16.gmra.mxu0 %v810
      %v1806 = vpop.f32.mrf.mxu0
      %v1807 = vadd.f32 0.0, %v1806
      %v1808 = vpop.f32.mrf.mxu0
      %v1809 = vpop.f32.mrf.mxu0
      %v1810 = vadd.f32 0.0, %v1809
      %v1811 = vpop.f32.mrf.mxu0
      %1812 = vmatprep.mubr.bf16.mxu0 0
      %1813 = vmatmul.mubr.bf16.gmra.mxu0 %v813
      %v1814 = vpop.f32.mrf.mxu0
      %v1815 = vadd.f32 0.0, %v1814
      %v1816 = vpop.f32.mrf.mxu0
      %v1817 = vpop.f32.mrf.mxu0
      %v1818 = vadd.f32 0.0, %v1817
      %v1819 = vpop.f32.mrf.mxu0
      %1820 = vmatprep.mubr.bf16.mxu0 0
      %1821 = vmatmul.mubr.bf16.gmra.mxu0 %v816
      %v1822 = vpop.f32.mrf.mxu0
      %v1823 = vadd.f32 0.0, %v1822
      %v1824 = vpop.f32.mrf.mxu0
      %v1825 = vpop.f32.mrf.mxu0
      %v1826 = vadd.f32 0.0, %v1825
      %v1827 = vpop.f32.mrf.mxu0
      %1828 = vmatprep.mubr.bf16.mxu0 0
      %1829 = vmatmul.mubr.bf16.gmra.mxu0 %v819
      %v1830 = vpop.f32.mrf.mxu0
      %v1831 = vadd.f32 0.0, %v1830
      %v1832 = vpop.f32.mrf.mxu0
      %v1833 = vpop.f32.mrf.mxu0
      %v1834 = vadd.f32 0.0, %v1833
      %v1835 = vpop.f32.mrf.mxu0
      %1836 = vmatprep.mubr.bf16.mxu0 0
      %1837 = vmatmul.mubr.bf16.gmra.mxu0 %v822
      %v1838 = vpop.f32.mrf.mxu0
      %v1839 = vadd.f32 0.0, %v1838
      %v1840 = vpop.f32.mrf.mxu0
      %v1841 = vpop.f32.mrf.mxu0
      %v1842 = vadd.f32 0.0, %v1841
      %v1843 = vpop.f32.mrf.mxu0
      %1844 = vmatprep.mubr.bf16.mxu0 0
      %1845 = vmatmul.mubr.bf16.gmra.mxu0 %v825
      %v1846 = vpop.f32.mrf.mxu0
      %v1847 = vadd.f32 0.0, %v1846
      %v1848 = vpop.f32.mrf.mxu0
      %v1849 = vpop.f32.mrf.mxu0
      %v1850 = vadd.f32 0.0, %v1849
      %v1851 = vpop.f32.mrf.mxu0
      %1852 = vmatprep.mubr.bf16.mxu0 0
      %1853 = vmatmul.mubr.bf16.gmra.mxu0 %v828
      %v1854 = vpop.f32.mrf.mxu0
      %v1855 = vadd.f32 0.0, %v1854
      %v1856 = vpop.f32.mrf.mxu0
      %v1857 = vpop.f32.mrf.mxu0
      %v1858 = vadd.f32 0.0, %v1857
      %v1859 = vpop.f32.mrf.mxu0
      %1860 = vmatprep.mubr.bf16.mxu0 0
      %1861 = vmatmul.mubr.bf16.gmra.mxu0 %v831
      %v1862 = vpop.f32.mrf.mxu0
      %v1863 = vadd.f32 0.0, %v1862
      %v1864 = vpop.f32.mrf.mxu0
      %v1865 = vpop.f32.mrf.mxu0
      %v1866 = vadd.f32 0.0, %v1865
      %v1867 = vpop.f32.mrf.mxu0
      %1868 = vmatprep.mubr.bf16.mxu0 0
      %1869 = vmatmul.mubr.bf16.gmra.mxu0 %v834
      %v1870 = vpop.f32.mrf.mxu0
      %v1871 = vadd.f32 0.0, %v1870
      %v1872 = vpop.f32.mrf.mxu0
      %v1873 = vpop.f32.mrf.mxu0
      %v1874 = vadd.f32 0.0, %v1873
      %v1875 = vpop.f32.mrf.mxu0
      %1876 = vmatprep.mubr.bf16.mxu0 0
      %1877 = vmatmul.mubr.bf16.gmra.mxu0 %v837
      %v1878 = vpop.f32.mrf.mxu0
      %v1879 = vadd.f32 0.0, %v1878
      %v1880 = vpop.f32.mrf.mxu0
      %v1881 = vpop.f32.mrf.mxu0
      %v1882 = vadd.f32 0.0, %v1881
      %v1883 = vpop.f32.mrf.mxu0
      %1884 = vmatprep.mubr.bf16.mxu0 0
      %1885 = vmatmul.mubr.bf16.gmra.mxu0 %v840
      %v1886 = vpop.f32.mrf.mxu0
      %v1887 = vadd.f32 0.0, %v1886
      %v1888 = vpop.f32.mrf.mxu0
      %v1889 = vpop.f32.mrf.mxu0
      %v1890 = vadd.f32 0.0, %v1889
      %v1891 = vpop.f32.mrf.mxu0
      %1892 = vmatprep.mubr.bf16.mxu0 0
      %1893 = vmatmul.mubr.bf16.gmra.mxu0 %v843
      %v1894 = vpop.f32.mrf.mxu0
      %v1895 = vadd.f32 0.0, %v1894
      %v1896 = vpop.f32.mrf.mxu0
      %v1897 = vpop.f32.mrf.mxu0
      %v1898 = vadd.f32 0.0, %v1897
      %v1899 = vpop.f32.mrf.mxu0
      %1900 = vmatprep.mubr.bf16.mxu0 0
      %1901 = vmatmul.mubr.bf16.gmra.mxu0 %v846
      %v1902 = vpop.f32.mrf.mxu0
      %v1903 = vadd.f32 0.0, %v1902
      %v1904 = vpop.f32.mrf.mxu0
      %v1905 = vpop.f32.mrf.mxu0
      %v1906 = vadd.f32 0.0, %v1905
      %v1907 = vpop.f32.mrf.mxu0
      %1908 = vmatprep.mubr.bf16.mxu0 0
      %1909 = vmatmul.mubr.bf16.gmra.mxu0 %v849
      %v1910 = vpop.f32.mrf.mxu0
      %v1911 = vadd.f32 0.0, %v1910
      %v1912 = vpop.f32.mrf.mxu0
      %v1913 = vpop.f32.mrf.mxu0
      %v1914 = vadd.f32 0.0, %v1913
      %v1915 = vpop.f32.mrf.mxu0
      %1916 = vmatprep.mubr.bf16.mxu0 0
      %1917 = vmatmul.mubr.bf16.gmra.mxu0 %v852
      %v1918 = vpop.f32.mrf.mxu0
      %v1919 = vadd.f32 0.0, %v1918
      %v1920 = vpop.f32.mrf.mxu0
      %v1921 = vpop.f32.mrf.mxu0
      %v1922 = vadd.f32 0.0, %v1921
      %v1923 = vpop.f32.mrf.mxu0
      %1924 = vmatprep.mubr.bf16.mxu0 0
      %1925 = vmatmul.mubr.bf16.gmra.mxu0 %v855
      %v1926 = vpop.f32.mrf.mxu0
      %v1927 = vadd.f32 0.0, %v1926
      %v1928 = vpop.f32.mrf.mxu0
      %v1929 = vpop.f32.mrf.mxu0
      %v1930 = vpop.f32.mrf.mxu0
      %1931 = vdwg.mxu0
      %1932 = vst [vmem:[#allocation2] sm:$0xff] %v892
      %1933 = vst [vmem:[#allocation2 + $0x8] sm:$0xff] %v894
      %1934 = vst [vmem:[#allocation2 + $0x10] sm:$0xff] %v1173
      %1935 = vst [vmem:[#allocation2 + $0x18] sm:$0xff] %v1175
      %1936 = vst [vmem:[#allocation2 + $0x20] sm:$0xff] %v1454
      %1937 = vst [vmem:[#allocation2 + $0x28] sm:$0xff] %v1456
      %1938 = vst [vmem:[#allocation2 + $0x30] sm:$0xff] %v1735
      %1939 = vst [vmem:[#allocation2 + $0x38] sm:$0xff] %v896
      %1940 = vst [vmem:[#allocation2 + $0x40] sm:$0xff] %v898
      %1941 = vst [vmem:[#allocation2 + $0x48] sm:$0xff] %v1177
      %1942 = vst [vmem:[#allocation2 + $0x50] sm:$0xff] %v1179
      %1943 = vst [vmem:[#allocation2 + $0x58] sm:$0xff] %v1458
      %1944 = vst [vmem:[#allocation2 + $0x60] sm:$0xff] %v1460
      %1945 = vst [vmem:[#allocation2 + $0x68] sm:$0xff] %v1738
      %1946 = vst [vmem:[#allocation2 + $0x70] sm:$0xff] %v902
      %1947 = vst [vmem:[#allocation2 + $0x78] sm:$0xff] %v904
      %1948 = vst [vmem:[#allocation2 + $0x80] sm:$0xff] %v1183
      %1949 = vst [vmem:[#allocation2 + $0x88] sm:$0xff] %v1185
      %1950 = vst [vmem:[#allocation2 + $0x90] sm:$0xff] %v1464
      %1951 = vst [vmem:[#allocation2 + $0x98] sm:$0xff] %v1466
      %1952 = vst [vmem:[#allocation2 + $0xa0] sm:$0xff] %v1743
      %1953 = vst [vmem:[#allocation2 + $0xa8] sm:$0xff] %v906
      %1954 = vst [vmem:[#allocation2 + $0xb0] sm:$0xff] %v908
      %1955 = vst [vmem:[#allocation2 + $0xb8] sm:$0xff] %v1187
      %1956 = vst [vmem:[#allocation2 + $0xc0] sm:$0xff] %v1189
      %1957 = vst [vmem:[#allocation2 + $0xc8] sm:$0xff] %v1468
      %1958 = vst [vmem:[#allocation2 + $0xd0] sm:$0xff] %v1470
      %1959 = vst [vmem:[#allocation2 + $0xd8] sm:$0xff] %v1746
      %1960 = vst [vmem:[#allocation2 + $0xe0] sm:$0xff] %v912
      %1961 = vst [vmem:[#allocation2 + $0xe8] sm:$0xff] %v914
      %1962 = vst [vmem:[#allocation2 + $0xf0] sm:$0xff] %v1193
      %1963 = vst [vmem:[#allocation2 + $0xf8] sm:$0xff] %v1195
      %1964 = vst [vmem:[#allocation2 + $0x100] sm:$0xff] %v1474
      %1965 = vst [vmem:[#allocation2 + $0x108] sm:$0xff] %v1476
      %1966 = vst [vmem:[#allocation2 + $0x110] sm:$0xff] %v1751
      %1967 = vst [vmem:[#allocation2 + $0x118] sm:$0xff] %v916
      %1968 = vst [vmem:[#allocation2 + $0x120] sm:$0xff] %v918
      %1969 = vst [vmem:[#allocation2 + $0x128] sm:$0xff] %v1197
      %1970 = vst [vmem:[#allocation2 + $0x130] sm:$0xff] %v1199
      %1971 = vst [vmem:[#allocation2 + $0x138] sm:$0xff] %v1478
      %1972 = vst [vmem:[#allocation2 + $0x140] sm:$0xff] %v1480
      %1973 = vst [vmem:[#allocation2 + $0x148] sm:$0xff] %v1754
      %1974 = vst [vmem:[#allocation2 + $0x150] sm:$0xff] %v922
      %1975 = vst [vmem:[#allocation2 + $0x158] sm:$0xff] %v924
      %1976 = vst [vmem:[#allocation2 + $0x160] sm:$0xff] %v1203
      %1977 = vst [vmem:[#allocation2 + $0x168] sm:$0xff] %v1205
      %1978 = vst [vmem:[#allocation2 + $0x170] sm:$0xff] %v1484
      %1979 = vst [vmem:[#allocation2 + $0x178] sm:$0xff] %v1486
      %1980 = vst [vmem:[#allocation2 + $0x180] sm:$0xff] %v1759
      %1981 = vst [vmem:[#allocation2 + $0x188] sm:$0xff] %v926
      %1982 = vst [vmem:[#allocation2 + $0x190] sm:$0xff] %v928
      %1983 = vst [vmem:[#allocation2 + $0x198] sm:$0xff] %v1207
      %1984 = vst [vmem:[#allocation2 + $0x1a0] sm:$0xff] %v1209
      %1985 = vst [vmem:[#allocation2 + $0x1a8] sm:$0xff] %v1488
      %1986 = vst [vmem:[#allocation2 + $0x1b0] sm:$0xff] %v1490
      %1987 = vst [vmem:[#allocation2 + $0x1b8] sm:$0xff] %v1762
      %1988 = vst [vmem:[#allocation2 + $0x1c0] sm:$0xff] %v932
      %1989 = vst [vmem:[#allocation2 + $0x1c8] sm:$0xff] %v934
      %1990 = vst [vmem:[#allocation2 + $0x1d0] sm:$0xff] %v1213
      %1991 = vst [vmem:[#allocation2 + $0x1d8] sm:$0xff] %v1215
      %1992 = vst [vmem:[#allocation2 + $0x1e0] sm:$0xff] %v1494
      %1993 = vst [vmem:[#allocation2 + $0x1e8] sm:$0xff] %v1496
      %1994 = vst [vmem:[#allocation2 + $0x1f0] sm:$0xff] %v1767
      %1995 = vst [vmem:[#allocation2 + $0x1f8] sm:$0xff] %v936
      %1996 = vst [vmem:[#allocation2 + $0x200] sm:$0xff] %v938
      %1997 = vst [vmem:[#allocation2 + $0x208] sm:$0xff] %v1217
      %1998 = vst [vmem:[#allocation2 + $0x210] sm:$0xff] %v1219
      %1999 = vst [vmem:[#allocation2 + $0x218] sm:$0xff] %v1498
      %2000 = vst [vmem:[#allocation2 + $0x220] sm:$0xff] %v1500
      %2001 = vst [vmem:[#allocation2 + $0x228] sm:$0xff] %v1770
      %2002 = vst [vmem:[#allocation2 + $0x230] sm:$0xff] %v942
      %2003 = vst [vmem:[#allocation2 + $0x238] sm:$0xff] %v944
      %2004 = vst [vmem:[#allocation2 + $0x240] sm:$0xff] %v1223
      %2005 = vst [vmem:[#allocation2 + $0x248] sm:$0xff] %v1225
      %2006 = vst [vmem:[#allocation2 + $0x250] sm:$0xff] %v1504
      %2007 = vst [vmem:[#allocation2 + $0x258] sm:$0xff] %v1506
      %2008 = vst [vmem:[#allocation2 + $0x260] sm:$0xff] %v1775
      %2009 = vst [vmem:[#allocation2 + $0x268] sm:$0xff] %v946
      %2010 = vst [vmem:[#allocation2 + $0x270] sm:$0xff] %v948
      %2011 = vst [vmem:[#allocation2 + $0x278] sm:$0xff] %v1227
      %2012 = vst [vmem:[#allocation2 + $0x280] sm:$0xff] %v1229
      %2013 = vst [vmem:[#allocation2 + $0x288] sm:$0xff] %v1508
      %2014 = vst [vmem:[#allocation2 + $0x290] sm:$0xff] %v1510
      %2015 = vst [vmem:[#allocation2 + $0x298] sm:$0xff] %v1778
      %2016 = vst [vmem:[#allocation2 + $0x2a0] sm:$0xff] %v952
      %2017 = vst [vmem:[#allocation2 + $0x2a8] sm:$0xff] %v954
      %2018 = vst [vmem:[#allocation2 + $0x2b0] sm:$0xff] %v1233
      %2019 = vst [vmem:[#allocation2 + $0x2b8] sm:$0xff] %v1235
      %2020 = vst [vmem:[#allocation2 + $0x2c0] sm:$0xff] %v1514
      %2021 = vst [vmem:[#allocation2 + $0x2c8] sm:$0xff] %v1516
      %2022 = vst [vmem:[#allocation2 + $0x2d0] sm:$0xff] %v1783
      %2023 = vst [vmem:[#allocation2 + $0x2d8] sm:$0xff] %v956
      %2024 = vst [vmem:[#allocation2 + $0x2e0] sm:$0xff] %v958
      %2025 = vst [vmem:[#allocation2 + $0x2e8] sm:$0xff] %v1237
      %2026 = vst [vmem:[#allocation2 + $0x2f0] sm:$0xff] %v1239
      %2027 = vst [vmem:[#allocation2 + $0x2f8] sm:$0xff] %v1518
      %2028 = vst [vmem:[#allocation2 + $0x300] sm:$0xff] %v1520
      %2029 = vst [vmem:[#allocation2 + $0x308] sm:$0xff] %v1786
      %2030 = vst [vmem:[#allocation2 + $0x310] sm:$0xff] %v962
      %2031 = vst [vmem:[#allocation2 + $0x318] sm:$0xff] %v964
      %2032 = vst [vmem:[#allocation2 + $0x320] sm:$0xff] %v1243
      %2033 = vst [vmem:[#allocation2 + $0x328] sm:$0xff] %v1245
      %2034 = vst [vmem:[#allocation2 + $0x330] sm:$0xff] %v1524
      %2035 = vst [vmem:[#allocation2 + $0x338] sm:$0xff] %v1526
      %2036 = vst [vmem:[#allocation2 + $0x340] sm:$0xff] %v1791
      %2037 = vst [vmem:[#allocation2 + $0x348] sm:$0xff] %v966
      %2038 = vst [vmem:[#allocation2 + $0x350] sm:$0xff] %v968
      %2039 = vst [vmem:[#allocation2 + $0x358] sm:$0xff] %v1247
      %2040 = vst [vmem:[#allocation2 + $0x360] sm:$0xff] %v1249
      %2041 = vst [vmem:[#allocation2 + $0x368] sm:$0xff] %v1528
      %2042 = vst [vmem:[#allocation2 + $0x370] sm:$0xff] %v1530
      %2043 = vst [vmem:[#allocation2 + $0x378] sm:$0xff] %v1794
      %2044 = vst [vmem:[#allocation2 + $0x380] sm:$0xff] %v972
      %2045 = vst [vmem:[#allocation2 + $0x388] sm:$0xff] %v974
      %2046 = vst [vmem:[#allocation2 + $0x390] sm:$0xff] %v1253
      %2047 = vst [vmem:[#allocation2 + $0x398] sm:$0xff] %v1255
      %2048 = vst [vmem:[#allocation2 + $0x3a0] sm:$0xff] %v1534
      %2049 = vst [vmem:[#allocation2 + $0x3a8] sm:$0xff] %v1536
      %2050 = vst [vmem:[#allocation2 + $0x3b0] sm:$0xff] %v1799
      %2051 = vst [vmem:[#allocation2 + $0x3b8] sm:$0xff] %v976
      %2052 = vst [vmem:[#allocation2 + $0x3c0] sm:$0xff] %v978
      %2053 = vst [vmem:[#allocation2 + $0x3c8] sm:$0xff] %v1257
      %2054 = vst [vmem:[#allocation2 + $0x3d0] sm:$0xff] %v1259
      %2055 = vst [vmem:[#allocation2 + $0x3d8] sm:$0xff] %v1538
      %2056 = vst [vmem:[#allocation2 + $0x3e0] sm:$0xff] %v1540
      %2057 = vst [vmem:[#allocation2 + $0x3e8] sm:$0xff] %v1802
      %2058 = vst [vmem:[#allocation2 + $0x3f0] sm:$0xff] %v982
      %2059 = vst [vmem:[#allocation2 + $0x3f8] sm:$0xff] %v984
      %2060 = vst [vmem:[#allocation2 + $0x400] sm:$0xff] %v1263
      %2061 = vst [vmem:[#allocation2 + $0x408] sm:$0xff] %v1265
      %2062 = vst [vmem:[#allocation2 + $0x410] sm:$0xff] %v1544
      %2063 = vst [vmem:[#allocation2 + $0x418] sm:$0xff] %v1546
      %2064 = vst [vmem:[#allocation2 + $0x420] sm:$0xff] %v1807
      %2065 = vst [vmem:[#allocation2 + $0x428] sm:$0xff] %v986
      %2066 = vst [vmem:[#allocation2 + $0x430] sm:$0xff] %v988
      %2067 = vst [vmem:[#allocation2 + $0x438] sm:$0xff] %v1267
      %2068 = vst [vmem:[#allocation2 + $0x440] sm:$0xff] %v1269
      %2069 = vst [vmem:[#allocation2 + $0x448] sm:$0xff] %v1548
      %2070 = vst [vmem:[#allocation2 + $0x450] sm:$0xff] %v1550
      %2071 = vst [vmem:[#allocation2 + $0x458] sm:$0xff] %v1810
      %2072 = vst [vmem:[#allocation2 + $0x460] sm:$0xff] %v992
      %2073 = vst [vmem:[#allocation2 + $0x468] sm:$0xff] %v994
      %2074 = vst [vmem:[#allocation2 + $0x470] sm:$0xff] %v1273
      %2075 = vst [vmem:[#allocation2 + $0x478] sm:$0xff] %v1275
      %2076 = vst [vmem:[#allocation2 + $0x480] sm:$0xff] %v1554
      %2077 = vst [vmem:[#allocation2 + $0x488] sm:$0xff] %v1556
      %2078 = vst [vmem:[#allocation2 + $0x490] sm:$0xff] %v1815
      %2079 = vst [vmem:[#allocation2 + $0x498] sm:$0xff] %v996
      %2080 = vst [vmem:[#allocation2 + $0x4a0] sm:$0xff] %v998
      %2081 = vst [vmem:[#allocation2 + $0x4a8] sm:$0xff] %v1277
      %2082 = vst [vmem:[#allocation2 + $0x4b0] sm:$0xff] %v1279
      %2083 = vst [vmem:[#allocation2 + $0x4b8] sm:$0xff] %v1558
      %2084 = vst [vmem:[#allocation2 + $0x4c0] sm:$0xff] %v1560
      %2085 = vst [vmem:[#allocation2 + $0x4c8] sm:$0xff] %v1818
      %2086 = vst [vmem:[#allocation2 + $0x4d0] sm:$0xff] %v1002
      %2087 = vst [vmem:[#allocation2 + $0x4d8] sm:$0xff] %v1004
      %2088 = vst [vmem:[#allocation2 + $0x4e0] sm:$0xff] %v1283
      %2089 = vst [vmem:[#allocation2 + $0x4e8] sm:$0xff] %v1285
      %2090 = vst [vmem:[#allocation2 + $0x4f0] sm:$0xff] %v1564
      %2091 = vst [vmem:[#allocation2 + $0x4f8] sm:$0xff] %v1566
      %2092 = vst [vmem:[#allocation2 + $0x500] sm:$0xff] %v1823
      %2093 = vst [vmem:[#allocation2 + $0x508] sm:$0xff] %v1006
      %2094 = vst [vmem:[#allocation2 + $0x510] sm:$0xff] %v1008
      %2095 = vst [vmem:[#allocation2 + $0x518] sm:$0xff] %v1287
      %2096 = vst [vmem:[#allocation2 + $0x520] sm:$0xff] %v1289
      %2097 = vst [vmem:[#allocation2 + $0x528] sm:$0xff] %v1568
      %2098 = vst [vmem:[#allocation2 + $0x530] sm:$0xff] %v1570
      %2099 = vst [vmem:[#allocation2 + $0x538] sm:$0xff] %v1826
      %2100 = vst [vmem:[#allocation2 + $0x540] sm:$0xff] %v1012
      %2101 = vst [vmem:[#allocation2 + $0x548] sm:$0xff] %v1014
      %2102 = vst [vmem:[#allocation2 + $0x550] sm:$0xff] %v1293
      %2103 = vst [vmem:[#allocation2 + $0x558] sm:$0xff] %v1295
      %2104 = vst [vmem:[#allocation2 + $0x560] sm:$0xff] %v1574
      %2105 = vst [vmem:[#allocation2 + $0x568] sm:$0xff] %v1576
      %2106 = vst [vmem:[#allocation2 + $0x570] sm:$0xff] %v1831
      %2107 = vst [vmem:[#allocation2 + $0x578] sm:$0xff] %v1016
      %2108 = vst [vmem:[#allocation2 + $0x580] sm:$0xff] %v1018
      %2109 = vst [vmem:[#allocation2 + $0x588] sm:$0xff] %v1297
      %2110 = vst [vmem:[#allocation2 + $0x590] sm:$0xff] %v1299
      %2111 = vst [vmem:[#allocation2 + $0x598] sm:$0xff] %v1578
      %2112 = vst [vmem:[#allocation2 + $0x5a0] sm:$0xff] %v1580
      %2113 = vst [vmem:[#allocation2 + $0x5a8] sm:$0xff] %v1834
      %2114 = vst [vmem:[#allocation2 + $0x5b0] sm:$0xff] %v1022
      %2115 = vst [vmem:[#allocation2 + $0x5b8] sm:$0xff] %v1024
      %2116 = vst [vmem:[#allocation2 + $0x5c0] sm:$0xff] %v1303
      %2117 = vst [vmem:[#allocation2 + $0x5c8] sm:$0xff] %v1305
      %2118 = vst [vmem:[#allocation2 + $0x5d0] sm:$0xff] %v1584
      %2119 = vst [vmem:[#allocation2 + $0x5d8] sm:$0xff] %v1586
      %2120 = vst [vmem:[#allocation2 + $0x5e0] sm:$0xff] %v1839
      %2121 = vst [vmem:[#allocation2 + $0x5e8] sm:$0xff] %v1026
      %2122 = vst [vmem:[#allocation2 + $0x5f0] sm:$0xff] %v1028
      %2123 = vst [vmem:[#allocation2 + $0x5f8] sm:$0xff] %v1307
      %2124 = vst [vmem:[#allocation2 + $0x600] sm:$0xff] %v1309
      %2125 = vst [vmem:[#allocation2 + $0x608] sm:$0xff] %v1588
      %2126 = vst [vmem:[#allocation2 + $0x610] sm:$0xff] %v1590
      %2127 = vst [vmem:[#allocation2 + $0x618] sm:$0xff] %v1842
      %2128 = vst [vmem:[#allocation2 + $0x620] sm:$0xff] %v1032
      %2129 = vst [vmem:[#allocation2 + $0x628] sm:$0xff] %v1034
      %2130 = vst [vmem:[#allocation2 + $0x630] sm:$0xff] %v1313
      %2131 = vst [vmem:[#allocation2 + $0x638] sm:$0xff] %v1315
      %2132 = vst [vmem:[#allocation2 + $0x640] sm:$0xff] %v1594
      %2133 = vst [vmem:[#allocation2 + $0x648] sm:$0xff] %v1596
      %2134 = vst [vmem:[#allocation2 + $0x650] sm:$0xff] %v1847
      %2135 = vst [vmem:[#allocation2 + $0x658] sm:$0xff] %v1036
      %2136 = vst [vmem:[#allocation2 + $0x660] sm:$0xff] %v1038
      %2137 = vst [vmem:[#allocation2 + $0x668] sm:$0xff] %v1317
      %2138 = vst [vmem:[#allocation2 + $0x670] sm:$0xff] %v1319
      %2139 = vst [vmem:[#allocation2 + $0x678] sm:$0xff] %v1598
      %2140 = vst [vmem:[#allocation2 + $0x680] sm:$0xff] %v1600
      %2141 = vst [vmem:[#allocation2 + $0x688] sm:$0xff] %v1850
      %2142 = vst [vmem:[#allocation2 + $0x690] sm:$0xff] %v1042
      %2143 = vst [vmem:[#allocation2 + $0x698] sm:$0xff] %v1044
      %2144 = vst [vmem:[#allocation2 + $0x6a0] sm:$0xff] %v1323
      %2145 = vst [vmem:[#allocation2 + $0x6a8] sm:$0xff] %v1325
      %2146 = vst [vmem:[#allocation2 + $0x6b0] sm:$0xff] %v1604
      %2147 = vst [vmem:[#allocation2 + $0x6b8] sm:$0xff] %v1606
      %2148 = vst [vmem:[#allocation2 + $0x6c0] sm:$0xff] %v1855
      %2149 = vst [vmem:[#allocation2 + $0x6c8] sm:$0xff] %v1046
      %2150 = vst [vmem:[#allocation2 + $0x6d0] sm:$0xff] %v1048
      %2151 = vst [vmem:[#allocation2 + $0x6d8] sm:$0xff] %v1327
      %2152 = vst [vmem:[#allocation2 + $0x6e0] sm:$0xff] %v1329
      %2153 = vst [vmem:[#allocation2 + $0x6e8] sm:$0xff] %v1608
      %2154 = vst [vmem:[#allocation2 + $0x6f0] sm:$0xff] %v1610
      %2155 = vst [vmem:[#allocation2 + $0x6f8] sm:$0xff] %v1858
      %2156 = vst [vmem:[#allocation2 + $0x700] sm:$0xff] %v1052
      %2157 = vst [vmem:[#allocation2 + $0x708] sm:$0xff] %v1054
      %2158 = vst [vmem:[#allocation2 + $0x710] sm:$0xff] %v1333
      %2159 = vst [vmem:[#allocation2 + $0x718] sm:$0xff] %v1335
      %2160 = vst [vmem:[#allocation2 + $0x720] sm:$0xff] %v1614
      %2161 = vst [vmem:[#allocation2 + $0x728] sm:$0xff] %v1616
      %2162 = vst [vmem:[#allocation2 + $0x730] sm:$0xff] %v1863
      %2163 = vst [vmem:[#allocation2 + $0x738] sm:$0xff] %v1056
      %2164 = vst [vmem:[#allocation2 + $0x740] sm:$0xff] %v1058
      %2165 = vst [vmem:[#allocation2 + $0x748] sm:$0xff] %v1337
      %2166 = vst [vmem:[#allocation2 + $0x750] sm:$0xff] %v1339
      %2167 = vst [vmem:[#allocation2 + $0x758] sm:$0xff] %v1618
      %2168 = vst [vmem:[#allocation2 + $0x760] sm:$0xff] %v1620
      %2169 = vst [vmem:[#allocation2 + $0x768] sm:$0xff] %v1866
      %2170 = vst [vmem:[#allocation2 + $0x770] sm:$0xff] %v1062
      %2171 = vst [vmem:[#allocation2 + $0x778] sm:$0xff] %v1064
      %2172 = vst [vmem:[#allocation2 + $0x780] sm:$0xff] %v1343
      %2173 = vst [vmem:[#allocation2 + $0x788] sm:$0xff] %v1345
      %2174 = vst [vmem:[#allocation2 + $0x790] sm:$0xff] %v1624
      %2175 = vst [vmem:[#allocation2 + $0x798] sm:$0xff] %v1626
      %2176 = vst [vmem:[#allocation2 + $0x7a0] sm:$0xff] %v1871
      %2177 = vst [vmem:[#allocation2 + $0x7a8] sm:$0xff] %v1066
      %2178 = vst [vmem:[#allocation2 + $0x7b0] sm:$0xff] %v1068
      %2179 = vst [vmem:[#allocation2 + $0x7b8] sm:$0xff] %v1347
      %2180 = vst [vmem:[#allocation2 + $0x7c0] sm:$0xff] %v1349
      %2181 = vst [vmem:[#allocation2 + $0x7c8] sm:$0xff] %v1628
      %2182 = vst [vmem:[#allocation2 + $0x7d0] sm:$0xff] %v1630
      %2183 = vst [vmem:[#allocation2 + $0x7d8] sm:$0xff] %v1874
      %2184 = vst [vmem:[#allocation2 + $0x7e0] sm:$0xff] %v1072
      %2185 = vst [vmem:[#allocation2 + $0x7e8] sm:$0xff] %v1074
      %2186 = vst [vmem:[#allocation2 + $0x7f0] sm:$0xff] %v1353
      %2187 = vst [vmem:[#allocation2 + $0x7f8] sm:$0xff] %v1355
      %2188 = vst [vmem:[#allocation2 + $0x800] sm:$0xff] %v1634
      %2189 = vst [vmem:[#allocation2 + $0x808] sm:$0xff] %v1636
      %2190 = vst [vmem:[#allocation2 + $0x810] sm:$0xff] %v1879
      %2191 = vst [vmem:[#allocation2 + $0x818] sm:$0xff] %v1076
      %2192 = vst [vmem:[#allocation2 + $0x820] sm:$0xff] %v1078
      %2193 = vst [vmem:[#allocation2 + $0x828] sm:$0xff] %v1357
      %2194 = vst [vmem:[#allocation2 + $0x830] sm:$0xff] %v1359
      %2195 = vst [vmem:[#allocation2 + $0x838] sm:$0xff] %v1638
      %2196 = vst [vmem:[#allocation2 + $0x840] sm:$0xff] %v1640
      %2197 = vst [vmem:[#allocation2 + $0x848] sm:$0xff] %v1882
      %2198 = vst [vmem:[#allocation2 + $0x850] sm:$0xff] %v1082
      %2199 = vst [vmem:[#allocation2 + $0x858] sm:$0xff] %v1084
      %2200 = vst [vmem:[#allocation2 + $0x860] sm:$0xff] %v1363
      %2201 = vst [vmem:[#allocation2 + $0x868] sm:$0xff] %v1365
      %2202 = vst [vmem:[#allocation2 + $0x870] sm:$0xff] %v1644
      %2203 = vst [vmem:[#allocation2 + $0x878] sm:$0xff] %v1646
      %2204 = vst [vmem:[#allocation2 + $0x880] sm:$0xff] %v1887
      %2205 = vst [vmem:[#allocation2 + $0x888] sm:$0xff] %v1086
      %2206 = vst [vmem:[#allocation2 + $0x890] sm:$0xff] %v1088
      %2207 = vst [vmem:[#allocation2 + $0x898] sm:$0xff] %v1367
      %2208 = vst [vmem:[#allocation2 + $0x8a0] sm:$0xff] %v1369
      %2209 = vst [vmem:[#allocation2 + $0x8a8] sm:$0xff] %v1648
      %2210 = vst [vmem:[#allocation2 + $0x8b0] sm:$0xff] %v1650
      %2211 = vst [vmem:[#allocation2 + $0x8b8] sm:$0xff] %v1890
      %2212 = vst [vmem:[#allocation2 + $0x8c0] sm:$0xff] %v1092
      %2213 = vst [vmem:[#allocation2 + $0x8c8] sm:$0xff] %v1094
      %2214 = vst [vmem:[#allocation2 + $0x8d0] sm:$0xff] %v1373
      %2215 = vst [vmem:[#allocation2 + $0x8d8] sm:$0xff] %v1375
      %2216 = vst [vmem:[#allocation2 + $0x8e0] sm:$0xff] %v1654
      %2217 = vst [vmem:[#allocation2 + $0x8e8] sm:$0xff] %v1656
      %2218 = vst [vmem:[#allocation2 + $0x8f0] sm:$0xff] %v1895
      %2219 = vst [vmem:[#allocation2 + $0x8f8] sm:$0xff] %v1096
      %2220 = vst [vmem:[#allocation2 + $0x900] sm:$0xff] %v1098
      %2221 = vst [vmem:[#allocation2 + $0x908] sm:$0xff] %v1377
      %2222 = vst [vmem:[#allocation2 + $0x910] sm:$0xff] %v1379
      %2223 = vst [vmem:[#allocation2 + $0x918] sm:$0xff] %v1658
      %2224 = vst [vmem:[#allocation2 + $0x920] sm:$0xff] %v1660
      %2225 = vst [vmem:[#allocation2 + $0x928] sm:$0xff] %v1898
      %2226 = vst [vmem:[#allocation2 + $0x930] sm:$0xff] %v1102
      %2227 = vst [vmem:[#allocation2 + $0x938] sm:$0xff] %v1104
      %2228 = vst [vmem:[#allocation2 + $0x940] sm:$0xff] %v1383
      %2229 = vst [vmem:[#allocation2 + $0x948] sm:$0xff] %v1385
      %2230 = vst [vmem:[#allocation2 + $0x950] sm:$0xff] %v1664
      %2231 = vst [vmem:[#allocation2 + $0x958] sm:$0xff] %v1666
      %2232 = vst [vmem:[#allocation2 + $0x960] sm:$0xff] %v1903
      %2233 = vst [vmem:[#allocation2 + $0x968] sm:$0xff] %v1106
      %2234 = vst [vmem:[#allocation2 + $0x970] sm:$0xff] %v1108
      %2235 = vst [vmem:[#allocation2 + $0x978] sm:$0xff] %v1387
      %2236 = vst [vmem:[#allocation2 + $0x980] sm:$0xff] %v1389
      %2237 = vst [vmem:[#allocation2 + $0x988] sm:$0xff] %v1668
      %2238 = vst [vmem:[#allocation2 + $0x990] sm:$0xff] %v1670
      %2239 = vst [vmem:[#allocation2 + $0x998] sm:$0xff] %v1906
      %2240 = vst [vmem:[#allocation2 + $0x9a0] sm:$0xff] %v1112
      %2241 = vst [vmem:[#allocation2 + $0x9a8] sm:$0xff] %v1114
      %2242 = vst [vmem:[#allocation2 + $0x9b0] sm:$0xff] %v1393
      %2243 = vst [vmem:[#allocation2 + $0x9b8] sm:$0xff] %v1395
      %2244 = vst [vmem:[#allocation2 + $0x9c0] sm:$0xff] %v1674
      %2245 = vst [vmem:[#allocation2 + $0x9c8] sm:$0xff] %v1676
      %2246 = vst [vmem:[#allocation2 + $0x9d0] sm:$0xff] %v1911
      %2247 = vst [vmem:[#allocation2 + $0x9d8] sm:$0xff] %v1116
      %2248 = vst [vmem:[#allocation2 + $0x9e0] sm:$0xff] %v1118
      %2249 = vst [vmem:[#allocation2 + $0x9e8] sm:$0xff] %v1397
      %2250 = vst [vmem:[#allocation2 + $0x9f0] sm:$0xff] %v1399
      %2251 = vst [vmem:[#allocation2 + $0x9f8] sm:$0xff] %v1678
      %2252 = vst [vmem:[#allocation2 + $0xa00] sm:$0xff] %v1680
      %2253 = vst [vmem:[#allocation2 + $0xa08] sm:$0xff] %v1914
      %2254 = vst [vmem:[#allocation2 + $0xa10] sm:$0xff] %v1122
      %2255 = vst [vmem:[#allocation2 + $0xa18] sm:$0xff] %v1124
      %2256 = vst [vmem:[#allocation2 + $0xa20] sm:$0xff] %v1403
      %2257 = vst [vmem:[#allocation2 + $0xa28] sm:$0xff] %v1405
      %2258 = vst [vmem:[#allocation2 + $0xa30] sm:$0xff] %v1684
      %2259 = vst [vmem:[#allocation2 + $0xa38] sm:$0xff] %v1686
      %2260 = vst [vmem:[#allocation2 + $0xa40] sm:$0xff] %v1919
      %2261 = vst [vmem:[#allocation2 + $0xa48] sm:$0xff] %v1126
      %2262 = vst [vmem:[#allocation2 + $0xa50] sm:$0xff] %v1128
      %2263 = vst [vmem:[#allocation2 + $0xa58] sm:$0xff] %v1407
      %2264 = vst [vmem:[#allocation2 + $0xa60] sm:$0xff] %v1409
      %2265 = vst [vmem:[#allocation2 + $0xa68] sm:$0xff] %v1688
      %2266 = vst [vmem:[#allocation2 + $0xa70] sm:$0xff] %v1690
      %2267 = vst [vmem:[#allocation2 + $0xa78] sm:$0xff] %v1922
      %2268 = vst [vmem:[#allocation2 + $0xa80] sm:$0xff] %v1132
      %2269 = vst [vmem:[#allocation2 + $0xa88] sm:$0xff] %v1134
      %2270 = vst [vmem:[#allocation2 + $0xa90] sm:$0xff] %v1413
      %2271 = vst [vmem:[#allocation2 + $0xa98] sm:$0xff] %v1415
      %2272 = vst [vmem:[#allocation2 + $0xaa0] sm:$0xff] %v1694
      %2273 = vst [vmem:[#allocation2 + $0xaa8] sm:$0xff] %v1696
      %2274 = vst [vmem:[#allocation2 + $0xab0] sm:$0xff] %v1927
      %v2275 = vld [vmem:[#allocation2] sm:$0xff]
      %v2276 = vld [vmem:[#allocation2 + $0x8] sm:$0xff]
      %v2277 = vld [vmem:[#allocation2 + $0x10] sm:$0xff]
      %v2278 = vld [vmem:[#allocation2 + $0x18] sm:$0xff]
      %v2279 = vld [vmem:[#allocation2 + $0x20] sm:$0xff]
      %v2280 = vadd.f32 %v2275, 0.0
      %v2281 = vadd.f32 %v2276, 0.0
      %v2282 = vadd.f32 %v2277, 0.0
      %v2283 = vadd.f32 %v2278, 0.0
      %v2284 = vadd.f32 %v2279, 0.0
      %v2285 = vld [vmem:[#allocation2 + $0x38] sm:$0xff]
      %v2286 = vld [vmem:[#allocation2 + $0x40] sm:$0xff]
      %v2287 = vld [vmem:[#allocation2 + $0x48] sm:$0xff]
      %v2288 = vld [vmem:[#allocation2 + $0x50] sm:$0xff]
      %v2289 = vld [vmem:[#allocation2 + $0x58] sm:$0xff]
      %v2290 = vld [vmem:[#allocation2 + $0x60] sm:$0xff]
      %2297 = vrot.lane.b32.xlu0 %v2285, 127
      %v2298 = vpop.permute.xlu0 %2297
      %2299 = vrot.lane.b32.xlu0 %v2286, 127
      %v2300 = vpop.permute.xlu0 %2299
      %2301 = vrot.lane.b32.xlu0 %v2287, 127
      %v2302 = vpop.permute.xlu0 %2301
      %2303 = vrot.lane.b32.xlu0 %v2288, 127
      %v2304 = vpop.permute.xlu0 %2303
      %2305 = vrot.lane.b32.xlu0 %v2289, 127
      %v2306 = vpop.permute.xlu0 %2305
      %2307 = vrot.lane.b32.xlu0 %v2290, 127
      %v2308 = vpop.permute.xlu0 %2307
      %vm2309 = vcmask 1039360
      %v2310 = vsel %vm2309, %v2298, %v2300
      %v2311 = vsel %vm2309, %v2300, %v2302
      %v2312 = vsel %vm2309, %v2302, %v2304
      %v2313 = vsel %vm2309, %v2304, %v2306
      %v2314 = vsel %vm2309, %v2306, %v2308
      %v2320 = vadd.f32 %v2280, %v2310
      %v2321 = vadd.f32 %v2281, %v2311
      %v2322 = vadd.f32 %v2282, %v2312
      %v2323 = vadd.f32 %v2283, %v2313
      %v2324 = vadd.f32 %v2284, %v2314
      %v2325 = vld [vmem:[#allocation2 + $0x70] sm:$0xff]
      %v2326 = vld [vmem:[#allocation2 + $0x78] sm:$0xff]
      %v2327 = vld [vmem:[#allocation2 + $0x80] sm:$0xff]
      %v2328 = vld [vmem:[#allocation2 + $0x88] sm:$0xff]
      %v2329 = vld [vmem:[#allocation2 + $0x90] sm:$0xff]
      %v2330 = vld [vmem:[#allocation2 + $0x98] sm:$0xff]
      %2337 = vrot.lane.b32.xlu0 %v2325, 126
      %v2338 = vpop.permute.xlu0 %2337
      %2339 = vrot.lane.b32.xlu0 %v2326, 126
      %v2340 = vpop.permute.xlu0 %2339
      %2341 = vrot.lane.b32.xlu0 %v2327, 126
      %v2342 = vpop.permute.xlu0 %2341
      %2343 = vrot.lane.b32.xlu0 %v2328, 126
      %v2344 = vpop.permute.xlu0 %2343
      %2345 = vrot.lane.b32.xlu0 %v2329, 126
      %v2346 = vpop.permute.xlu0 %2345
      %2347 = vrot.lane.b32.xlu0 %v2330, 126
      %v2348 = vpop.permute.xlu0 %2347
      %vm2349 = vcmask 1031168
      %v2350 = vsel %vm2349, %v2338, %v2340
      %v2351 = vsel %vm2349, %v2340, %v2342
      %v2352 = vsel %vm2349, %v2342, %v2344
      %v2353 = vsel %vm2349, %v2344, %v2346
      %v2354 = vsel %vm2349, %v2346, %v2348
      %v2360 = vadd.f32 %v2320, %v2350
      %v2361 = vadd.f32 %v2321, %v2351
      %v2362 = vadd.f32 %v2322, %v2352
      %v2363 = vadd.f32 %v2323, %v2353
      %v2364 = vadd.f32 %v2324, %v2354
      %v2365 = vld [vmem:[#allocation2 + $0xa8] sm:$0xff]
      %v2366 = vld [vmem:[#allocation2 + $0xb0] sm:$0xff]
      %v2367 = vld [vmem:[#allocation2 + $0xb8] sm:$0xff]
      %v2368 = vld [vmem:[#allocation2 + $0xc0] sm:$0xff]
      %v2369 = vld [vmem:[#allocation2 + $0xc8] sm:$0xff]
      %v2370 = vld [vmem:[#allocation2 + $0xd0] sm:$0xff]
      %2377 = vrot.lane.b32.xlu0 %v2365, 125
      %v2378 = vpop.permute.xlu0 %2377
      %2379 = vrot.lane.b32.xlu0 %v2366, 125
      %v2380 = vpop.permute.xlu0 %2379
      %2381 = vrot.lane.b32.xlu0 %v2367, 125
      %v2382 = vpop.permute.xlu0 %2381
      %2383 = vrot.lane.b32.xlu0 %v2368, 125
      %v2384 = vpop.permute.xlu0 %2383
      %2385 = vrot.lane.b32.xlu0 %v2369, 125
      %v2386 = vpop.permute.xlu0 %2385
      %2387 = vrot.lane.b32.xlu0 %v2370, 125
      %v2388 = vpop.permute.xlu0 %2387
      %vm2389 = vcmask 1022976
      %v2390 = vsel %vm2389, %v2378, %v2380
      %v2391 = vsel %vm2389, %v2380, %v2382
      %v2392 = vsel %vm2389, %v2382, %v2384
      %v2393 = vsel %vm2389, %v2384, %v2386
      %v2394 = vsel %vm2389, %v2386, %v2388
      %v2400 = vadd.f32 %v2360, %v2390
      %v2401 = vadd.f32 %v2361, %v2391
      %v2402 = vadd.f32 %v2362, %v2392
      %v2403 = vadd.f32 %v2363, %v2393
      %v2404 = vadd.f32 %v2364, %v2394
      %v2405 = vld [vmem:[#allocation2 + $0xe0] sm:$0xff]
      %v2406 = vld [vmem:[#allocation2 + $0xe8] sm:$0xff]
      %v2407 = vld [vmem:[#allocation2 + $0xf0] sm:$0xff]
      %v2408 = vld [vmem:[#allocation2 + $0xf8] sm:$0xff]
      %v2409 = vld [vmem:[#allocation2 + $0x100] sm:$0xff]
      %v2410 = vld [vmem:[#allocation2 + $0x108] sm:$0xff]
      %2417 = vrot.lane.b32.xlu0 %v2405, 124
      %v2418 = vpop.permute.xlu0 %2417
      %2419 = vrot.lane.b32.xlu0 %v2406, 124
      %v2420 = vpop.permute.xlu0 %2419
      %2421 = vrot.lane.b32.xlu0 %v2407, 124
      %v2422 = vpop.permute.xlu0 %2421
      %2423 = vrot.lane.b32.xlu0 %v2408, 124
      %v2424 = vpop.permute.xlu0 %2423
      %2425 = vrot.lane.b32.xlu0 %v2409, 124
      %v2426 = vpop.permute.xlu0 %2425
      %2427 = vrot.lane.b32.xlu0 %v2410, 124
      %v2428 = vpop.permute.xlu0 %2427
      %vm2429 = vcmask 1014784
      %v2430 = vsel %vm2429, %v2418, %v2420
      %v2431 = vsel %vm2429, %v2420, %v2422
      %v2432 = vsel %vm2429, %v2422, %v2424
      %v2433 = vsel %vm2429, %v2424, %v2426
      %v2434 = vsel %vm2429, %v2426, %v2428
      %v2440 = vadd.f32 %v2400, %v2430
      %v2441 = vadd.f32 %v2401, %v2431
      %v2442 = vadd.f32 %v2402, %v2432
      %v2443 = vadd.f32 %v2403, %v2433
      %v2444 = vadd.f32 %v2404, %v2434
      %v2445 = vld [vmem:[#allocation2 + $0x118] sm:$0xff]
      %v2446 = vld [vmem:[#allocation2 + $0x120] sm:$0xff]
      %v2447 = vld [vmem:[#allocation2 + $0x128] sm:$0xff]
      %v2448 = vld [vmem:[#allocation2 + $0x130] sm:$0xff]
      %v2449 = vld [vmem:[#allocation2 + $0x138] sm:$0xff]
      %v2450 = vld [vmem:[#allocation2 + $0x140] sm:$0xff]
      %2457 = vrot.lane.b32.xlu0 %v2445, 123
      %v2458 = vpop.permute.xlu0 %2457
      %2459 = vrot.lane.b32.xlu0 %v2446, 123
      %v2460 = vpop.permute.xlu0 %2459
      %2461 = vrot.lane.b32.xlu0 %v2447, 123
      %v2462 = vpop.permute.xlu0 %2461
      %2463 = vrot.lane.b32.xlu0 %v2448, 123
      %v2464 = vpop.permute.xlu0 %2463
      %2465 = vrot.lane.b32.xlu0 %v2449, 123
      %v2466 = vpop.permute.xlu0 %2465
      %2467 = vrot.lane.b32.xlu0 %v2450, 123
      %v2468 = vpop.permute.xlu0 %2467
      %vm2469 = vcmask 1006592
      %v2470 = vsel %vm2469, %v2458, %v2460
      %v2471 = vsel %vm2469, %v2460, %v2462
      %v2472 = vsel %vm2469, %v2462, %v2464
      %v2473 = vsel %vm2469, %v2464, %v2466
      %v2474 = vsel %vm2469, %v2466, %v2468
      %v2480 = vadd.f32 %v2440, %v2470
      %v2481 = vadd.f32 %v2441, %v2471
      %v2482 = vadd.f32 %v2442, %v2472
      %v2483 = vadd.f32 %v2443, %v2473
      %v2484 = vadd.f32 %v2444, %v2474
      %v2485 = vld [vmem:[#allocation2 + $0x150] sm:$0xff]
      %v2486 = vld [vmem:[#allocation2 + $0x158] sm:$0xff]
      %v2487 = vld [vmem:[#allocation2 + $0x160] sm:$0xff]
      %v2488 = vld [vmem:[#allocation2 + $0x168] sm:$0xff]
      %v2489 = vld [vmem:[#allocation2 + $0x170] sm:$0xff]
      %v2490 = vld [vmem:[#allocation2 + $0x178] sm:$0xff]
      %2497 = vrot.lane.b32.xlu0 %v2485, 122
      %v2498 = vpop.permute.xlu0 %2497
      %2499 = vrot.lane.b32.xlu0 %v2486, 122
      %v2500 = vpop.permute.xlu0 %2499
      %2501 = vrot.lane.b32.xlu0 %v2487, 122
      %v2502 = vpop.permute.xlu0 %2501
      %2503 = vrot.lane.b32.xlu0 %v2488, 122
      %v2504 = vpop.permute.xlu0 %2503
      %2505 = vrot.lane.b32.xlu0 %v2489, 122
      %v2506 = vpop.permute.xlu0 %2505
      %2507 = vrot.lane.b32.xlu0 %v2490, 122
      %v2508 = vpop.permute.xlu0 %2507
      %vm2509 = vcmask 998400
      %v2510 = vsel %vm2509, %v2498, %v2500
      %v2511 = vsel %vm2509, %v2500, %v2502
      %v2512 = vsel %vm2509, %v2502, %v2504
      %v2513 = vsel %vm2509, %v2504, %v2506
      %v2514 = vsel %vm2509, %v2506, %v2508
      %v2520 = vadd.f32 %v2480, %v2510
      %v2521 = vadd.f32 %v2481, %v2511
      %v2522 = vadd.f32 %v2482, %v2512
      %v2523 = vadd.f32 %v2483, %v2513
      %v2524 = vadd.f32 %v2484, %v2514
      %v2525 = vld [vmem:[#allocation2 + $0x188] sm:$0xff]
      %v2526 = vld [vmem:[#allocation2 + $0x190] sm:$0xff]
      %v2527 = vld [vmem:[#allocation2 + $0x198] sm:$0xff]
      %v2528 = vld [vmem:[#allocation2 + $0x1a0] sm:$0xff]
      %v2529 = vld [vmem:[#allocation2 + $0x1a8] sm:$0xff]
      %v2530 = vld [vmem:[#allocation2 + $0x1b0] sm:$0xff]
      %2537 = vrot.lane.b32.xlu0 %v2525, 88
      %v2538 = vpop.permute.xlu0 %2537
      %2539 = vrot.lane.b32.xlu0 %v2526, 88
      %v2540 = vpop.permute.xlu0 %2539
      %2541 = vrot.lane.b32.xlu0 %v2527, 88
      %v2542 = vpop.permute.xlu0 %2541
      %2543 = vrot.lane.b32.xlu0 %v2528, 88
      %v2544 = vpop.permute.xlu0 %2543
      %2545 = vrot.lane.b32.xlu0 %v2529, 88
      %v2546 = vpop.permute.xlu0 %2545
      %2547 = vrot.lane.b32.xlu0 %v2530, 88
      %v2548 = vpop.permute.xlu0 %2547
      %vm2549 = vcmask 719872
      %v2550 = vsel %vm2549, %v2538, %v2540
      %v2551 = vsel %vm2549, %v2540, %v2542
      %v2552 = vsel %vm2549, %v2542, %v2544
      %v2553 = vsel %vm2549, %v2544, %v2546
      %v2554 = vsel %vm2549, %v2546, %v2548
      %v2560 = vadd.f32 %v2520, %v2550
      %v2561 = vadd.f32 %v2521, %v2551
      %v2562 = vadd.f32 %v2522, %v2552
      %v2563 = vadd.f32 %v2523, %v2553
      %v2564 = vadd.f32 %v2524, %v2554
      %v2565 = vld [vmem:[#allocation2 + $0x1c0] sm:$0xff]
      %v2566 = vld [vmem:[#allocation2 + $0x1c8] sm:$0xff]
      %v2567 = vld [vmem:[#allocation2 + $0x1d0] sm:$0xff]
      %v2568 = vld [vmem:[#allocation2 + $0x1d8] sm:$0xff]
      %v2569 = vld [vmem:[#allocation2 + $0x1e0] sm:$0xff]
      %v2570 = vld [vmem:[#allocation2 + $0x1e8] sm:$0xff]
      %2577 = vrot.lane.b32.xlu0 %v2565, 87
      %v2578 = vpop.permute.xlu0 %2577
      %2579 = vrot.lane.b32.xlu0 %v2566, 87
      %v2580 = vpop.permute.xlu0 %2579
      %2581 = vrot.lane.b32.xlu0 %v2567, 87
      %v2582 = vpop.permute.xlu0 %2581
      %2583 = vrot.lane.b32.xlu0 %v2568, 87
      %v2584 = vpop.permute.xlu0 %2583
      %2585 = vrot.lane.b32.xlu0 %v2569, 87
      %v2586 = vpop.permute.xlu0 %2585
      %2587 = vrot.lane.b32.xlu0 %v2570, 87
      %v2588 = vpop.permute.xlu0 %2587
      %vm2589 = vcmask 711680
      %v2590 = vsel %vm2589, %v2578, %v2580
      %v2591 = vsel %vm2589, %v2580, %v2582
      %v2592 = vsel %vm2589, %v2582, %v2584
      %v2593 = vsel %vm2589, %v2584, %v2586
      %v2594 = vsel %vm2589, %v2586, %v2588
      %v2600 = vadd.f32 %v2560, %v2590
      %v2601 = vadd.f32 %v2561, %v2591
      %v2602 = vadd.f32 %v2562, %v2592
      %v2603 = vadd.f32 %v2563, %v2593
      %v2604 = vadd.f32 %v2564, %v2594
      %v2605 = vld [vmem:[#allocation2 + $0x1f8] sm:$0xff]
      %v2606 = vld [vmem:[#allocation2 + $0x200] sm:$0xff]
      %v2607 = vld [vmem:[#allocation2 + $0x208] sm:$0xff]
      %v2608 = vld [vmem:[#allocation2 + $0x210] sm:$0xff]
      %v2609 = vld [vmem:[#allocation2 + $0x218] sm:$0xff]
      %v2610 = vld [vmem:[#allocation2 + $0x220] sm:$0xff]
      %2617 = vrot.lane.b32.xlu0 %v2605, 86
      %v2618 = vpop.permute.xlu0 %2617
      %2619 = vrot.lane.b32.xlu0 %v2606, 86
      %v2620 = vpop.permute.xlu0 %2619
      %2621 = vrot.lane.b32.xlu0 %v2607, 86
      %v2622 = vpop.permute.xlu0 %2621
      %2623 = vrot.lane.b32.xlu0 %v2608, 86
      %v2624 = vpop.permute.xlu0 %2623
      %2625 = vrot.lane.b32.xlu0 %v2609, 86
      %v2626 = vpop.permute.xlu0 %2625
      %2627 = vrot.lane.b32.xlu0 %v2610, 86
      %v2628 = vpop.permute.xlu0 %2627
      %vm2629 = vcmask 703488
      %v2630 = vsel %vm2629, %v2618, %v2620
      %v2631 = vsel %vm2629, %v2620, %v2622
      %v2632 = vsel %vm2629, %v2622, %v2624
      %v2633 = vsel %vm2629, %v2624, %v2626
      %v2634 = vsel %vm2629, %v2626, %v2628
      %v2640 = vadd.f32 %v2600, %v2630
      %v2641 = vadd.f32 %v2601, %v2631
      %v2642 = vadd.f32 %v2602, %v2632
      %v2643 = vadd.f32 %v2603, %v2633
      %v2644 = vadd.f32 %v2604, %v2634
      %v2645 = vld [vmem:[#allocation2 + $0x230] sm:$0xff]
      %v2646 = vld [vmem:[#allocation2 + $0x238] sm:$0xff]
      %v2647 = vld [vmem:[#allocation2 + $0x240] sm:$0xff]
      %v2648 = vld [vmem:[#allocation2 + $0x248] sm:$0xff]
      %v2649 = vld [vmem:[#allocation2 + $0x250] sm:$0xff]
      %v2650 = vld [vmem:[#allocation2 + $0x258] sm:$0xff]
      %2657 = vrot.lane.b32.xlu0 %v2645, 85
      %v2658 = vpop.permute.xlu0 %2657
      %2659 = vrot.lane.b32.xlu0 %v2646, 85
      %v2660 = vpop.permute.xlu0 %2659
      %2661 = vrot.lane.b32.xlu0 %v2647, 85
      %v2662 = vpop.permute.xlu0 %2661
      %2663 = vrot.lane.b32.xlu0 %v2648, 85
      %v2664 = vpop.permute.xlu0 %2663
      %2665 = vrot.lane.b32.xlu0 %v2649, 85
      %v2666 = vpop.permute.xlu0 %2665
      %2667 = vrot.lane.b32.xlu0 %v2650, 85
      %v2668 = vpop.permute.xlu0 %2667
      %vm2669 = vcmask 695296
      %v2670 = vsel %vm2669, %v2658, %v2660
      %v2671 = vsel %vm2669, %v2660, %v2662
      %v2672 = vsel %vm2669, %v2662, %v2664
      %v2673 = vsel %vm2669, %v2664, %v2666
      %v2674 = vsel %vm2669, %v2666, %v2668
      %v2680 = vadd.f32 %v2640, %v2670
      %v2681 = vadd.f32 %v2641, %v2671
      %v2682 = vadd.f32 %v2642, %v2672
      %v2683 = vadd.f32 %v2643, %v2673
      %v2684 = vadd.f32 %v2644, %v2674
      %v2685 = vld [vmem:[#allocation2 + $0x268] sm:$0xff]
      %v2686 = vld [vmem:[#allocation2 + $0x270] sm:$0xff]
      %v2687 = vld [vmem:[#allocation2 + $0x278] sm:$0xff]
      %v2688 = vld [vmem:[#allocation2 + $0x280] sm:$0xff]
      %v2689 = vld [vmem:[#allocation2 + $0x288] sm:$0xff]
      %v2690 = vld [vmem:[#allocation2 + $0x290] sm:$0xff]
      %2697 = vrot.lane.b32.xlu0 %v2685, 84
      %v2698 = vpop.permute.xlu0 %2697
      %2699 = vrot.lane.b32.xlu0 %v2686, 84
      %v2700 = vpop.permute.xlu0 %2699
      %2701 = vrot.lane.b32.xlu0 %v2687, 84
      %v2702 = vpop.permute.xlu0 %2701
      %2703 = vrot.lane.b32.xlu0 %v2688, 84
      %v2704 = vpop.permute.xlu0 %2703
      %2705 = vrot.lane.b32.xlu0 %v2689, 84
      %v2706 = vpop.permute.xlu0 %2705
      %2707 = vrot.lane.b32.xlu0 %v2690, 84
      %v2708 = vpop.permute.xlu0 %2707
      %vm2709 = vcmask 687104
      %v2710 = vsel %vm2709, %v2698, %v2700
      %v2711 = vsel %vm2709, %v2700, %v2702
      %v2712 = vsel %vm2709, %v2702, %v2704
      %v2713 = vsel %vm2709, %v2704, %v2706
      %v2714 = vsel %vm2709, %v2706, %v2708
      %v2720 = vadd.f32 %v2680, %v2710
      %v2721 = vadd.f32 %v2681, %v2711
      %v2722 = vadd.f32 %v2682, %v2712
      %v2723 = vadd.f32 %v2683, %v2713
      %v2724 = vadd.f32 %v2684, %v2714
      %v2725 = vld [vmem:[#allocation2 + $0x2a0] sm:$0xff]
      %v2726 = vld [vmem:[#allocation2 + $0x2a8] sm:$0xff]
      %v2727 = vld [vmem:[#allocation2 + $0x2b0] sm:$0xff]
      %v2728 = vld [vmem:[#allocation2 + $0x2b8] sm:$0xff]
      %v2729 = vld [vmem:[#allocation2 + $0x2c0] sm:$0xff]
      %v2730 = vld [vmem:[#allocation2 + $0x2c8] sm:$0xff]
      %2737 = vrot.lane.b32.xlu0 %v2725, 83
      %v2738 = vpop.permute.xlu0 %2737
      %2739 = vrot.lane.b32.xlu0 %v2726, 83
      %v2740 = vpop.permute.xlu0 %2739
      %2741 = vrot.lane.b32.xlu0 %v2727, 83
      %v2742 = vpop.permute.xlu0 %2741
      %2743 = vrot.lane.b32.xlu0 %v2728, 83
      %v2744 = vpop.permute.xlu0 %2743
      %2745 = vrot.lane.b32.xlu0 %v2729, 83
      %v2746 = vpop.permute.xlu0 %2745
      %2747 = vrot.lane.b32.xlu0 %v2730, 83
      %v2748 = vpop.permute.xlu0 %2747
      %vm2749 = vcmask 678912
      %v2750 = vsel %vm2749, %v2738, %v2740
      %v2751 = vsel %vm2749, %v2740, %v2742
      %v2752 = vsel %vm2749, %v2742, %v2744
      %v2753 = vsel %vm2749, %v2744, %v2746
      %v2754 = vsel %vm2749, %v2746, %v2748
      %v2760 = vadd.f32 %v2720, %v2750
      %v2761 = vadd.f32 %v2721, %v2751
      %v2762 = vadd.f32 %v2722, %v2752
      %v2763 = vadd.f32 %v2723, %v2753
      %v2764 = vadd.f32 %v2724, %v2754
      %v2765 = vld [vmem:[#allocation2 + $0x2d8] sm:$0xff]
      %v2766 = vld [vmem:[#allocation2 + $0x2e0] sm:$0xff]
      %v2767 = vld [vmem:[#allocation2 + $0x2e8] sm:$0xff]
      %v2768 = vld [vmem:[#allocation2 + $0x2f0] sm:$0xff]
      %v2769 = vld [vmem:[#allocation2 + $0x2f8] sm:$0xff]
      %v2770 = vld [vmem:[#allocation2 + $0x300] sm:$0xff]
      %2777 = vrot.lane.b32.xlu0 %v2765, 82
      %v2778 = vpop.permute.xlu0 %2777
      %2779 = vrot.lane.b32.xlu0 %v2766, 82
      %v2780 = vpop.permute.xlu0 %2779
      %2781 = vrot.lane.b32.xlu0 %v2767, 82
      %v2782 = vpop.permute.xlu0 %2781
      %2783 = vrot.lane.b32.xlu0 %v2768, 82
      %v2784 = vpop.permute.xlu0 %2783
      %2785 = vrot.lane.b32.xlu0 %v2769, 82
      %v2786 = vpop.permute.xlu0 %2785
      %2787 = vrot.lane.b32.xlu0 %v2770, 82
      %v2788 = vpop.permute.xlu0 %2787
      %vm2789 = vcmask 670720
      %v2790 = vsel %vm2789, %v2778, %v2780
      %v2791 = vsel %vm2789, %v2780, %v2782
      %v2792 = vsel %vm2789, %v2782, %v2784
      %v2793 = vsel %vm2789, %v2784, %v2786
      %v2794 = vsel %vm2789, %v2786, %v2788
      %v2800 = vadd.f32 %v2760, %v2790
      %v2801 = vadd.f32 %v2761, %v2791
      %v2802 = vadd.f32 %v2762, %v2792
      %v2803 = vadd.f32 %v2763, %v2793
      %v2804 = vadd.f32 %v2764, %v2794
      %v2805 = vld [vmem:[#allocation2 + $0x310] sm:$0xff]
      %v2806 = vld [vmem:[#allocation2 + $0x318] sm:$0xff]
      %v2807 = vld [vmem:[#allocation2 + $0x320] sm:$0xff]
      %v2808 = vld [vmem:[#allocation2 + $0x328] sm:$0xff]
      %v2809 = vld [vmem:[#allocation2 + $0x330] sm:$0xff]
      %v2810 = vld [vmem:[#allocation2 + $0x338] sm:$0xff]
      %2817 = vrot.lane.b32.xlu0 %v2805, 48
      %v2818 = vpop.permute.xlu0 %2817
      %2819 = vrot.lane.b32.xlu0 %v2806, 48
      %v2820 = vpop.permute.xlu0 %2819
      %2821 = vrot.lane.b32.xlu0 %v2807, 48
      %v2822 = vpop.permute.xlu0 %2821
      %2823 = vrot.lane.b32.xlu0 %v2808, 48
      %v2824 = vpop.permute.xlu0 %2823
      %2825 = vrot.lane.b32.xlu0 %v2809, 48
      %v2826 = vpop.permute.xlu0 %2825
      %2827 = vrot.lane.b32.xlu0 %v2810, 48
      %v2828 = vpop.permute.xlu0 %2827
      %vm2829 = vcmask 392192
      %v2830 = vsel %vm2829, %v2818, %v2820
      %v2831 = vsel %vm2829, %v2820, %v2822
      %v2832 = vsel %vm2829, %v2822, %v2824
      %v2833 = vsel %vm2829, %v2824, %v2826
      %v2834 = vsel %vm2829, %v2826, %v2828
      %v2840 = vadd.f32 %v2800, %v2830
      %v2841 = vadd.f32 %v2801, %v2831
      %v2842 = vadd.f32 %v2802, %v2832
      %v2843 = vadd.f32 %v2803, %v2833
      %v2844 = vadd.f32 %v2804, %v2834
      %v2845 = vld [vmem:[#allocation2 + $0x348] sm:$0xff]
      %v2846 = vld [vmem:[#allocation2 + $0x350] sm:$0xff]
      %v2847 = vld [vmem:[#allocation2 + $0x358] sm:$0xff]
      %v2848 = vld [vmem:[#allocation2 + $0x360] sm:$0xff]
      %v2849 = vld [vmem:[#allocation2 + $0x368] sm:$0xff]
      %v2850 = vld [vmem:[#allocation2 + $0x370] sm:$0xff]
      %2857 = vrot.lane.b32.xlu0 %v2845, 47
      %v2858 = vpop.permute.xlu0 %2857
      %2859 = vrot.lane.b32.xlu0 %v2846, 47
      %v2860 = vpop.permute.xlu0 %2859
      %2861 = vrot.lane.b32.xlu0 %v2847, 47
      %v2862 = vpop.permute.xlu0 %2861
      %2863 = vrot.lane.b32.xlu0 %v2848, 47
      %v2864 = vpop.permute.xlu0 %2863
      %2865 = vrot.lane.b32.xlu0 %v2849, 47
      %v2866 = vpop.permute.xlu0 %2865
      %2867 = vrot.lane.b32.xlu0 %v2850, 47
      %v2868 = vpop.permute.xlu0 %2867
      %vm2869 = vcmask 384000
      %v2870 = vsel %vm2869, %v2858, %v2860
      %v2871 = vsel %vm2869, %v2860, %v2862
      %v2872 = vsel %vm2869, %v2862, %v2864
      %v2873 = vsel %vm2869, %v2864, %v2866
      %v2874 = vsel %vm2869, %v2866, %v2868
      %v2880 = vadd.f32 %v2840, %v2870
      %v2881 = vadd.f32 %v2841, %v2871
      %v2882 = vadd.f32 %v2842, %v2872
      %v2883 = vadd.f32 %v2843, %v2873
      %v2884 = vadd.f32 %v2844, %v2874
      %v2885 = vld [vmem:[#allocation2 + $0x380] sm:$0xff]
      %v2886 = vld [vmem:[#allocation2 + $0x388] sm:$0xff]
      %v2887 = vld [vmem:[#allocation2 + $0x390] sm:$0xff]
      %v2888 = vld [vmem:[#allocation2 + $0x398] sm:$0xff]
      %v2889 = vld [vmem:[#allocation2 + $0x3a0] sm:$0xff]
      %v2890 = vld [vmem:[#allocation2 + $0x3a8] sm:$0xff]
      %2897 = vrot.lane.b32.xlu0 %v2885, 46
      %v2898 = vpop.permute.xlu0 %2897
      %2899 = vrot.lane.b32.xlu0 %v2886, 46
      %v2900 = vpop.permute.xlu0 %2899
      %2901 = vrot.lane.b32.xlu0 %v2887, 46
      %v2902 = vpop.permute.xlu0 %2901
      %2903 = vrot.lane.b32.xlu0 %v2888, 46
      %v2904 = vpop.permute.xlu0 %2903
      %2905 = vrot.lane.b32.xlu0 %v2889, 46
      %v2906 = vpop.permute.xlu0 %2905
      %2907 = vrot.lane.b32.xlu0 %v2890, 46
      %v2908 = vpop.permute.xlu0 %2907
      %vm2909 = vcmask 375808
      %v2910 = vsel %vm2909, %v2898, %v2900
      %v2911 = vsel %vm2909, %v2900, %v2902
      %v2912 = vsel %vm2909, %v2902, %v2904
      %v2913 = vsel %vm2909, %v2904, %v2906
      %v2914 = vsel %vm2909, %v2906, %v2908
      %v2920 = vadd.f32 %v2880, %v2910
      %v2921 = vadd.f32 %v2881, %v2911
      %v2922 = vadd.f32 %v2882, %v2912
      %v2923 = vadd.f32 %v2883, %v2913
      %v2924 = vadd.f32 %v2884, %v2914
      %v2925 = vld [vmem:[#allocation2 + $0x3b8] sm:$0xff]
      %v2926 = vld [vmem:[#allocation2 + $0x3c0] sm:$0xff]
      %v2927 = vld [vmem:[#allocation2 + $0x3c8] sm:$0xff]
      %v2928 = vld [vmem:[#allocation2 + $0x3d0] sm:$0xff]
      %v2929 = vld [vmem:[#allocation2 + $0x3d8] sm:$0xff]
      %v2930 = vld [vmem:[#allocation2 + $0x3e0] sm:$0xff]
      %2937 = vrot.lane.b32.xlu0 %v2925, 45
      %v2938 = vpop.permute.xlu0 %2937
      %2939 = vrot.lane.b32.xlu0 %v2926, 45
      %v2940 = vpop.permute.xlu0 %2939
      %2941 = vrot.lane.b32.xlu0 %v2927, 45
      %v2942 = vpop.permute.xlu0 %2941
      %2943 = vrot.lane.b32.xlu0 %v2928, 45
      %v2944 = vpop.permute.xlu0 %2943
      %2945 = vrot.lane.b32.xlu0 %v2929, 45
      %v2946 = vpop.permute.xlu0 %2945
      %2947 = vrot.lane.b32.xlu0 %v2930, 45
      %v2948 = vpop.permute.xlu0 %2947
      %vm2949 = vcmask 367616
      %v2950 = vsel %vm2949, %v2938, %v2940
      %v2951 = vsel %vm2949, %v2940, %v2942
      %v2952 = vsel %vm2949, %v2942, %v2944
      %v2953 = vsel %vm2949, %v2944, %v2946
      %v2954 = vsel %vm2949, %v2946, %v2948
      %v2960 = vadd.f32 %v2920, %v2950
      %v2961 = vadd.f32 %v2921, %v2951
      %v2962 = vadd.f32 %v2922, %v2952
      %v2963 = vadd.f32 %v2923, %v2953
      %v2964 = vadd.f32 %v2924, %v2954
      %v2965 = vld [vmem:[#allocation2 + $0x3f0] sm:$0xff]
      %v2966 = vld [vmem:[#allocation2 + $0x3f8] sm:$0xff]
      %v2967 = vld [vmem:[#allocation2 + $0x400] sm:$0xff]
      %v2968 = vld [vmem:[#allocation2 + $0x408] sm:$0xff]
      %v2969 = vld [vmem:[#allocation2 + $0x410] sm:$0xff]
      %v2970 = vld [vmem:[#allocation2 + $0x418] sm:$0xff]
      %2977 = vrot.lane.b32.xlu0 %v2965, 44
      %v2978 = vpop.permute.xlu0 %2977
      %2979 = vrot.lane.b32.xlu0 %v2966, 44
      %v2980 = vpop.permute.xlu0 %2979
      %2981 = vrot.lane.b32.xlu0 %v2967, 44
      %v2982 = vpop.permute.xlu0 %2981
      %2983 = vrot.lane.b32.xlu0 %v2968, 44
      %v2984 = vpop.permute.xlu0 %2983
      %2985 = vrot.lane.b32.xlu0 %v2969, 44
      %v2986 = vpop.permute.xlu0 %2985
      %2987 = vrot.lane.b32.xlu0 %v2970, 44
      %v2988 = vpop.permute.xlu0 %2987
      %vm2989 = vcmask 359424
      %v2990 = vsel %vm2989, %v2978, %v2980
      %v2991 = vsel %vm2989, %v2980, %v2982
      %v2992 = vsel %vm2989, %v2982, %v2984
      %v2993 = vsel %vm2989, %v2984, %v2986
      %v2994 = vsel %vm2989, %v2986, %v2988
      %v3000 = vadd.f32 %v2960, %v2990
      %v3001 = vadd.f32 %v2961, %v2991
      %v3002 = vadd.f32 %v2962, %v2992
      %v3003 = vadd.f32 %v2963, %v2993
      %v3004 = vadd.f32 %v2964, %v2994
      %v3005 = vld [vmem:[#allocation2 + $0x428] sm:$0xff]
      %v3006 = vld [vmem:[#allocation2 + $0x430] sm:$0xff]
      %v3007 = vld [vmem:[#allocation2 + $0x438] sm:$0xff]
      %v3008 = vld [vmem:[#allocation2 + $0x440] sm:$0xff]
      %v3009 = vld [vmem:[#allocation2 + $0x448] sm:$0xff]
      %v3010 = vld [vmem:[#allocation2 + $0x450] sm:$0xff]
      %3017 = vrot.lane.b32.xlu0 %v3005, 43
      %v3018 = vpop.permute.xlu0 %3017
      %3019 = vrot.lane.b32.xlu0 %v3006, 43
      %v3020 = vpop.permute.xlu0 %3019
      %3021 = vrot.lane.b32.xlu0 %v3007, 43
      %v3022 = vpop.permute.xlu0 %3021
      %3023 = vrot.lane.b32.xlu0 %v3008, 43
      %v3024 = vpop.permute.xlu0 %3023
      %3025 = vrot.lane.b32.xlu0 %v3009, 43
      %v3026 = vpop.permute.xlu0 %3025
      %3027 = vrot.lane.b32.xlu0 %v3010, 43
      %v3028 = vpop.permute.xlu0 %3027
      %vm3029 = vcmask 351232
      %v3030 = vsel %vm3029, %v3018, %v3020
      %v3031 = vsel %vm3029, %v3020, %v3022
      %v3032 = vsel %vm3029, %v3022, %v3024
      %v3033 = vsel %vm3029, %v3024, %v3026
      %v3034 = vsel %vm3029, %v3026, %v3028
      %v3040 = vadd.f32 %v3000, %v3030
      %v3041 = vadd.f32 %v3001, %v3031
      %v3042 = vadd.f32 %v3002, %v3032
      %v3043 = vadd.f32 %v3003, %v3033
      %v3044 = vadd.f32 %v3004, %v3034
      %v3045 = vld [vmem:[#allocation2 + $0x460] sm:$0xff]
      %v3046 = vld [vmem:[#allocation2 + $0x468] sm:$0xff]
      %v3047 = vld [vmem:[#allocation2 + $0x470] sm:$0xff]
      %v3048 = vld [vmem:[#allocation2 + $0x478] sm:$0xff]
      %v3049 = vld [vmem:[#allocation2 + $0x480] sm:$0xff]
      %v3050 = vld [vmem:[#allocation2 + $0x488] sm:$0xff]
      %3057 = vrot.lane.b32.xlu0 %v3045, 42
      %v3058 = vpop.permute.xlu0 %3057
      %3059 = vrot.lane.b32.xlu0 %v3046, 42
      %v3060 = vpop.permute.xlu0 %3059
      %3061 = vrot.lane.b32.xlu0 %v3047, 42
      %v3062 = vpop.permute.xlu0 %3061
      %3063 = vrot.lane.b32.xlu0 %v3048, 42
      %v3064 = vpop.permute.xlu0 %3063
      %3065 = vrot.lane.b32.xlu0 %v3049, 42
      %v3066 = vpop.permute.xlu0 %3065
      %3067 = vrot.lane.b32.xlu0 %v3050, 42
      %v3068 = vpop.permute.xlu0 %3067
      %vm3069 = vcmask 343040
      %v3070 = vsel %vm3069, %v3058, %v3060
      %v3071 = vsel %vm3069, %v3060, %v3062
      %v3072 = vsel %vm3069, %v3062, %v3064
      %v3073 = vsel %vm3069, %v3064, %v3066
      %v3074 = vsel %vm3069, %v3066, %v3068
      %v3080 = vadd.f32 %v3040, %v3070
      %v3081 = vadd.f32 %v3041, %v3071
      %v3082 = vadd.f32 %v3042, %v3072
      %v3083 = vadd.f32 %v3043, %v3073
      %v3084 = vadd.f32 %v3044, %v3074
      %v3085 = vld [vmem:[#allocation2 + $0x498] sm:$0xff]
      %v3086 = vld [vmem:[#allocation2 + $0x4a0] sm:$0xff]
      %v3087 = vld [vmem:[#allocation2 + $0x4a8] sm:$0xff]
      %v3088 = vld [vmem:[#allocation2 + $0x4b0] sm:$0xff]
      %v3089 = vld [vmem:[#allocation2 + $0x4b8] sm:$0xff]
      %v3090 = vld [vmem:[#allocation2 + $0x4c0] sm:$0xff]
      %3097 = vrot.lane.b32.xlu0 %v3085, 8
      %v3098 = vpop.permute.xlu0 %3097
      %3099 = vrot.lane.b32.xlu0 %v3086, 8
      %v3100 = vpop.permute.xlu0 %3099
      %3101 = vrot.lane.b32.xlu0 %v3087, 8
      %v3102 = vpop.permute.xlu0 %3101
      %3103 = vrot.lane.b32.xlu0 %v3088, 8
      %v3104 = vpop.permute.xlu0 %3103
      %3105 = vrot.lane.b32.xlu0 %v3089, 8
      %v3106 = vpop.permute.xlu0 %3105
      %3107 = vrot.lane.b32.xlu0 %v3090, 8
      %v3108 = vpop.permute.xlu0 %3107
      %vm3109 = vcmask 64512
      %v3110 = vsel %vm3109, %v3098, %v3100
      %v3111 = vsel %vm3109, %v3100, %v3102
      %v3112 = vsel %vm3109, %v3102, %v3104
      %v3113 = vsel %vm3109, %v3104, %v3106
      %v3114 = vsel %vm3109, %v3106, %v3108
      %v3120 = vadd.f32 %v3080, %v3110
      %v3121 = vadd.f32 %v3081, %v3111
      %v3122 = vadd.f32 %v3082, %v3112
      %v3123 = vadd.f32 %v3083, %v3113
      %v3124 = vadd.f32 %v3084, %v3114
      %v3125 = vld [vmem:[#allocation2 + $0x4d0] sm:$0xff]
      %v3126 = vld [vmem:[#allocation2 + $0x4d8] sm:$0xff]
      %v3127 = vld [vmem:[#allocation2 + $0x4e0] sm:$0xff]
      %v3128 = vld [vmem:[#allocation2 + $0x4e8] sm:$0xff]
      %v3129 = vld [vmem:[#allocation2 + $0x4f0] sm:$0xff]
      %v3130 = vld [vmem:[#allocation2 + $0x4f8] sm:$0xff]
      %3137 = vrot.lane.b32.xlu0 %v3125, 7
      %v3138 = vpop.permute.xlu0 %3137
      %3139 = vrot.lane.b32.xlu0 %v3126, 7
      %v3140 = vpop.permute.xlu0 %3139
      %3141 = vrot.lane.b32.xlu0 %v3127, 7
      %v3142 = vpop.permute.xlu0 %3141
      %3143 = vrot.lane.b32.xlu0 %v3128, 7
      %v3144 = vpop.permute.xlu0 %3143
      %3145 = vrot.lane.b32.xlu0 %v3129, 7
      %v3146 = vpop.permute.xlu0 %3145
      %3147 = vrot.lane.b32.xlu0 %v3130, 7
      %v3148 = vpop.permute.xlu0 %3147
      %vm3149 = vcmask 56320
      %v3150 = vsel %vm3149, %v3138, %v3140
      %v3151 = vsel %vm3149, %v3140, %v3142
      %v3152 = vsel %vm3149, %v3142, %v3144
      %v3153 = vsel %vm3149, %v3144, %v3146
      %v3154 = vsel %vm3149, %v3146, %v3148
      %v3160 = vadd.f32 %v3120, %v3150
      %v3161 = vadd.f32 %v3121, %v3151
      %v3162 = vadd.f32 %v3122, %v3152
      %v3163 = vadd.f32 %v3123, %v3153
      %v3164 = vadd.f32 %v3124, %v3154
      %v3165 = vld [vmem:[#allocation2 + $0x508] sm:$0xff]
      %v3166 = vld [vmem:[#allocation2 + $0x510] sm:$0xff]
      %v3167 = vld [vmem:[#allocation2 + $0x518] sm:$0xff]
      %v3168 = vld [vmem:[#allocation2 + $0x520] sm:$0xff]
      %v3169 = vld [vmem:[#allocation2 + $0x528] sm:$0xff]
      %v3170 = vld [vmem:[#allocation2 + $0x530] sm:$0xff]
      %3177 = vrot.lane.b32.xlu0 %v3165, 6
      %v3178 = vpop.permute.xlu0 %3177
      %3179 = vrot.lane.b32.xlu0 %v3166, 6
      %v3180 = vpop.permute.xlu0 %3179
      %3181 = vrot.lane.b32.xlu0 %v3167, 6
      %v3182 = vpop.permute.xlu0 %3181
      %3183 = vrot.lane.b32.xlu0 %v3168, 6
      %v3184 = vpop.permute.xlu0 %3183
      %3185 = vrot.lane.b32.xlu0 %v3169, 6
      %v3186 = vpop.permute.xlu0 %3185
      %3187 = vrot.lane.b32.xlu0 %v3170, 6
      %v3188 = vpop.permute.xlu0 %3187
      %vm3189 = vcmask 48128
      %v3190 = vsel %vm3189, %v3178, %v3180
      %v3191 = vsel %vm3189, %v3180, %v3182
      %v3192 = vsel %vm3189, %v3182, %v3184
      %v3193 = vsel %vm3189, %v3184, %v3186
      %v3194 = vsel %vm3189, %v3186, %v3188
      %v3200 = vadd.f32 %v3160, %v3190
      %v3201 = vadd.f32 %v3161, %v3191
      %v3202 = vadd.f32 %v3162, %v3192
      %v3203 = vadd.f32 %v3163, %v3193
      %v3204 = vadd.f32 %v3164, %v3194
      %v3205 = vld [vmem:[#allocation2 + $0x540] sm:$0xff]
      %v3206 = vld [vmem:[#allocation2 + $0x548] sm:$0xff]
      %v3207 = vld [vmem:[#allocation2 + $0x550] sm:$0xff]
      %v3208 = vld [vmem:[#allocation2 + $0x558] sm:$0xff]
      %v3209 = vld [vmem:[#allocation2 + $0x560] sm:$0xff]
      %v3210 = vld [vmem:[#allocation2 + $0x568] sm:$0xff]
      %3217 = vrot.lane.b32.xlu0 %v3205, 5
      %v3218 = vpop.permute.xlu0 %3217
      %3219 = vrot.lane.b32.xlu0 %v3206, 5
      %v3220 = vpop.permute.xlu0 %3219
      %3221 = vrot.lane.b32.xlu0 %v3207, 5
      %v3222 = vpop.permute.xlu0 %3221
      %3223 = vrot.lane.b32.xlu0 %v3208, 5
      %v3224 = vpop.permute.xlu0 %3223
      %3225 = vrot.lane.b32.xlu0 %v3209, 5
      %v3226 = vpop.permute.xlu0 %3225
      %3227 = vrot.lane.b32.xlu0 %v3210, 5
      %v3228 = vpop.permute.xlu0 %3227
      %vm3229 = vcmask 39936
      %v3230 = vsel %vm3229, %v3218, %v3220
      %v3231 = vsel %vm3229, %v3220, %v3222
      %v3232 = vsel %vm3229, %v3222, %v3224
      %v3233 = vsel %vm3229, %v3224, %v3226
      %v3234 = vsel %vm3229, %v3226, %v3228
      %v3240 = vadd.f32 %v3200, %v3230
      %v3241 = vadd.f32 %v3201, %v3231
      %v3242 = vadd.f32 %v3202, %v3232
      %v3243 = vadd.f32 %v3203, %v3233
      %v3244 = vadd.f32 %v3204, %v3234
      %v3245 = vld [vmem:[#allocation2 + $0x578] sm:$0xff]
      %v3246 = vld [vmem:[#allocation2 + $0x580] sm:$0xff]
      %v3247 = vld [vmem:[#allocation2 + $0x588] sm:$0xff]
      %v3248 = vld [vmem:[#allocation2 + $0x590] sm:$0xff]
      %v3249 = vld [vmem:[#allocation2 + $0x598] sm:$0xff]
      %v3250 = vld [vmem:[#allocation2 + $0x5a0] sm:$0xff]
      %3257 = vrot.lane.b32.xlu0 %v3245, 4
      %v3258 = vpop.permute.xlu0 %3257
      %3259 = vrot.lane.b32.xlu0 %v3246, 4
      %v3260 = vpop.permute.xlu0 %3259
      %3261 = vrot.lane.b32.xlu0 %v3247, 4
      %v3262 = vpop.permute.xlu0 %3261
      %3263 = vrot.lane.b32.xlu0 %v3248, 4
      %v3264 = vpop.permute.xlu0 %3263
      %3265 = vrot.lane.b32.xlu0 %v3249, 4
      %v3266 = vpop.permute.xlu0 %3265
      %3267 = vrot.lane.b32.xlu0 %v3250, 4
      %v3268 = vpop.permute.xlu0 %3267
      %vm3269 = vcmask 31744
      %v3270 = vsel %vm3269, %v3258, %v3260
      %v3271 = vsel %vm3269, %v3260, %v3262
      %v3272 = vsel %vm3269, %v3262, %v3264
      %v3273 = vsel %vm3269, %v3264, %v3266
      %v3274 = vsel %vm3269, %v3266, %v3268
      %v3280 = vadd.f32 %v3240, %v3270
      %v3281 = vadd.f32 %v3241, %v3271
      %v3282 = vadd.f32 %v3242, %v3272
      %v3283 = vadd.f32 %v3243, %v3273
      %v3284 = vadd.f32 %v3244, %v3274
      %v3285 = vld [vmem:[#allocation2 + $0x5b0] sm:$0xff]
      %v3286 = vld [vmem:[#allocation2 + $0x5b8] sm:$0xff]
      %v3287 = vld [vmem:[#allocation2 + $0x5c0] sm:$0xff]
      %v3288 = vld [vmem:[#allocation2 + $0x5c8] sm:$0xff]
      %v3289 = vld [vmem:[#allocation2 + $0x5d0] sm:$0xff]
      %v3290 = vld [vmem:[#allocation2 + $0x5d8] sm:$0xff]
      %3297 = vrot.lane.b32.xlu0 %v3285, 3
      %v3298 = vpop.permute.xlu0 %3297
      %3299 = vrot.lane.b32.xlu0 %v3286, 3
      %v3300 = vpop.permute.xlu0 %3299
      %3301 = vrot.lane.b32.xlu0 %v3287, 3
      %v3302 = vpop.permute.xlu0 %3301
      %3303 = vrot.lane.b32.xlu0 %v3288, 3
      %v3304 = vpop.permute.xlu0 %3303
      %3305 = vrot.lane.b32.xlu0 %v3289, 3
      %v3306 = vpop.permute.xlu0 %3305
      %3307 = vrot.lane.b32.xlu0 %v3290, 3
      %v3308 = vpop.permute.xlu0 %3307
      %vm3309 = vcmask 23552
      %v3310 = vsel %vm3309, %v3298, %v3300
      %v3311 = vsel %vm3309, %v3300, %v3302
      %v3312 = vsel %vm3309, %v3302, %v3304
      %v3313 = vsel %vm3309, %v3304, %v3306
      %v3314 = vsel %vm3309, %v3306, %v3308
      %v3320 = vadd.f32 %v3280, %v3310
      %v3321 = vadd.f32 %v3281, %v3311
      %v3322 = vadd.f32 %v3282, %v3312
      %v3323 = vadd.f32 %v3283, %v3313
      %v3324 = vadd.f32 %v3284, %v3314
      %v3325 = vld [vmem:[#allocation2 + $0x5e8] sm:$0xff]
      %v3326 = vld [vmem:[#allocation2 + $0x5f0] sm:$0xff]
      %v3327 = vld [vmem:[#allocation2 + $0x5f8] sm:$0xff]
      %v3328 = vld [vmem:[#allocation2 + $0x600] sm:$0xff]
      %v3329 = vld [vmem:[#allocation2 + $0x608] sm:$0xff]
      %v3330 = vld [vmem:[#allocation2 + $0x610] sm:$0xff]
      %3337 = vrot.lane.b32.xlu0 %v3325, 2
      %v3338 = vpop.permute.xlu0 %3337
      %3339 = vrot.lane.b32.xlu0 %v3326, 2
      %v3340 = vpop.permute.xlu0 %3339
      %3341 = vrot.lane.b32.xlu0 %v3327, 2
      %v3342 = vpop.permute.xlu0 %3341
      %3343 = vrot.lane.b32.xlu0 %v3328, 2
      %v3344 = vpop.permute.xlu0 %3343
      %3345 = vrot.lane.b32.xlu0 %v3329, 2
      %v3346 = vpop.permute.xlu0 %3345
      %3347 = vrot.lane.b32.xlu0 %v3330, 2
      %v3348 = vpop.permute.xlu0 %3347
      %vm3349 = vcmask 15360
      %v3350 = vsel %vm3349, %v3338, %v3340
      %v3351 = vsel %vm3349, %v3340, %v3342
      %v3352 = vsel %vm3349, %v3342, %v3344
      %v3353 = vsel %vm3349, %v3344, %v3346
      %v3354 = vsel %vm3349, %v3346, %v3348
      %v3360 = vadd.f32 %v3320, %v3350
      %v3361 = vadd.f32 %v3321, %v3351
      %v3362 = vadd.f32 %v3322, %v3352
      %v3363 = vadd.f32 %v3323, %v3353
      %v3364 = vadd.f32 %v3324, %v3354
      %v3365 = vld [vmem:[#allocation2 + $0x628] sm:$0xff]
      %v3366 = vld [vmem:[#allocation2 + $0x630] sm:$0xff]
      %v3367 = vld [vmem:[#allocation2 + $0x638] sm:$0xff]
      %v3368 = vld [vmem:[#allocation2 + $0x640] sm:$0xff]
      %v3369 = vld [vmem:[#allocation2 + $0x648] sm:$0xff]
      %v3370 = vld [vmem:[#allocation2 + $0x650] sm:$0xff]
      %3377 = vrot.lane.b32.xlu0 %v3365, 96
      %v3378 = vpop.permute.xlu0 %3377
      %3379 = vrot.lane.b32.xlu0 %v3366, 96
      %v3380 = vpop.permute.xlu0 %3379
      %3381 = vrot.lane.b32.xlu0 %v3367, 96
      %v3382 = vpop.permute.xlu0 %3381
      %3383 = vrot.lane.b32.xlu0 %v3368, 96
      %v3384 = vpop.permute.xlu0 %3383
      %3385 = vrot.lane.b32.xlu0 %v3369, 96
      %v3386 = vpop.permute.xlu0 %3385
      %3387 = vrot.lane.b32.xlu0 %v3370, 96
      %v3388 = vpop.permute.xlu0 %3387
      %vm3389 = vcmask 785408
      %v3390 = vsel %vm3389, %v3378, %v3380
      %v3391 = vsel %vm3389, %v3380, %v3382
      %v3392 = vsel %vm3389, %v3382, %v3384
      %v3393 = vsel %vm3389, %v3384, %v3386
      %v3394 = vsel %vm3389, %v3386, %v3388
      %v3400 = vadd.f32 %v3360, %v3390
      %v3401 = vadd.f32 %v3361, %v3391
      %v3402 = vadd.f32 %v3362, %v3392
      %v3403 = vadd.f32 %v3363, %v3393
      %v3404 = vadd.f32 %v3364, %v3394
      %v3405 = vld [vmem:[#allocation2 + $0x660] sm:$0xff]
      %v3406 = vld [vmem:[#allocation2 + $0x668] sm:$0xff]
      %v3407 = vld [vmem:[#allocation2 + $0x670] sm:$0xff]
      %v3408 = vld [vmem:[#allocation2 + $0x678] sm:$0xff]
      %v3409 = vld [vmem:[#allocation2 + $0x680] sm:$0xff]
      %v3410 = vld [vmem:[#allocation2 + $0x688] sm:$0xff]
      %3417 = vrot.lane.b32.xlu0 %v3405, 95
      %v3418 = vpop.permute.xlu0 %3417
      %3419 = vrot.lane.b32.xlu0 %v3406, 95
      %v3420 = vpop.permute.xlu0 %3419
      %3421 = vrot.lane.b32.xlu0 %v3407, 95
      %v3422 = vpop.permute.xlu0 %3421
      %3423 = vrot.lane.b32.xlu0 %v3408, 95
      %v3424 = vpop.permute.xlu0 %3423
      %3425 = vrot.lane.b32.xlu0 %v3409, 95
      %v3426 = vpop.permute.xlu0 %3425
      %3427 = vrot.lane.b32.xlu0 %v3410, 95
      %v3428 = vpop.permute.xlu0 %3427
      %vm3429 = vcmask 777216
      %v3430 = vsel %vm3429, %v3418, %v3420
      %v3431 = vsel %vm3429, %v3420, %v3422
      %v3432 = vsel %vm3429, %v3422, %v3424
      %v3433 = vsel %vm3429, %v3424, %v3426
      %v3434 = vsel %vm3429, %v3426, %v3428
      %v3440 = vadd.f32 %v3400, %v3430
      %v3441 = vadd.f32 %v3401, %v3431
      %v3442 = vadd.f32 %v3402, %v3432
      %v3443 = vadd.f32 %v3403, %v3433
      %v3444 = vadd.f32 %v3404, %v3434
      %v3445 = vld [vmem:[#allocation2 + $0x698] sm:$0xff]
      %v3446 = vld [vmem:[#allocation2 + $0x6a0] sm:$0xff]
      %v3447 = vld [vmem:[#allocation2 + $0x6a8] sm:$0xff]
      %v3448 = vld [vmem:[#allocation2 + $0x6b0] sm:$0xff]
      %v3449 = vld [vmem:[#allocation2 + $0x6b8] sm:$0xff]
      %v3450 = vld [vmem:[#allocation2 + $0x6c0] sm:$0xff]
      %3457 = vrot.lane.b32.xlu0 %v3445, 94
      %v3458 = vpop.permute.xlu0 %3457
      %3459 = vrot.lane.b32.xlu0 %v3446, 94
      %v3460 = vpop.permute.xlu0 %3459
      %3461 = vrot.lane.b32.xlu0 %v3447, 94
      %v3462 = vpop.permute.xlu0 %3461
      %3463 = vrot.lane.b32.xlu0 %v3448, 94
      %v3464 = vpop.permute.xlu0 %3463
      %3465 = vrot.lane.b32.xlu0 %v3449, 94
      %v3466 = vpop.permute.xlu0 %3465
      %3467 = vrot.lane.b32.xlu0 %v3450, 94
      %v3468 = vpop.permute.xlu0 %3467
      %vm3469 = vcmask 769024
      %v3470 = vsel %vm3469, %v3458, %v3460
      %v3471 = vsel %vm3469, %v3460, %v3462
      %v3472 = vsel %vm3469, %v3462, %v3464
      %v3473 = vsel %vm3469, %v3464, %v3466
      %v3474 = vsel %vm3469, %v3466, %v3468
      %v3480 = vadd.f32 %v3440, %v3470
      %v3481 = vadd.f32 %v3441, %v3471
      %v3482 = vadd.f32 %v3442, %v3472
      %v3483 = vadd.f32 %v3443, %v3473
      %v3484 = vadd.f32 %v3444, %v3474
      %v3485 = vld [vmem:[#allocation2 + $0x6d0] sm:$0xff]
      %v3486 = vld [vmem:[#allocation2 + $0x6d8] sm:$0xff]
      %v3487 = vld [vmem:[#allocation2 + $0x6e0] sm:$0xff]
      %v3488 = vld [vmem:[#allocation2 + $0x6e8] sm:$0xff]
      %v3489 = vld [vmem:[#allocation2 + $0x6f0] sm:$0xff]
      %v3490 = vld [vmem:[#allocation2 + $0x6f8] sm:$0xff]
      %3497 = vrot.lane.b32.xlu0 %v3485, 93
      %v3498 = vpop.permute.xlu0 %3497
      %3499 = vrot.lane.b32.xlu0 %v3486, 93
      %v3500 = vpop.permute.xlu0 %3499
      %3501 = vrot.lane.b32.xlu0 %v3487, 93
      %v3502 = vpop.permute.xlu0 %3501
      %3503 = vrot.lane.b32.xlu0 %v3488, 93
      %v3504 = vpop.permute.xlu0 %3503
      %3505 = vrot.lane.b32.xlu0 %v3489, 93
      %v3506 = vpop.permute.xlu0 %3505
      %3507 = vrot.lane.b32.xlu0 %v3490, 93
      %v3508 = vpop.permute.xlu0 %3507
      %vm3509 = vcmask 760832
      %v3510 = vsel %vm3509, %v3498, %v3500
      %v3511 = vsel %vm3509, %v3500, %v3502
      %v3512 = vsel %vm3509, %v3502, %v3504
      %v3513 = vsel %vm3509, %v3504, %v3506
      %v3514 = vsel %vm3509, %v3506, %v3508
      %v3520 = vadd.f32 %v3480, %v3510
      %v3521 = vadd.f32 %v3481, %v3511
      %v3522 = vadd.f32 %v3482, %v3512
      %v3523 = vadd.f32 %v3483, %v3513
      %v3524 = vadd.f32 %v3484, %v3514
      %v3525 = vld [vmem:[#allocation2 + $0x708] sm:$0xff]
      %v3526 = vld [vmem:[#allocation2 + $0x710] sm:$0xff]
      %v3527 = vld [vmem:[#allocation2 + $0x718] sm:$0xff]
      %v3528 = vld [vmem:[#allocation2 + $0x720] sm:$0xff]
      %v3529 = vld [vmem:[#allocation2 + $0x728] sm:$0xff]
      %v3530 = vld [vmem:[#allocation2 + $0x730] sm:$0xff]
      %3537 = vrot.lane.b32.xlu0 %v3525, 92
      %v3538 = vpop.permute.xlu0 %3537
      %3539 = vrot.lane.b32.xlu0 %v3526, 92
      %v3540 = vpop.permute.xlu0 %3539
      %3541 = vrot.lane.b32.xlu0 %v3527, 92
      %v3542 = vpop.permute.xlu0 %3541
      %3543 = vrot.lane.b32.xlu0 %v3528, 92
      %v3544 = vpop.permute.xlu0 %3543
      %3545 = vrot.lane.b32.xlu0 %v3529, 92
      %v3546 = vpop.permute.xlu0 %3545
      %3547 = vrot.lane.b32.xlu0 %v3530, 92
      %v3548 = vpop.permute.xlu0 %3547
      %vm3549 = vcmask 752640
      %v3550 = vsel %vm3549, %v3538, %v3540
      %v3551 = vsel %vm3549, %v3540, %v3542
      %v3552 = vsel %vm3549, %v3542, %v3544
      %v3553 = vsel %vm3549, %v3544, %v3546
      %v3554 = vsel %vm3549, %v3546, %v3548
      %v3560 = vadd.f32 %v3520, %v3550
      %v3561 = vadd.f32 %v3521, %v3551
      %v3562 = vadd.f32 %v3522, %v3552
      %v3563 = vadd.f32 %v3523, %v3553
      %v3564 = vadd.f32 %v3524, %v3554
      %v3565 = vld [vmem:[#allocation2 + $0x740] sm:$0xff]
      %v3566 = vld [vmem:[#allocation2 + $0x748] sm:$0xff]
      %v3567 = vld [vmem:[#allocation2 + $0x750] sm:$0xff]
      %v3568 = vld [vmem:[#allocation2 + $0x758] sm:$0xff]
      %v3569 = vld [vmem:[#allocation2 + $0x760] sm:$0xff]
      %v3570 = vld [vmem:[#allocation2 + $0x768] sm:$0xff]
      %3577 = vrot.lane.b32.xlu0 %v3565, 91
      %v3578 = vpop.permute.xlu0 %3577
      %3579 = vrot.lane.b32.xlu0 %v3566, 91
      %v3580 = vpop.permute.xlu0 %3579
      %3581 = vrot.lane.b32.xlu0 %v3567, 91
      %v3582 = vpop.permute.xlu0 %3581
      %3583 = vrot.lane.b32.xlu0 %v3568, 91
      %v3584 = vpop.permute.xlu0 %3583
      %3585 = vrot.lane.b32.xlu0 %v3569, 91
      %v3586 = vpop.permute.xlu0 %3585
      %3587 = vrot.lane.b32.xlu0 %v3570, 91
      %v3588 = vpop.permute.xlu0 %3587
      %vm3589 = vcmask 744448
      %v3590 = vsel %vm3589, %v3578, %v3580
      %v3591 = vsel %vm3589, %v3580, %v3582
      %v3592 = vsel %vm3589, %v3582, %v3584
      %v3593 = vsel %vm3589, %v3584, %v3586
      %v3594 = vsel %vm3589, %v3586, %v3588
      %v3600 = vadd.f32 %v3560, %v3590
      %v3601 = vadd.f32 %v3561, %v3591
      %v3602 = vadd.f32 %v3562, %v3592
      %v3603 = vadd.f32 %v3563, %v3593
      %v3604 = vadd.f32 %v3564, %v3594
      %v3605 = vld [vmem:[#allocation2 + $0x778] sm:$0xff]
      %v3606 = vld [vmem:[#allocation2 + $0x780] sm:$0xff]
      %v3607 = vld [vmem:[#allocation2 + $0x788] sm:$0xff]
      %v3608 = vld [vmem:[#allocation2 + $0x790] sm:$0xff]
      %v3609 = vld [vmem:[#allocation2 + $0x798] sm:$0xff]
      %v3610 = vld [vmem:[#allocation2 + $0x7a0] sm:$0xff]
      %3617 = vrot.lane.b32.xlu0 %v3605, 90
      %v3618 = vpop.permute.xlu0 %3617
      %3619 = vrot.lane.b32.xlu0 %v3606, 90
      %v3620 = vpop.permute.xlu0 %3619
      %3621 = vrot.lane.b32.xlu0 %v3607, 90
      %v3622 = vpop.permute.xlu0 %3621
      %3623 = vrot.lane.b32.xlu0 %v3608, 90
      %v3624 = vpop.permute.xlu0 %3623
      %3625 = vrot.lane.b32.xlu0 %v3609, 90
      %v3626 = vpop.permute.xlu0 %3625
      %3627 = vrot.lane.b32.xlu0 %v3610, 90
      %v3628 = vpop.permute.xlu0 %3627
      %vm3629 = vcmask 736256
      %v3630 = vsel %vm3629, %v3618, %v3620
      %v3631 = vsel %vm3629, %v3620, %v3622
      %v3632 = vsel %vm3629, %v3622, %v3624
      %v3633 = vsel %vm3629, %v3624, %v3626
      %v3634 = vsel %vm3629, %v3626, %v3628
      %v3640 = vadd.f32 %v3600, %v3630
      %v3641 = vadd.f32 %v3601, %v3631
      %v3642 = vadd.f32 %v3602, %v3632
      %v3643 = vadd.f32 %v3603, %v3633
      %v3644 = vadd.f32 %v3604, %v3634
      %v3645 = vld [vmem:[#allocation2 + $0x7b0] sm:$0xff]
      %v3646 = vld [vmem:[#allocation2 + $0x7b8] sm:$0xff]
      %v3647 = vld [vmem:[#allocation2 + $0x7c0] sm:$0xff]
      %v3648 = vld [vmem:[#allocation2 + $0x7c8] sm:$0xff]
      %v3649 = vld [vmem:[#allocation2 + $0x7d0] sm:$0xff]
      %v3650 = vld [vmem:[#allocation2 + $0x7d8] sm:$0xff]
      %3657 = vrot.lane.b32.xlu0 %v3645, 56
      %v3658 = vpop.permute.xlu0 %3657
      %3659 = vrot.lane.b32.xlu0 %v3646, 56
      %v3660 = vpop.permute.xlu0 %3659
      %3661 = vrot.lane.b32.xlu0 %v3647, 56
      %v3662 = vpop.permute.xlu0 %3661
      %3663 = vrot.lane.b32.xlu0 %v3648, 56
      %v3664 = vpop.permute.xlu0 %3663
      %3665 = vrot.lane.b32.xlu0 %v3649, 56
      %v3666 = vpop.permute.xlu0 %3665
      %3667 = vrot.lane.b32.xlu0 %v3650, 56
      %v3668 = vpop.permute.xlu0 %3667
      %vm3669 = vcmask 457728
      %v3670 = vsel %vm3669, %v3658, %v3660
      %v3671 = vsel %vm3669, %v3660, %v3662
      %v3672 = vsel %vm3669, %v3662, %v3664
      %v3673 = vsel %vm3669, %v3664, %v3666
      %v3674 = vsel %vm3669, %v3666, %v3668
      %v3680 = vadd.f32 %v3640, %v3670
      %v3681 = vadd.f32 %v3641, %v3671
      %v3682 = vadd.f32 %v3642, %v3672
      %v3683 = vadd.f32 %v3643, %v3673
      %v3684 = vadd.f32 %v3644, %v3674
      %v3685 = vld [vmem:[#allocation2 + $0x7e8] sm:$0xff]
      %v3686 = vld [vmem:[#allocation2 + $0x7f0] sm:$0xff]
      %v3687 = vld [vmem:[#allocation2 + $0x7f8] sm:$0xff]
      %v3688 = vld [vmem:[#allocation2 + $0x800] sm:$0xff]
      %v3689 = vld [vmem:[#allocation2 + $0x808] sm:$0xff]
      %v3690 = vld [vmem:[#allocation2 + $0x810] sm:$0xff]
      %3697 = vrot.lane.b32.xlu0 %v3685, 55
      %v3698 = vpop.permute.xlu0 %3697
      %3699 = vrot.lane.b32.xlu0 %v3686, 55
      %v3700 = vpop.permute.xlu0 %3699
      %3701 = vrot.lane.b32.xlu0 %v3687, 55
      %v3702 = vpop.permute.xlu0 %3701
      %3703 = vrot.lane.b32.xlu0 %v3688, 55
      %v3704 = vpop.permute.xlu0 %3703
      %3705 = vrot.lane.b32.xlu0 %v3689, 55
      %v3706 = vpop.permute.xlu0 %3705
      %3707 = vrot.lane.b32.xlu0 %v3690, 55
      %v3708 = vpop.permute.xlu0 %3707
      %vm3709 = vcmask 449536
      %v3710 = vsel %vm3709, %v3698, %v3700
      %v3711 = vsel %vm3709, %v3700, %v3702
      %v3712 = vsel %vm3709, %v3702, %v3704
      %v3713 = vsel %vm3709, %v3704, %v3706
      %v3714 = vsel %vm3709, %v3706, %v3708
      %v3720 = vadd.f32 %v3680, %v3710
      %v3721 = vadd.f32 %v3681, %v3711
      %v3722 = vadd.f32 %v3682, %v3712
      %v3723 = vadd.f32 %v3683, %v3713
      %v3724 = vadd.f32 %v3684, %v3714
      %v3725 = vld [vmem:[#allocation2 + $0x820] sm:$0xff]
      %v3726 = vld [vmem:[#allocation2 + $0x828] sm:$0xff]
      %v3727 = vld [vmem:[#allocation2 + $0x830] sm:$0xff]
      %v3728 = vld [vmem:[#allocation2 + $0x838] sm:$0xff]
      %v3729 = vld [vmem:[#allocation2 + $0x840] sm:$0xff]
      %v3730 = vld [vmem:[#allocation2 + $0x848] sm:$0xff]
      %3737 = vrot.lane.b32.xlu0 %v3725, 54
      %v3738 = vpop.permute.xlu0 %3737
      %3739 = vrot.lane.b32.xlu0 %v3726, 54
      %v3740 = vpop.permute.xlu0 %3739
      %3741 = vrot.lane.b32.xlu0 %v3727, 54
      %v3742 = vpop.permute.xlu0 %3741
      %3743 = vrot.lane.b32.xlu0 %v3728, 54
      %v3744 = vpop.permute.xlu0 %3743
      %3745 = vrot.lane.b32.xlu0 %v3729, 54
      %v3746 = vpop.permute.xlu0 %3745
      %3747 = vrot.lane.b32.xlu0 %v3730, 54
      %v3748 = vpop.permute.xlu0 %3747
      %vm3749 = vcmask 441344
      %v3750 = vsel %vm3749, %v3738, %v3740
      %v3751 = vsel %vm3749, %v3740, %v3742
      %v3752 = vsel %vm3749, %v3742, %v3744
      %v3753 = vsel %vm3749, %v3744, %v3746
      %v3754 = vsel %vm3749, %v3746, %v3748
      %v3760 = vadd.f32 %v3720, %v3750
      %v3761 = vadd.f32 %v3721, %v3751
      %v3762 = vadd.f32 %v3722, %v3752
      %v3763 = vadd.f32 %v3723, %v3753
      %v3764 = vadd.f32 %v3724, %v3754
      %v3765 = vld [vmem:[#allocation2 + $0x858] sm:$0xff]
      %v3766 = vld [vmem:[#allocation2 + $0x860] sm:$0xff]
      %v3767 = vld [vmem:[#allocation2 + $0x868] sm:$0xff]
      %v3768 = vld [vmem:[#allocation2 + $0x870] sm:$0xff]
      %v3769 = vld [vmem:[#allocation2 + $0x878] sm:$0xff]
      %v3770 = vld [vmem:[#allocation2 + $0x880] sm:$0xff]
      %3777 = vrot.lane.b32.xlu0 %v3765, 53
      %v3778 = vpop.permute.xlu0 %3777
      %3779 = vrot.lane.b32.xlu0 %v3766, 53
      %v3780 = vpop.permute.xlu0 %3779
      %3781 = vrot.lane.b32.xlu0 %v3767, 53
      %v3782 = vpop.permute.xlu0 %3781
      %3783 = vrot.lane.b32.xlu0 %v3768, 53
      %v3784 = vpop.permute.xlu0 %3783
      %3785 = vrot.lane.b32.xlu0 %v3769, 53
      %v3786 = vpop.permute.xlu0 %3785
      %3787 = vrot.lane.b32.xlu0 %v3770, 53
      %v3788 = vpop.permute.xlu0 %3787
      %vm3789 = vcmask 433152
      %v3790 = vsel %vm3789, %v3778, %v3780
      %v3791 = vsel %vm3789, %v3780, %v3782
      %v3792 = vsel %vm3789, %v3782, %v3784
      %v3793 = vsel %vm3789, %v3784, %v3786
      %v3794 = vsel %vm3789, %v3786, %v3788
      %v3800 = vadd.f32 %v3760, %v3790
      %v3801 = vadd.f32 %v3761, %v3791
      %v3802 = vadd.f32 %v3762, %v3792
      %v3803 = vadd.f32 %v3763, %v3793
      %v3804 = vadd.f32 %v3764, %v3794
      %v3805 = vld [vmem:[#allocation2 + $0x890] sm:$0xff]
      %v3806 = vld [vmem:[#allocation2 + $0x898] sm:$0xff]
      %v3807 = vld [vmem:[#allocation2 + $0x8a0] sm:$0xff]
      %v3808 = vld [vmem:[#allocation2 + $0x8a8] sm:$0xff]
      %v3809 = vld [vmem:[#allocation2 + $0x8b0] sm:$0xff]
      %v3810 = vld [vmem:[#allocation2 + $0x8b8] sm:$0xff]
      %3817 = vrot.lane.b32.xlu0 %v3805, 52
      %v3818 = vpop.permute.xlu0 %3817
      %3819 = vrot.lane.b32.xlu0 %v3806, 52
      %v3820 = vpop.permute.xlu0 %3819
      %3821 = vrot.lane.b32.xlu0 %v3807, 52
      %v3822 = vpop.permute.xlu0 %3821
      %3823 = vrot.lane.b32.xlu0 %v3808, 52
      %v3824 = vpop.permute.xlu0 %3823
      %3825 = vrot.lane.b32.xlu0 %v3809, 52
      %v3826 = vpop.permute.xlu0 %3825
      %3827 = vrot.lane.b32.xlu0 %v3810, 52
      %v3828 = vpop.permute.xlu0 %3827
      %vm3829 = vcmask 424960
      %v3830 = vsel %vm3829, %v3818, %v3820
      %v3831 = vsel %vm3829, %v3820, %v3822
      %v3832 = vsel %vm3829, %v3822, %v3824
      %v3833 = vsel %vm3829, %v3824, %v3826
      %v3834 = vsel %vm3829, %v3826, %v3828
      %v3840 = vadd.f32 %v3800, %v3830
      %v3841 = vadd.f32 %v3801, %v3831
      %v3842 = vadd.f32 %v3802, %v3832
      %v3843 = vadd.f32 %v3803, %v3833
      %v3844 = vadd.f32 %v3804, %v3834
      %v3845 = vld [vmem:[#allocation2 + $0x8c8] sm:$0xff]
      %v3846 = vld [vmem:[#allocation2 + $0x8d0] sm:$0xff]
      %v3847 = vld [vmem:[#allocation2 + $0x8d8] sm:$0xff]
      %v3848 = vld [vmem:[#allocation2 + $0x8e0] sm:$0xff]
      %v3849 = vld [vmem:[#allocation2 + $0x8e8] sm:$0xff]
      %v3850 = vld [vmem:[#allocation2 + $0x8f0] sm:$0xff]
      %3857 = vrot.lane.b32.xlu0 %v3845, 51
      %v3858 = vpop.permute.xlu0 %3857
      %3859 = vrot.lane.b32.xlu0 %v3846, 51
      %v3860 = vpop.permute.xlu0 %3859
      %3861 = vrot.lane.b32.xlu0 %v3847, 51
      %v3862 = vpop.permute.xlu0 %3861
      %3863 = vrot.lane.b32.xlu0 %v3848, 51
      %v3864 = vpop.permute.xlu0 %3863
      %3865 = vrot.lane.b32.xlu0 %v3849, 51
      %v3866 = vpop.permute.xlu0 %3865
      %3867 = vrot.lane.b32.xlu0 %v3850, 51
      %v3868 = vpop.permute.xlu0 %3867
      %vm3869 = vcmask 416768
      %v3870 = vsel %vm3869, %v3858, %v3860
      %v3871 = vsel %vm3869, %v3860, %v3862
      %v3872 = vsel %vm3869, %v3862, %v3864
      %v3873 = vsel %vm3869, %v3864, %v3866
      %v3874 = vsel %vm3869, %v3866, %v3868
      %v3880 = vadd.f32 %v3840, %v3870
      %v3881 = vadd.f32 %v3841, %v3871
      %v3882 = vadd.f32 %v3842, %v3872
      %v3883 = vadd.f32 %v3843, %v3873
      %v3884 = vadd.f32 %v3844, %v3874
      %v3885 = vld [vmem:[#allocation2 + $0x900] sm:$0xff]
      %v3886 = vld [vmem:[#allocation2 + $0x908] sm:$0xff]
      %v3887 = vld [vmem:[#allocation2 + $0x910] sm:$0xff]
      %v3888 = vld [vmem:[#allocation2 + $0x918] sm:$0xff]
      %v3889 = vld [vmem:[#allocation2 + $0x920] sm:$0xff]
      %v3890 = vld [vmem:[#allocation2 + $0x928] sm:$0xff]
      %3897 = vrot.lane.b32.xlu0 %v3885, 50
      %v3898 = vpop.permute.xlu0 %3897
      %3899 = vrot.lane.b32.xlu0 %v3886, 50
      %v3900 = vpop.permute.xlu0 %3899
      %3901 = vrot.lane.b32.xlu0 %v3887, 50
      %v3902 = vpop.permute.xlu0 %3901
      %3903 = vrot.lane.b32.xlu0 %v3888, 50
      %v3904 = vpop.permute.xlu0 %3903
      %3905 = vrot.lane.b32.xlu0 %v3889, 50
      %v3906 = vpop.permute.xlu0 %3905
      %3907 = vrot.lane.b32.xlu0 %v3890, 50
      %v3908 = vpop.permute.xlu0 %3907
      %vm3909 = vcmask 408576
      %v3910 = vsel %vm3909, %v3898, %v3900
      %v3911 = vsel %vm3909, %v3900, %v3902
      %v3912 = vsel %vm3909, %v3902, %v3904
      %v3913 = vsel %vm3909, %v3904, %v3906
      %v3914 = vsel %vm3909, %v3906, %v3908
      %v3920 = vadd.f32 %v3880, %v3910
      %v3921 = vadd.f32 %v3881, %v3911
      %v3922 = vadd.f32 %v3882, %v3912
      %v3923 = vadd.f32 %v3883, %v3913
      %v3924 = vadd.f32 %v3884, %v3914
      %v3925 = vld [vmem:[#allocation2 + $0x938] sm:$0xff]
      %v3926 = vld [vmem:[#allocation2 + $0x940] sm:$0xff]
      %v3927 = vld [vmem:[#allocation2 + $0x948] sm:$0xff]
      %v3928 = vld [vmem:[#allocation2 + $0x950] sm:$0xff]
      %v3929 = vld [vmem:[#allocation2 + $0x958] sm:$0xff]
      %v3930 = vld [vmem:[#allocation2 + $0x960] sm:$0xff]
      %3937 = vrot.lane.b32.xlu0 %v3925, 16
      %v3938 = vpop.permute.xlu0 %3937
      %3939 = vrot.lane.b32.xlu0 %v3926, 16
      %v3940 = vpop.permute.xlu0 %3939
      %3941 = vrot.lane.b32.xlu0 %v3927, 16
      %v3942 = vpop.permute.xlu0 %3941
      %3943 = vrot.lane.b32.xlu0 %v3928, 16
      %v3944 = vpop.permute.xlu0 %3943
      %3945 = vrot.lane.b32.xlu0 %v3929, 16
      %v3946 = vpop.permute.xlu0 %3945
      %3947 = vrot.lane.b32.xlu0 %v3930, 16
      %v3948 = vpop.permute.xlu0 %3947
      %vm3949 = vcmask 130048
      %v3950 = vsel %vm3949, %v3938, %v3940
      %v3951 = vsel %vm3949, %v3940, %v3942
      %v3952 = vsel %vm3949, %v3942, %v3944
      %v3953 = vsel %vm3949, %v3944, %v3946
      %v3954 = vsel %vm3949, %v3946, %v3948
      %v3960 = vadd.f32 %v3920, %v3950
      %v3961 = vadd.f32 %v3921, %v3951
      %v3962 = vadd.f32 %v3922, %v3952
      %v3963 = vadd.f32 %v3923, %v3953
      %v3964 = vadd.f32 %v3924, %v3954
      %v3965 = vld [vmem:[#allocation2 + $0x970] sm:$0xff]
      %v3966 = vld [vmem:[#allocation2 + $0x978] sm:$0xff]
      %v3967 = vld [vmem:[#allocation2 + $0x980] sm:$0xff]
      %v3968 = vld [vmem:[#allocation2 + $0x988] sm:$0xff]
      %v3969 = vld [vmem:[#allocation2 + $0x990] sm:$0xff]
      %v3970 = vld [vmem:[#allocation2 + $0x998] sm:$0xff]
      %3977 = vrot.lane.b32.xlu0 %v3965, 15
      %v3978 = vpop.permute.xlu0 %3977
      %3979 = vrot.lane.b32.xlu0 %v3966, 15
      %v3980 = vpop.permute.xlu0 %3979
      %3981 = vrot.lane.b32.xlu0 %v3967, 15
      %v3982 = vpop.permute.xlu0 %3981
      %3983 = vrot.lane.b32.xlu0 %v3968, 15
      %v3984 = vpop.permute.xlu0 %3983
      %3985 = vrot.lane.b32.xlu0 %v3969, 15
      %v3986 = vpop.permute.xlu0 %3985
      %3987 = vrot.lane.b32.xlu0 %v3970, 15
      %v3988 = vpop.permute.xlu0 %3987
      %vm3989 = vcmask 121856
      %v3990 = vsel %vm3989, %v3978, %v3980
      %v3991 = vsel %vm3989, %v3980, %v3982
      %v3992 = vsel %vm3989, %v3982, %v3984
      %v3993 = vsel %vm3989, %v3984, %v3986
      %v3994 = vsel %vm3989, %v3986, %v3988
      %v4000 = vadd.f32 %v3960, %v3990
      %v4001 = vadd.f32 %v3961, %v3991
      %v4002 = vadd.f32 %v3962, %v3992
      %v4003 = vadd.f32 %v3963, %v3993
      %v4004 = vadd.f32 %v3964, %v3994
      %v4005 = vld [vmem:[#allocation2 + $0x9a8] sm:$0xff]
      %v4006 = vld [vmem:[#allocation2 + $0x9b0] sm:$0xff]
      %v4007 = vld [vmem:[#allocation2 + $0x9b8] sm:$0xff]
      %v4008 = vld [vmem:[#allocation2 + $0x9c0] sm:$0xff]
      %v4009 = vld [vmem:[#allocation2 + $0x9c8] sm:$0xff]
      %v4010 = vld [vmem:[#allocation2 + $0x9d0] sm:$0xff]
      %4017 = vrot.lane.b32.xlu0 %v4005, 14
      %v4018 = vpop.permute.xlu0 %4017
      %4019 = vrot.lane.b32.xlu0 %v4006, 14
      %v4020 = vpop.permute.xlu0 %4019
      %4021 = vrot.lane.b32.xlu0 %v4007, 14
      %v4022 = vpop.permute.xlu0 %4021
      %4023 = vrot.lane.b32.xlu0 %v4008, 14
      %v4024 = vpop.permute.xlu0 %4023
      %4025 = vrot.lane.b32.xlu0 %v4009, 14
      %v4026 = vpop.permute.xlu0 %4025
      %4027 = vrot.lane.b32.xlu0 %v4010, 14
      %v4028 = vpop.permute.xlu0 %4027
      %vm4029 = vcmask 113664
      %v4030 = vsel %vm4029, %v4018, %v4020
      %v4031 = vsel %vm4029, %v4020, %v4022
      %v4032 = vsel %vm4029, %v4022, %v4024
      %v4033 = vsel %vm4029, %v4024, %v4026
      %v4034 = vsel %vm4029, %v4026, %v4028
      %v4040 = vadd.f32 %v4000, %v4030
      %v4041 = vadd.f32 %v4001, %v4031
      %v4042 = vadd.f32 %v4002, %v4032
      %v4043 = vadd.f32 %v4003, %v4033
      %v4044 = vadd.f32 %v4004, %v4034
      %v4045 = vld [vmem:[#allocation2 + $0x9e0] sm:$0xff]
      %v4046 = vld [vmem:[#allocation2 + $0x9e8] sm:$0xff]
      %v4047 = vld [vmem:[#allocation2 + $0x9f0] sm:$0xff]
      %v4048 = vld [vmem:[#allocation2 + $0x9f8] sm:$0xff]
      %v4049 = vld [vmem:[#allocation2 + $0xa00] sm:$0xff]
      %v4050 = vld [vmem:[#allocation2 + $0xa08] sm:$0xff]
      %4057 = vrot.lane.b32.xlu0 %v4045, 13
      %v4058 = vpop.permute.xlu0 %4057
      %4059 = vrot.lane.b32.xlu0 %v4046, 13
      %v4060 = vpop.permute.xlu0 %4059
      %4061 = vrot.lane.b32.xlu0 %v4047, 13
      %v4062 = vpop.permute.xlu0 %4061
      %4063 = vrot.lane.b32.xlu0 %v4048, 13
      %v4064 = vpop.permute.xlu0 %4063
      %4065 = vrot.lane.b32.xlu0 %v4049, 13
      %v4066 = vpop.permute.xlu0 %4065
      %4067 = vrot.lane.b32.xlu0 %v4050, 13
      %v4068 = vpop.permute.xlu0 %4067
      %vm4069 = vcmask 105472
      %v4070 = vsel %vm4069, %v4058, %v4060
      %v4071 = vsel %vm4069, %v4060, %v4062
      %v4072 = vsel %vm4069, %v4062, %v4064
      %v4073 = vsel %vm4069, %v4064, %v4066
      %v4074 = vsel %vm4069, %v4066, %v4068
      %v4080 = vadd.f32 %v4040, %v4070
      %v4081 = vadd.f32 %v4041, %v4071
      %v4082 = vadd.f32 %v4042, %v4072
      %v4083 = vadd.f32 %v4043, %v4073
      %v4084 = vadd.f32 %v4044, %v4074
      %v4085 = vld [vmem:[#allocation2 + $0xa18] sm:$0xff]
      %v4086 = vld [vmem:[#allocation2 + $0xa20] sm:$0xff]
      %v4087 = vld [vmem:[#allocation2 + $0xa28] sm:$0xff]
      %v4088 = vld [vmem:[#allocation2 + $0xa30] sm:$0xff]
      %v4089 = vld [vmem:[#allocation2 + $0xa38] sm:$0xff]
      %v4090 = vld [vmem:[#allocation2 + $0xa40] sm:$0xff]
      %4097 = vrot.lane.b32.xlu0 %v4085, 12
      %v4098 = vpop.permute.xlu0 %4097
      %4099 = vrot.lane.b32.xlu0 %v4086, 12
      %v4100 = vpop.permute.xlu0 %4099
      %4101 = vrot.lane.b32.xlu0 %v4087, 12
      %v4102 = vpop.permute.xlu0 %4101
      %4103 = vrot.lane.b32.xlu0 %v4088, 12
      %v4104 = vpop.permute.xlu0 %4103
      %4105 = vrot.lane.b32.xlu0 %v4089, 12
      %v4106 = vpop.permute.xlu0 %4105
      %4107 = vrot.lane.b32.xlu0 %v4090, 12
      %v4108 = vpop.permute.xlu0 %4107
      %vm4109 = vcmask 97280
      %v4110 = vsel %vm4109, %v4098, %v4100
      %v4111 = vsel %vm4109, %v4100, %v4102
      %v4112 = vsel %vm4109, %v4102, %v4104
      %v4113 = vsel %vm4109, %v4104, %v4106
      %v4114 = vsel %vm4109, %v4106, %v4108
      %v4120 = vadd.f32 %v4080, %v4110
      %v4121 = vadd.f32 %v4081, %v4111
      %v4122 = vadd.f32 %v4082, %v4112
      %v4123 = vadd.f32 %v4083, %v4113
      %v4124 = vadd.f32 %v4084, %v4114
      %v4125 = vld [vmem:[#allocation2 + $0xa50] sm:$0xff]
      %v4126 = vld [vmem:[#allocation2 + $0xa58] sm:$0xff]
      %v4127 = vld [vmem:[#allocation2 + $0xa60] sm:$0xff]
      %v4128 = vld [vmem:[#allocation2 + $0xa68] sm:$0xff]
      %v4129 = vld [vmem:[#allocation2 + $0xa70] sm:$0xff]
      %v4130 = vld [vmem:[#allocation2 + $0xa78] sm:$0xff]
      %4137 = vrot.lane.b32.xlu0 %v4125, 11
      %v4138 = vpop.permute.xlu0 %4137
      %4139 = vrot.lane.b32.xlu0 %v4126, 11
      %v4140 = vpop.permute.xlu0 %4139
      %4141 = vrot.lane.b32.xlu0 %v4127, 11
      %v4142 = vpop.permute.xlu0 %4141
      %4143 = vrot.lane.b32.xlu0 %v4128, 11
      %v4144 = vpop.permute.xlu0 %4143
      %4145 = vrot.lane.b32.xlu0 %v4129, 11
      %v4146 = vpop.permute.xlu0 %4145
      %4147 = vrot.lane.b32.xlu0 %v4130, 11
      %v4148 = vpop.permute.xlu0 %4147
      %vm4149 = vcmask 89088
      %v4150 = vsel %vm4149, %v4138, %v4140
      %v4151 = vsel %vm4149, %v4140, %v4142
      %v4152 = vsel %vm4149, %v4142, %v4144
      %v4153 = vsel %vm4149, %v4144, %v4146
      %v4154 = vsel %vm4149, %v4146, %v4148
      %v4160 = vadd.f32 %v4120, %v4150
      %v4161 = vadd.f32 %v4121, %v4151
      %v4162 = vadd.f32 %v4122, %v4152
      %v4163 = vadd.f32 %v4123, %v4153
      %v4164 = vadd.f32 %v4124, %v4154
      %v4165 = vld [vmem:[#allocation2 + $0xa88] sm:$0xff]
      %v4166 = vld [vmem:[#allocation2 + $0xa90] sm:$0xff]
      %v4167 = vld [vmem:[#allocation2 + $0xa98] sm:$0xff]
      %v4168 = vld [vmem:[#allocation2 + $0xaa0] sm:$0xff]
      %v4169 = vld [vmem:[#allocation2 + $0xaa8] sm:$0xff]
      %v4170 = vld [vmem:[#allocation2 + $0xab0] sm:$0xff]
      %4177 = vrot.lane.b32.xlu0 %v4165, 10
      %v4178 = vpop.permute.xlu0 %4177
      %4179 = vrot.lane.b32.xlu0 %v4166, 10
      %v4180 = vpop.permute.xlu0 %4179
      %4181 = vrot.lane.b32.xlu0 %v4167, 10
      %v4182 = vpop.permute.xlu0 %4181
      %4183 = vrot.lane.b32.xlu0 %v4168, 10
      %v4184 = vpop.permute.xlu0 %4183
      %4185 = vrot.lane.b32.xlu0 %v4169, 10
      %v4186 = vpop.permute.xlu0 %4185
      %4187 = vrot.lane.b32.xlu0 %v4170, 10
      %v4188 = vpop.permute.xlu0 %4187
      %vm4189 = vcmask 80896
      %v4190 = vsel %vm4189, %v4178, %v4180
      %v4191 = vsel %vm4189, %v4180, %v4182
      %v4192 = vsel %vm4189, %v4182, %v4184
      %v4193 = vsel %vm4189, %v4184, %v4186
      %v4194 = vsel %vm4189, %v4186, %v4188
      %v4200 = vadd.f32 %v4160, %v4190
      %v4201 = vadd.f32 %v4161, %v4191
      %v4202 = vadd.f32 %v4162, %v4192
      %v4203 = vadd.f32 %v4163, %v4193
      %v4204 = vadd.f32 %v4164, %v4194
      %4206 = vset.pattern.permute.xlu0 0
      %4207 = vperm.xlu0 %4206, %v340
      %v4208 = vpop.permute.xlu0 %4207
      %v4210 = vadd.f32 %v4200, %v4208
      %v4211 = vadd.f32 %v4201, %v4208
      %v4212 = vadd.f32 %v4202, %v4208
      %v4213 = vadd.f32 %v4203, %v4208
      %v4214 = vadd.f32 %v4204, %v4208
      %v4215 = vmax.f32 %v4210, 0.0
      %v4216 = vmax.f32 %v4211, 0.0
      %v4217 = vmax.f32 %v4212, 0.0
      %v4218 = vmax.f32 %v4213, 0.0
      %v4219 = vmax.f32 %v4214, 0.0
      %4225 = vrot.lane.b32.xlu0 %v4215, 127
      %v4226 = vpop.permute.xlu0 %4225
      %4227 = vrot.lane.b32.xlu0 %v4216, 127
      %v4228 = vpop.permute.xlu0 %4227
      %4229 = vrot.lane.b32.xlu0 %v4217, 127
      %v4230 = vpop.permute.xlu0 %4229
      %4231 = vrot.lane.b32.xlu0 %v4218, 127
      %v4232 = vpop.permute.xlu0 %4231
      %4233 = vrot.lane.b32.xlu0 %v4219, 127
      %v4234 = vpop.permute.xlu0 %4233
      %v4235 = vsel %vm2309, %v4226, %v4228
      %v4236 = vsel %vm2309, %v4228, %v4230
      %v4237 = vsel %vm2309, %v4230, %v4232
      %v4238 = vsel %vm2309, %v4232, %v4234
      %v4243 = vmax.f32 %v4215, %v4235
      %v4244 = vmax.f32 %v4216, %v4236
      %v4245 = vmax.f32 %v4217, %v4237
      %v4246 = vmax.f32 %v4218, %v4238
      %v4248 = vmax.f32 %v4219, %v4234
      %4254 = vrot.lane.b32.xlu0 %v4243, 88
      %v4255 = vpop.permute.xlu0 %4254
      %4256 = vrot.lane.b32.xlu0 %v4244, 88
      %v4257 = vpop.permute.xlu0 %4256
      %4258 = vrot.lane.b32.xlu0 %v4245, 88
      %v4259 = vpop.permute.xlu0 %4258
      %4260 = vrot.lane.b32.xlu0 %v4246, 88
      %v4261 = vpop.permute.xlu0 %4260
      %4262 = vrot.lane.b32.xlu0 %v4248, 88
      %v4263 = vpop.permute.xlu0 %4262
      %v4264 = vsel %vm2549, %v4255, %v4257
      %v4265 = vsel %vm2549, %v4257, %v4259
      %v4266 = vsel %vm2549, %v4259, %v4261
      %v4267 = vsel %vm2549, %v4261, %v4263
      %v4272 = vmax.f32 %v4243, %v4264
      %v4273 = vmax.f32 %v4244, %v4265
      %v4274 = vmax.f32 %v4245, %v4266
      %v4275 = vmax.f32 %v4246, %v4267
      %v4276 = vmul.f32 %v4272, %v341
      %v4277 = vmul.f32 %v4273, %v342
      %v4278 = vmul.f32 %v4274, %v343
      %v4279 = vmul.f32 %v4275, %v344
      %v4280 = vadd.f32 %v4276, %v4277
      %v4281 = vadd.f32 %v4280, %v4278
      %v4282 = vadd.f32 %v4281, %v4279
      %4283 = vadd.xlane.f32.xlu0 %v4282
      %v4284 = vpop.xlane.xlu0 %4283
      %v4285 = vrot.slane %v4284, 4
      %v4286 = vadd.f32 %v4284, %v4285
      %v4287 = vrot.slane %v4286, 2
      %v4288 = vadd.f32 %v4286, %v4287
      %v4289 = vrot.slane %v4288, 1
      %v4290 = vadd.f32 %v4288, %v4289
      %v4291 = vld [vmem:[#allocation3] sm:$0x1]
      %v4292 = vadd.f32 %v4290, %v4291
      %vm4293 = vcmask 0
      %4294 = vst.msk [vmem:[%s273] sm:$0x1] %vm4293, %v4292
      %p4295 = scmp.lt.s32.totalorder %s20, 1
      %s4296 = scalar_select %p4295, %s20, 1
      %s4297 = scalar_lea.vmem %s7, %s4296
      // Predicated region
      $region49: #{net_fc7_forward.1} parent=47 // pred_check
        %p4298 = pneg %p190
      $region50: #{net_fc7_forward.1} parent=47 // pred_check_branch
        %4300 = sbr.rel (%p4298) target = $region52
      $region51: #{net_fc7_forward.1} parent=47 // pred_region
        _
      $region52: #{net_fc7_forward.1} parent=47 // pred_fallthru
        _
    $region48: #{net_fc7_forward.1} parent=5 // pred_fallthru
      _
    %p4301 = scmp.le.s32.totalorder 2, %s15
    // Predicated region
    $region53: #{net_fc7_forward.1} parent=5 // pred_check
      %p4302 = pneg %p4301
    $region54: #{net_fc7_forward.1} parent=5 // pred_check_branch
      %4304 = sbr.rel (%p4302) target = $region56
    $region55: #{net_fc7_forward.1} parent=5 // pred_region
      %s4305 = ssub.s32 %s15, 2
      // Predicated region
      $region57: #{net_fc7_forward.1} parent=55 // pred_check
        %p4306 = pneg %p196
      $region58: #{net_fc7_forward.1} parent=55 // pred_check_branch
        %4308 = sbr.rel (%p4306) target = $region60
      $region59: #{net_fc7_forward.1} parent=55 // pred_region
        %p4309 = scmp.lt.s32.totalorder %s21, 1
        %s4310 = scalar_select %p4309, %s21, 1
        %s4311 = scalar_lea.vmem %s7, %s4310
      $region60: #{net_fc7_forward.1} parent=55 // pred_fallthru
        _
    $region56: #{net_fc7_forward.1} parent=5 // pred_fallthru
      _
  $region6: #{net_fc7_forward.1} parent=0 // loop_footer
    %s19 = sadd.s32 1, %s15
  $region7: #{net_fc7_forward.1} parent=0 // loop_footer_branch
    %14 = sbr.rel target = $region3
  $region8: #{net_fc7_forward.1} parent=0 // loop_exit
    _

</llo_original>
